<compile_context>
chip_gen: v7x
topology: tpu7x:2x2x1
jax: 0.10.0
libtpu: 0.0.40
codegen_flags: <defaults>
</compile_context>

<pallas_src>
import jax
import jax.numpy as jnp
from jax import lax
from jax.experimental import pallas as pl
from jax.experimental.pallas import tpu as pltpu


def _round_up(x, m):
    return ((x + m - 1) // m) * m


def _pick_block(total, cap, align):
    """Largest divisor of `total` that is <= cap and aligned to `align` (or the whole
    axis).  Falls back to `total` when no aligned divisor exists.
    TODO(synk): remainder handling for awkward (prime) extents instead of falling back."""
    if total <= cap:
        return total
    for d in range(min(cap, total), 0, -1):
        if total % d == 0 and d % align == 0:
            return d
    return total


def _pick_graph_block(B, cap=16):
    """Largest divisor of B that leaves >= 2 grid steps (keeps v7x's second TensorCore
    fed via 'parallel' semantics) and stays <= cap."""
    hi = max(1, min(cap, B // 2))
    best = 1
    for d in range(1, hi + 1):
        if B % d == 0:
            best = d
    return best


# ---------------------------------------------------------------------------
# Kernel 1: GRU over T = B*N steps (batch = W walks) + mean over walks.
# grid = (T // Tt,) over T tiles ("arbitrary"); hidden state persists in VMEM scratch.
#   rw_ref  : (Tt*W, L)   bf16  walk features for this tile (row-major: step, walk)
#   wih_ref : (L, 3*Hp)   bf16  fused input weights, gate blocks at lanes {0,Hp,2Hp}
#   whh_ref : (Hp, 3*Hp)  bf16  fused hidden weights
#   bi_ref  : (1, 3*Hp)   f32   b_ih (+ b_hh folded in for r, z gates)
#   bhn_ref : (1, Hp)     f32   b_hn (must stay inside r * (.))
#   out_ref : (Tt, Hp)    f32   mean-over-walks hidden state per step
# ---------------------------------------------------------------------------
def gru_mean_kernel(rw_ref, wih_ref, whh_ref, bi_ref, bhn_ref, out_ref,
                    h_ref, gi_ref):
    Wk, Hp = h_ref.shape
    Tt = out_ref.shape[0]

    @pl.when(pl.program_id(0) == 0)
    def _():
        h_ref[...] = jnp.zeros_like(h_ref)

    # One fused (Tt*W, L) @ (L, 3*Hp) input projection for the whole tile (bf16 x bf16
    # -> f32 accumulation), bias added once to the whole slab.
    gi_ref[...] = jnp.dot(rw_ref[...], wih_ref[...],
                          preferred_element_type=jnp.float32) + bi_ref[...]

    whh = whh_ref[...]                                        # (Hp, 3Hp) bf16
    bhn_b = jnp.broadcast_to(bhn_ref[...], (Wk, Hp))          # hoisted broadcast

    # Unroll factor adapts to register pressure (each live (W,Hp) f32 tensor is
    # W*Hp/1024 vregs).
    vregs = max(1, (Wk * Hp) // 1024)
    CH = 8 if vregs <= 2 else (4 if vregs <= 4 else 2)
    while Tt % CH:
        CH //= 2

    def chunk(c, h):
        t0 = pl.multiple_of(c * CH, CH)
        means = []
        for s in range(CH):                                   # unrolled x CH
            row = pl.multiple_of((t0 + s) * Wk, Wk)
            gi = gi_ref[pl.ds(row, Wk), :]                    # (W, 3Hp) f32
            # single fused MXU issue per step; gate slices at 128-multiples are free
            gh = jnp.dot(h.astype(jnp.bfloat16), whh,
                         preferred_element_type=jnp.float32)  # (W, 3Hp)
            r = jax.nn.sigmoid(gi[:, :Hp] + gh[:, :Hp])
            z = jax.nn.sigmoid(gi[:, Hp:2 * Hp] + gh[:, Hp:2 * Hp])
            n = jnp.tanh(gi[:, 2 * Hp:] + r * (gh[:, 2 * Hp:] + bhn_b))
            h = (1.0 - z) * n + z * h
            means.append(jnp.mean(h, axis=0, keepdims=True))  # (1, Hp)
        out_ref[pl.ds(t0, CH), :] = jnp.concatenate(means, axis=0)
        return h

    h_ref[...] = lax.fori_loop(0, Tt // CH, chunk, h_ref[...])


# ---------------------------------------------------------------------------
# Kernel 2: GCN stack + avg readout + fc1(relu) + fc2(softmax), Bb graphs/block.
#   x_ref  : (Bb, N, Hp) f32     adj_ref: (Bb, N, N) bf16
#   wg_ref : (nL, Hp, Hp) bf16   bg_ref : (nL, 1, Hp) f32
#   w1_ref : (Hp, Fp) bf16       b1_ref : (1, Fp) f32
#   w2_ref : (Fp, Cp) bf16       b2_ref : (1, Cp) f32  (-1e9 in padded classes)
#   out_ref: (Bb, 1, Cp) f32
# ---------------------------------------------------------------------------
def gcn_head_kernel(x_ref, adj_ref, wg_ref, bg_ref, w1_ref, b1_ref,
                    w2_ref, b2_ref, out_ref):
    Bb, N, Hp = x_ref.shape
    nL = wg_ref.shape[0]
    Cp = out_ref.shape[-1]

    adj = adj_ref[...]                                        # (Bb, N, N) bf16
    xs = x_ref[...]                                           # (Bb, N, Hp) f32
    for i in range(nL):                                       # unrolled layers
        # batched adj @ x (one dot_general, no per-graph concat)
        ax = jnp.einsum('bij,bjh->bih', adj, xs.astype(jnp.bfloat16),
                        preferred_element_type=jnp.float32)   # (Bb, N, Hp)
        # one stacked (Bb*N, Hp) @ (Hp, Hp) matmul for all graphs
        h2 = jnp.dot(ax.reshape(Bb * N, Hp).astype(jnp.bfloat16), wg_ref[i],
                     preferred_element_type=jnp.float32)
        xs = jnp.maximum(h2.reshape(Bb, N, Hp) + bg_ref[i], 0.0)
        # F.dropout(..., training=False) between layers is the identity.

    g = jnp.mean(xs, axis=1)                                  # (Bb, Hp) avg readout

    h1 = jnp.maximum(
        jnp.dot(g.astype(jnp.bfloat16), w1_ref[...],
                preferred_element_type=jnp.float32) + b1_ref[...], 0.0)
    logits = jnp.dot(h1.astype(jnp.bfloat16), w2_ref[...],
                     preferred_element_type=jnp.float32) + b2_ref[...]  # (Bb, Cp)
    m = jnp.max(logits, axis=-1, keepdims=True)
    e = jnp.exp(logits - m)                                   # padded classes -> 0
    inv = pl.reciprocal(jnp.sum(e, axis=-1, keepdims=True), approx=True)
    out_ref[...] = (e * inv).reshape(Bb, 1, Cp)


# ---------------------------------------------------------------------------
# Wrapper
# ---------------------------------------------------------------------------
def expanded_spatial_graph_embedding_net(adj, random_walks, params):
    B, N = adj.shape[0], adj.shape[1]
    Wk, L = random_walks.shape[2], random_walks.shape[3]
    T = B * N
    H = params["gru_whh"].shape[0]
    nL = params["gcn_w"].shape[0]
    Fh = params["fc1_w"].shape[1]
    C = params["fc2_w"].shape[1]

    Hp = _round_up(H, 128)
    Fp = _round_up(Fh, 128)
    Cp = _round_up(C, 128)
    f32, bf16 = jnp.float32, jnp.bfloat16

    # --- GRU params: fused per-gate blocks at lane offsets {0, Hp, 2Hp}, zero-padded,
    #     weights in bf16 (f32 accumulation happens on the MXU). ---
    wih3 = params["gru_wih"].reshape(L, 3, H)
    wih_p = jnp.zeros((L, 3, Hp), f32).at[:, :, :H].set(wih3).reshape(L, 3 * Hp).astype(bf16)
    whh3 = params["gru_whh"].reshape(H, 3, H)
    whh_p = jnp.zeros((Hp, 3, Hp), f32).at[:H, :, :H].set(whh3).reshape(Hp, 3 * Hp).astype(bf16)
    bih3 = params["gru_bih"].reshape(3, H)
    bhh3 = params["gru_bhh"].reshape(3, H)
    # fold b_hh into b_ih for the r/z gates (exact); b_hn stays inside r * (.)
    bi = jnp.stack([bih3[0] + bhh3[0], bih3[1] + bhh3[1], bih3[2]])
    bi_p = jnp.zeros((3, Hp), f32).at[:, :H].set(bi).reshape(1, 3 * Hp)
    bhn_p = jnp.zeros((1, Hp), f32).at[:, :H].set(bhh3[2][None, :])

    # --- GCN / head params, lane-padded ---
    wg_p = jnp.zeros((nL, Hp, Hp), f32).at[:, :H, :H].set(params["gcn_w"]).astype(bf16)
    bg_p = jnp.zeros((nL, 1, Hp), f32).at[:, 0, :H].set(params["gcn_b"])
    w1_p = jnp.zeros((Hp, Fp), f32).at[:H, :Fh].set(params["fc1_w"]).astype(bf16)
    b1_p = jnp.zeros((1, Fp), f32).at[:, :Fh].set(params["fc1_b"])
    w2_p = jnp.zeros((Fp, Cp), f32).at[:Fh, :C].set(params["fc2_w"]).astype(bf16)
    b2_p = jnp.full((1, Cp), -1e9, f32).at[:, :C].set(params["fc2_b"])  # mask pad classes

    rw_bf = random_walks.reshape(T * Wk, L).astype(bf16)
    adj_bf = adj.astype(bf16)

    # --- VMEM-aware T-tile sizing (v7x: 64 MiB/TC, v5e/v6e: 128 MiB) ---
    try:
        vmem_cap = int(pltpu.get_tpu_info().vmem_capacity_bytes)
    except Exception:
        vmem_cap = 64 * 1024 * 1024
    budget = int(vmem_cap * 0.55)
    vlimit = int(min(int(vmem_cap * 0.75), 100 * 1024 * 1024))
    fixed = 2 * 2 * (L * 3 * Hp + Hp * 3 * Hp) + 2 * 4 * (3 * Hp + Hp) + 4 * Wk * Hp
    per_t = 2 * 2 * Wk * L + 4 * Wk * 3 * Hp + 2 * 4 * Hp   # rw(2buf,bf16)+gi scratch+out(2buf)
    t_cap = max(8, (budget - fixed) // per_t)
    Tt = _pick_block(T, int(t_cap), 8)

    gru_cost = pl.CostEstimate(
        flops=int(2 * T * Wk * 3 * Hp * (L + Hp)),
        transcendentals=int(3 * T * Wk * Hp),
        bytes_accessed=int(T * Wk * L * 2 + T * Hp * 4
                           + (L + Hp) * 3 * Hp * 2 + 4 * Hp * 4))

    node_feat = pl.pallas_call(
        gru_mean_kernel,
        out_shape=jax.ShapeDtypeStruct((T, Hp), f32),
        grid_spec=pltpu.PrefetchScalarGridSpec(
            num_scalar_prefetch=0,
            grid=(T // Tt,),
            in_specs=[
                pl.BlockSpec((Tt * Wk, L), lambda i: (i, 0)),
                pl.BlockSpec((L, 3 * Hp), lambda i: (0, 0)),
                pl.BlockSpec((Hp, 3 * Hp), lambda i: (0, 0)),
                pl.BlockSpec((1, 3 * Hp), lambda i: (0, 0)),
                pl.BlockSpec((1, Hp), lambda i: (0, 0)),
            ],
            out_specs=pl.BlockSpec((Tt, Hp), lambda i: (i, 0)),
            scratch_shapes=[
                pltpu.VMEM((Wk, Hp), f32),               # hidden state (carried)
                pltpu.VMEM((Tt * Wk, 3 * Hp), f32),      # fused gate pre-activations
            ],
        ),
        compiler_params=pltpu.CompilerParams(
            dimension_semantics=("arbitrary",),          # serial hidden-state carry
            vmem_limit_bytes=vlimit),
        cost_estimate=gru_cost,
    )(rw_bf, wih_p, whh_p, bi_p, bhn_p)

    # --- GCN stack + readout + classifier head (Bb graphs per grid step) ---
    x3 = node_feat.reshape(B, N, Hp)
    Bb = _pick_graph_block(B)

    gcn_cost = pl.CostEstimate(
        flops=int(2 * nL * B * N * Hp * (N + Hp) + 2 * B * (Hp * Fp + Fp * Cp)),
        transcendentals=int(B * Cp),
        bytes_accessed=int(B * N * Hp * 4 + B * N * N * 2 + nL * Hp * Hp * 2
                           + Hp * Fp * 2 + Fp * Cp * 2 + B * Cp * 4))

    out3 = pl.pallas_call(
        gcn_head_kernel,
        out_shape=jax.ShapeDtypeStruct((B, 1, Cp), f32),
        grid_spec=pltpu.PrefetchScalarGridSpec(
            num_scalar_prefetch=0,
            grid=(B // Bb,),
            in_specs=[
                pl.BlockSpec((Bb, N, Hp), lambda b: (b, 0, 0)),
                pl.BlockSpec((Bb, N, N), lambda b: (b, 0, 0)),
                pl.BlockSpec((nL, Hp, Hp), lambda b: (0, 0, 0)),
                pl.BlockSpec((nL, 1, Hp), lambda b: (0, 0, 0)),
                pl.BlockSpec((Hp, Fp), lambda b: (0, 0)),
                pl.BlockSpec((1, Fp), lambda b: (0, 0)),
                pl.BlockSpec((Fp, Cp), lambda b: (0, 0)),
                pl.BlockSpec((1, Cp), lambda b: (0, 0)),
            ],
            out_specs=pl.BlockSpec((Bb, 1, Cp), lambda b: (b, 0, 0)),
        ),
        compiler_params=pltpu.CompilerParams(
            dimension_semantics=("parallel",),           # >=2 steps -> both v7x TCs
            vmem_limit_bytes=vlimit),
        cost_estimate=gcn_cost,
    )(x3, adj_bf, wg_p, bg_p, w1_p, b1_p, w2_p, b2_p)

    return out3.reshape(B, Cp)[:, :C]


# ---------------------------------------------------------------------------
# Pure-JAX reference (f32, original parameter layout) for a sanity check.
# ---------------------------------------------------------------------------
def reference_forward(adj, random_walks, params):
    B, N = adj.shape[0], adj.shape[1]
    T = B * N
    rw = random_walks.reshape(T, random_walks.shape[2], random_walks.shape[3])
    H = params["gru_whh"].shape[0]
    Wk = rw.shape[1]
    h = jnp.zeros((Wk, H), jnp.float32)
    feats = []
    for t in range(T):
        gi = rw[t] @ params["gru_wih"] + params["gru_bih"]
        gh = h @ params["gru_whh"] + params["gru_bhh"]
        r = jax.nn.sigmoid(gi[:, :H] + gh[:, :H])
        z = jax.nn.sigmoid(gi[:, H:2 * H] + gh[:, H:2 * H])
        n = jnp.tanh(gi[:, 2 * H:] + r * gh[:, 2 * H:])
        h = (1.0 - z) * n + z * h
        feats.append(jnp.mean(h, axis=0))
    x = jnp.stack(feats).reshape(B, N, H)
    for i in range(params["gcn_w"].shape[0]):
        x = jax.nn.relu(
            jnp.einsum("bij,bjh->bih", adj, x) @ params["gcn_w"][i]
            + params["gcn_b"][i])
    g = jnp.mean(x, axis=1)
    h1 = jax.nn.relu(g @ params["fc1_w"] + params["fc1_b"])
    logits = h1 @ params["fc2_w"] + params["fc2_b"]
    return jax.nn.softmax(logits, axis=-1)


if __name__ == "__main__":
    # Small, module-consistent shapes.
    B, N = 2, 8                 # graphs, nodes per graph
    Wk, L = 8, 8                # walks per node, walk_length (GRU input size)
    H = 32                      # agg_hidden
    Fh = 32                     # fc_hidden
    C = 4                       # n_class
    n_gcn = 2                   # n_spatial_graph_embedding_model_layer

    key = jax.random.PRNGKey(0)
    ks = jax.random.split(key, 12)

    params = {
        "gru_wih": 0.1 * jax.random.normal(ks[0], (L, 3 * H), jnp.float32),
        "gru_whh": 0.1 * jax.random.normal(ks[1], (H, 3 * H), jnp.float32),
        "gru_bih": 0.1 * jax.random.normal(ks[2], (1, 3 * H), jnp.float32),
        "gru_bhh": 0.1 * jax.random.normal(ks[3], (1, 3 * H), jnp.float32),
        "gcn_w": 0.1 * jax.random.normal(ks[4], (n_gcn, H, H), jnp.float32),
        "gcn_b": 0.1 * jax.random.normal(ks[5], (n_gcn, H), jnp.float32),
        "fc1_w": 0.1 * jax.random.normal(ks[6], (H, Fh), jnp.float32),
        "fc1_b": 0.1 * jax.random.normal(ks[7], (1, Fh), jnp.float32),
        "fc2_w": 0.1 * jax.random.normal(ks[8], (Fh, C), jnp.float32),
        "fc2_b": 0.1 * jax.random.normal(ks[9], (1, C), jnp.float32),
    }

    # Synthetic inputs (data[1] = adj, data[6] = random_walks; data[0] is overwritten
    # by the GRU output in the original forward, so it is unused).
    adj_raw = jax.random.uniform(ks[10], (B, N, N), jnp.float32)
    adj = adj_raw / jnp.sum(adj_raw, axis=-1, keepdims=True)      # row-normalized
    random_walks = jax.random.normal(ks[11], (B, N, Wk, L), jnp.float32)

    out = jax.jit(expanded_spatial_graph_embedding_net)(adj, random_walks, params)
    out = jax.block_until_ready(out)

    ref = reference_forward(adj, random_walks, params)
    assert out.shape == (B, C)
    # bf16 MXU operands (f32 accumulation) -> slightly looser tolerance vs f32 reference
    assert jnp.allclose(out, ref, rtol=2e-2, atol=2e-2), (out, ref)
    assert jnp.allclose(jnp.sum(out, axis=-1), 1.0, atol=1e-2)

    print("KERNEL_OK")
</pallas_src>

<mosaic_0001>
module attributes {stable_mosaic.version = 11 : i64} {
  func.func @gru_mean_kernel(%arg0: i32, %arg1: memref<128x8xbf16, #tpu.memory_space<vmem>>, %arg2: memref<8x384xbf16, #tpu.memory_space<vmem>>, %arg3: memref<128x384xbf16, #tpu.memory_space<vmem>>, %arg4: memref<1x384xf32, #tpu.memory_space<vmem>>, %arg5: memref<1x128xf32, #tpu.memory_space<vmem>>, %arg6: memref<16x128xf32, #tpu.memory_space<vmem>>, %arg7: memref<8x128xf32, #tpu.memory_space<vmem>>, %arg8: memref<128x384xf32, #tpu.memory_space<vmem>>) attributes {dimension_semantics = [#tpu.dimension_semantics<arbitrary>], iteration_bounds = array<i64: 1>, scalar_prefetch = 0 : i64, scratch_operands = 2 : i64, tpu.core_type = #tpu.core_type<tc>, window_params = [{transform_indices = @transform_0, window_bounds = array<i64: 128, 8>}, {pipeline_mode = #tpu.pipeline_mode<synchronous>, transform_indices = @transform_1, window_bounds = array<i64: 8, 384>}, {pipeline_mode = #tpu.pipeline_mode<synchronous>, transform_indices = @transform_2, window_bounds = array<i64: 128, 384>}, {pipeline_mode = #tpu.pipeline_mode<synchronous>, transform_indices = @transform_3, window_bounds = array<i64: 1, 384>}, {pipeline_mode = #tpu.pipeline_mode<synchronous>, transform_indices = @transform_4, window_bounds = array<i64: 1, 128>}, {transform_indices = @transform_5, window_bounds = array<i64: 16, 128>}]} {
    %c0_i32 = arith.constant 0 : i32
    %0 = arith.cmpi eq, %arg0, %c0_i32 : i32
    %1 = arith.extui %0 : i1 to i32
    %c0_i32_0 = arith.constant 0 : i32
    %2 = arith.cmpi ne, %1, %c0_i32_0 : i32
    scf.if %2 {
      %cst_18 = arith.constant 0.000000e+00 : f32
      %18 = vector.broadcast %cst_18 : f32 to vector<8x128xf32>
      %c0_19 = arith.constant 0 : index
      %c0_20 = arith.constant 0 : index
      %19 = vector.load %arg7[%c0_19, %c0_20] : memref<8x128xf32, #tpu.memory_space<vmem>>, vector<8x128xf32>
      tpu.vector_store %arg7[%c0_19, %c0_20], %18 {strides = array<i32>} : memref<8x128xf32, #tpu.memory_space<vmem>>, vector<8x128xf32>,
    } else {
    }
    %c0 = arith.constant 0 : index
    %c0_1 = arith.constant 0 : index
    %3 = vector.load %arg1[%c0, %c0_1] : memref<128x8xbf16, #tpu.memory_space<vmem>>, vector<128x8xbf16>
    %c0_2 = arith.constant 0 : index
    %c0_3 = arith.constant 0 : index
    %4 = vector.load %arg2[%c0_2, %c0_3] : memref<8x384xbf16, #tpu.memory_space<vmem>>, vector<8x384xbf16>
    %cst = arith.constant dense<0.000000e+00> : vector<128x384xf32>
    %5 = tpu.matmul %3, %4, %cst {dimension_numbers = #tpu.dot_dimension_numbers<[1], [0], [0], [1], [0, 0, 1, 1], [], []>} : vector<128x8xbf16>, vector<8x384xbf16>, vector<128x384xf32> -> vector<128x384xf32>
    %c0_4 = arith.constant 0 : index
    %c0_5 = arith.constant 0 : index
    %6 = vector.load %arg4[%c0_4, %c0_5] : memref<1x384xf32, #tpu.memory_space<vmem>>, vector<1x384xf32>
    %7 = vector.broadcast %6 : vector<1x384xf32> to vector<128x384xf32>
    %8 = arith.addf %5, %7 : vector<128x384xf32>
    %c0_6 = arith.constant 0 : index
    %c0_7 = arith.constant 0 : index
    %9 = vector.load %arg8[%c0_6, %c0_7] : memref<128x384xf32, #tpu.memory_space<vmem>>, vector<128x384xf32>
    tpu.vector_store %arg8[%c0_6, %c0_7], %8 {strides = array<i32>} : memref<128x384xf32, #tpu.memory_space<vmem>>, vector<128x384xf32>,
    %c0_8 = arith.constant 0 : index
    %c0_9 = arith.constant 0 : index
    %10 = vector.load %arg3[%c0_8, %c0_9] : memref<128x384xbf16, #tpu.memory_space<vmem>>, vector<128x384xbf16>
    %c0_10 = arith.constant 0 : index
    %c0_11 = arith.constant 0 : index
    %11 = vector.load %arg5[%c0_10, %c0_11] : memref<1x128xf32, #tpu.memory_space<vmem>>, vector<1x128xf32>
    %12 = vector.shape_cast %11 : vector<1x128xf32> to vector<1x128xf32>
    %13 = vector.broadcast %12 : vector<1x128xf32> to vector<8x128xf32>
    %c0_12 = arith.constant 0 : index
    %c0_13 = arith.constant 0 : index
    %14 = vector.load %arg7[%c0_12, %c0_13] : memref<8x128xf32, #tpu.memory_space<vmem>>, vector<8x128xf32>
    %c0_i32_14 = arith.constant 0 : i32
    %c2_i32 = arith.constant 2 : i32
    %15 = arith.addi %c0_i32_14, %c2_i32 : i32
    %c1_i32 = arith.constant 1 : i32
    %16 = scf.for %arg9 = %c0_i32_14 to %15 step %c1_i32 iter_args(%arg10 = %14) -> (vector<8x128xf32>)  : i32 {
      %c8_i32 = arith.constant 8 : i32
      %18 = arith.muli %arg9, %c8_i32 : i32
      %19 = tpu.assume_multiple %18, 8 : i32
      %c0_i32_18 = arith.constant 0 : i32
      %20 = arith.addi %19, %c0_i32_18 : i32
      %c8_i32_19 = arith.constant 8 : i32
      %21 = arith.muli %20, %c8_i32_19 : i32
      %22 = tpu.assume_multiple %21, 8 : i32
      %23 = arith.index_cast %22 : i32 to index
      %c0_20 = arith.constant 0 : index
      %24 = vector.load %arg8[%23, %c0_20] : memref<128x384xf32, #tpu.memory_space<vmem>>, vector<8x384xf32>
      %25 = arith.truncf %arg10 : vector<8x128xf32> to vector<8x128xbf16>
      %cst_21 = arith.constant dense<0.000000e+00> : vector<8x384xf32>
      %26 = tpu.matmul %25, %10, %cst_21 {dimension_numbers = #tpu.dot_dimension_numbers<[1], [0], [0], [1], [0, 0, 1, 1], [], []>} : vector<8x128xbf16>, vector<128x384xbf16>, vector<8x384xf32> -> vector<8x384xf32>
      %27 = vector.extract_strided_slice %24 {offsets = [0, 0], sizes = [8, 128], strides = [1, 1]} : vector<8x384xf32> to vector<8x128xf32>
      %28 = vector.extract_strided_slice %26 {offsets = [0, 0], sizes = [8, 128], strides = [1, 1]} : vector<8x384xf32> to vector<8x128xf32>
      %29 = arith.addf %27, %28 : vector<8x128xf32>
      %30 = arith.negf %29 : vector<8x128xf32>
      %31 = math.exp %30 : vector<8x128xf32>
      %cst_22 = arith.constant 1.000000e+00 : f32
      %32 = vector.broadcast %cst_22 : f32 to vector<8x128xf32>
      %33 = arith.addf %32, %31 : vector<8x128xf32>
      %34 = arith.divf %32, %33 : vector<8x128xf32>
      %35 = vector.extract_strided_slice %24 {offsets = [0, 128], sizes = [8, 128], strides = [1, 1]} : vector<8x384xf32> to vector<8x128xf32>
      %36 = vector.extract_strided_slice %26 {offsets = [0, 128], sizes = [8, 128], strides = [1, 1]} : vector<8x384xf32> to vector<8x128xf32>
      %37 = arith.addf %35, %36 : vector<8x128xf32>
      %38 = arith.negf %37 : vector<8x128xf32>
      %39 = math.exp %38 : vector<8x128xf32>
      %cst_23 = arith.constant 1.000000e+00 : f32
      %40 = vector.broadcast %cst_23 : f32 to vector<8x128xf32>
      %41 = arith.addf %40, %39 : vector<8x128xf32>
      %42 = arith.divf %40, %41 : vector<8x128xf32>
      %43 = vector.extract_strided_slice %24 {offsets = [0, 256], sizes = [8, 128], strides = [1, 1]} : vector<8x384xf32> to vector<8x128xf32>
      %44 = vector.extract_strided_slice %26 {offsets = [0, 256], sizes = [8, 128], strides = [1, 1]} : vector<8x384xf32> to vector<8x128xf32>
      %45 = arith.addf %44, %13 : vector<8x128xf32>
      %46 = arith.mulf %34, %45 : vector<8x128xf32>
      %47 = arith.addf %43, %46 : vector<8x128xf32>
      %48 = math.tanh %47 : vector<8x128xf32>
      %cst_24 = arith.constant 1.000000e+00 : f32
      %49 = vector.broadcast %cst_24 : f32 to vector<8x128xf32>
      %50 = arith.subf %49, %42 : vector<8x128xf32>
      %51 = arith.mulf %50, %48 : vector<8x128xf32>
      %52 = arith.mulf %42, %arg10 : vector<8x128xf32>
      %53 = arith.addf %51, %52 : vector<8x128xf32>
      %cst_25 = arith.constant dense<0.000000e+00> : vector<128xf32>
      %54 = vector.multi_reduction <add>, %53, %cst_25 [0] : vector<8x128xf32> to vector<128xf32>
      %55 = vector.shape_cast %54 : vector<128xf32> to vector<1x128xf32>
      %cst_26 = arith.constant 8.000000e+00 : f32
      %56 = vector.broadcast %cst_26 : f32 to vector<1x128xf32>
      %57 = arith.divf %55, %56 : vector<1x128xf32>
      %c1_i32_27 = arith.constant 1 : i32
      %58 = arith.addi %19, %c1_i32_27 : i32
      %c8_i32_28 = arith.constant 8 : i32
      %59 = arith.muli %58, %c8_i32_28 : i32
      %60 = tpu.assume_multiple %59, 8 : i32
      %61 = arith.index_cast %60 : i32 to index
      %c0_29 = arith.constant 0 : index
      %62 = vector.load %arg8[%61, %c0_29] : memref<128x384xf32, #tpu.memory_space<vmem>>, vector<8x384xf32>
      %63 = arith.truncf %53 : vector<8x128xf32> to vector<8x128xbf16>
      %cst_30 = arith.constant dense<0.000000e+00> : vector<8x384xf32>
      %64 = tpu.matmul %63, %10, %cst_30 {dimension_numbers = #tpu.dot_dimension_numbers<[1], [0], [0], [1], [0, 0, 1, 1], [], []>} : vector<8x128xbf16>, vector<128x384xbf16>, vector<8x384xf32> -> vector<8x384xf32>
      %65 = vector.extract_strided_slice %62 {offsets = [0, 0], sizes = [8, 128], strides = [1, 1]} : vector<8x384xf32> to vector<8x128xf32>
      %66 = vector.extract_strided_slice %64 {offsets = [0, 0], sizes = [8, 128], strides = [1, 1]} : vector<8x384xf32> to vector<8x128xf32>
      %67 = arith.addf %65, %66 : vector<8x128xf32>
      %68 = arith.negf %67 : vector<8x128xf32>
      %69 = math.exp %68 : vector<8x128xf32>
      %cst_31 = arith.constant 1.000000e+00 : f32
      %70 = vector.broadcast %cst_31 : f32 to vector<8x128xf32>
      %71 = arith.addf %70, %69 : vector<8x128xf32>
      %72 = arith.divf %70, %71 : vector<8x128xf32>
      %73 = vector.extract_strided_slice %62 {offsets = [0, 128], sizes = [8, 128], strides = [1, 1]} : vector<8x384xf32> to vector<8x128xf32>
      %74 = vector.extract_strided_slice %64 {offsets = [0, 128], sizes = [8, 128], strides = [1, 1]} : vector<8x384xf32> to vector<8x128xf32>
      %75 = arith.addf %73, %74 : vector<8x128xf32>
      %76 = arith.negf %75 : vector<8x128xf32>
      %77 = math.exp %76 : vector<8x128xf32>
      %cst_32 = arith.constant 1.000000e+00 : f32
      %78 = vector.broadcast %cst_32 : f32 to vector<8x128xf32>
      %79 = arith.addf %78, %77 : vector<8x128xf32>
      %80 = arith.divf %78, %79 : vector<8x128xf32>
      %81 = vector.extract_strided_slice %62 {offsets = [0, 256], sizes = [8, 128], strides = [1, 1]} : vector<8x384xf32> to vector<8x128xf32>
      %82 = vector.extract_strided_slice %64 {offsets = [0, 256], sizes = [8, 128], strides = [1, 1]} : vector<8x384xf32> to vector<8x128xf32>
      %83 = arith.addf %82, %13 : vector<8x128xf32>
      %84 = arith.mulf %72, %83 : vector<8x128xf32>
      %85 = arith.addf %81, %84 : vector<8x128xf32>
      %86 = math.tanh %85 : vector<8x128xf32>
      %cst_33 = arith.constant 1.000000e+00 : f32
      %87 = vector.broadcast %cst_33 : f32 to vector<8x128xf32>
      %88 = arith.subf %87, %80 : vector<8x128xf32>
      %89 = arith.mulf %88, %86 : vector<8x128xf32>
      %90 = arith.mulf %80, %53 : vector<8x128xf32>
      %91 = arith.addf %89, %90 : vector<8x128xf32>
      %cst_34 = arith.constant dense<0.000000e+00> : vector<128xf32>
      %92 = vector.multi_reduction <add>, %91, %cst_34 [0] : vector<8x128xf32> to vector<128xf32>
      %93 = vector.shape_cast %92 : vector<128xf32> to vector<1x128xf32>
      %cst_35 = arith.constant 8.000000e+00 : f32
      %94 = vector.broadcast %cst_35 : f32 to vector<1x128xf32>
      %95 = arith.divf %93, %94 : vector<1x128xf32>
      %c2_i32_36 = arith.constant 2 : i32
      %96 = arith.addi %19, %c2_i32_36 : i32
      %c8_i32_37 = arith.constant 8 : i32
      %97 = arith.muli %96, %c8_i32_37 : i32
      %98 = tpu.assume_multiple %97, 8 : i32
      %99 = arith.index_cast %98 : i32 to index
      %c0_38 = arith.constant 0 : index
      %100 = vector.load %arg8[%99, %c0_38] : memref<128x384xf32, #tpu.memory_space<vmem>>, vector<8x384xf32>
      %101 = arith.truncf %91 : vector<8x128xf32> to vector<8x128xbf16>
      %cst_39 = arith.constant dense<0.000000e+00> : vector<8x384xf32>
      %102 = tpu.matmul %101, %10, %cst_39 {dimension_numbers = #tpu.dot_dimension_numbers<[1], [0], [0], [1], [0, 0, 1, 1], [], []>} : vector<8x128xbf16>, vector<128x384xbf16>, vector<8x384xf32> -> vector<8x384xf32>
      %103 = vector.extract_strided_slice %100 {offsets = [0, 0], sizes = [8, 128], strides = [1, 1]} : vector<8x384xf32> to vector<8x128xf32>
      %104 = vector.extract_strided_slice %102 {offsets = [0, 0], sizes = [8, 128], strides = [1, 1]} : vector<8x384xf32> to vector<8x128xf32>
      %105 = arith.addf %103, %104 : vector<8x128xf32>
      %106 = arith.negf %105 : vector<8x128xf32>
      %107 = math.exp %106 : vector<8x128xf32>
      %cst_40 = arith.constant 1.000000e+00 : f32
      %108 = vector.broadcast %cst_40 : f32 to vector<8x128xf32>
      %109 = arith.addf %108, %107 : vector<8x128xf32>
      %110 = arith.divf %108, %109 : vector<8x128xf32>
      %111 = vector.extract_strided_slice %100 {offsets = [0, 128], sizes = [8, 128], strides = [1, 1]} : vector<8x384xf32> to vector<8x128xf32>
      %112 = vector.extract_strided_slice %102 {offsets = [0, 128], sizes = [8, 128], strides = [1, 1]} : vector<8x384xf32> to vector<8x128xf32>
      %113 = arith.addf %111, %112 : vector<8x128xf32>
      %114 = arith.negf %113 : vector<8x128xf32>
      %115 = math.exp %114 : vector<8x128xf32>
      %cst_41 = arith.constant 1.000000e+00 : f32
      %116 = vector.broadcast %cst_41 : f32 to vector<8x128xf32>
      %117 = arith.addf %116, %115 : vector<8x128xf32>
      %118 = arith.divf %116, %117 : vector<8x128xf32>
      %119 = vector.extract_strided_slice %100 {offsets = [0, 256], sizes = [8, 128], strides = [1, 1]} : vector<8x384xf32> to vector<8x128xf32>
      %120 = vector.extract_strided_slice %102 {offsets = [0, 256], sizes = [8, 128], strides = [1, 1]} : vector<8x384xf32> to vector<8x128xf32>
      %121 = arith.addf %120, %13 : vector<8x128xf32>
      %122 = arith.mulf %110, %121 : vector<8x128xf32>
      %123 = arith.addf %119, %122 : vector<8x128xf32>
      %124 = math.tanh %123 : vector<8x128xf32>
      %cst_42 = arith.constant 1.000000e+00 : f32
      %125 = vector.broadcast %cst_42 : f32 to vector<8x128xf32>
      %126 = arith.subf %125, %118 : vector<8x128xf32>
      %127 = arith.mulf %126, %124 : vector<8x128xf32>
      %128 = arith.mulf %118, %91 : vector<8x128xf32>
      %129 = arith.addf %127, %128 : vector<8x128xf32>
      %cst_43 = arith.constant dense<0.000000e+00> : vector<128xf32>
      %130 = vector.multi_reduction <add>, %129, %cst_43 [0] : vector<8x128xf32> to vector<128xf32>
      %131 = vector.shape_cast %130 : vector<128xf32> to vector<1x128xf32>
      %cst_44 = arith.constant 8.000000e+00 : f32
      %132 = vector.broadcast %cst_44 : f32 to vector<1x128xf32>
      %133 = arith.divf %131, %132 : vector<1x128xf32>
      %c3_i32 = arith.constant 3 : i32
      %134 = arith.addi %19, %c3_i32 : i32
      %c8_i32_45 = arith.constant 8 : i32
      %135 = arith.muli %134, %c8_i32_45 : i32
      %136 = tpu.assume_multiple %135, 8 : i32
      %137 = arith.index_cast %136 : i32 to index
      %c0_46 = arith.constant 0 : index
      %138 = vector.load %arg8[%137, %c0_46] : memref<128x384xf32, #tpu.memory_space<vmem>>, vector<8x384xf32>
      %139 = arith.truncf %129 : vector<8x128xf32> to vector<8x128xbf16>
      %cst_47 = arith.constant dense<0.000000e+00> : vector<8x384xf32>
      %140 = tpu.matmul %139, %10, %cst_47 {dimension_numbers = #tpu.dot_dimension_numbers<[1], [0], [0], [1], [0, 0, 1, 1], [], []>} : vector<8x128xbf16>, vector<128x384xbf16>, vector<8x384xf32> -> vector<8x384xf32>
      %141 = vector.extract_strided_slice %138 {offsets = [0, 0], sizes = [8, 128], strides = [1, 1]} : vector<8x384xf32> to vector<8x128xf32>
      %142 = vector.extract_strided_slice %140 {offsets = [0, 0], sizes = [8, 128], strides = [1, 1]} : vector<8x384xf32> to vector<8x128xf32>
      %143 = arith.addf %141, %142 : vector<8x128xf32>
      %144 = arith.negf %143 : vector<8x128xf32>
      %145 = math.exp %144 : vector<8x128xf32>
      %cst_48 = arith.constant 1.000000e+00 : f32
      %146 = vector.broadcast %cst_48 : f32 to vector<8x128xf32>
      %147 = arith.addf %146, %145 : vector<8x128xf32>
      %148 = arith.divf %146, %147 : vector<8x128xf32>
      %149 = vector.extract_strided_slice %138 {offsets = [0, 128], sizes = [8, 128], strides = [1, 1]} : vector<8x384xf32> to vector<8x128xf32>
      %150 = vector.extract_strided_slice %140 {offsets = [0, 128], sizes = [8, 128], strides = [1, 1]} : vector<8x384xf32> to vector<8x128xf32>
      %151 = arith.addf %149, %150 : vector<8x128xf32>
      %152 = arith.negf %151 : vector<8x128xf32>
      %153 = math.exp %152 : vector<8x128xf32>
      %cst_49 = arith.constant 1.000000e+00 : f32
      %154 = vector.broadcast %cst_49 : f32 to vector<8x128xf32>
      %155 = arith.addf %154, %153 : vector<8x128xf32>
      %156 = arith.divf %154, %155 : vector<8x128xf32>
      %157 = vector.extract_strided_slice %138 {offsets = [0, 256], sizes = [8, 128], strides = [1, 1]} : vector<8x384xf32> to vector<8x128xf32>
      %158 = vector.extract_strided_slice %140 {offsets = [0, 256], sizes = [8, 128], strides = [1, 1]} : vector<8x384xf32> to vector<8x128xf32>
      %159 = arith.addf %158, %13 : vector<8x128xf32>
      %160 = arith.mulf %148, %159 : vector<8x128xf32>
      %161 = arith.addf %157, %160 : vector<8x128xf32>
      %162 = math.tanh %161 : vector<8x128xf32>
      %cst_50 = arith.constant 1.000000e+00 : f32
      %163 = vector.broadcast %cst_50 : f32 to vector<8x128xf32>
      %164 = arith.subf %163, %156 : vector<8x128xf32>
      %165 = arith.mulf %164, %162 : vector<8x128xf32>
      %166 = arith.mulf %156, %129 : vector<8x128xf32>
      %167 = arith.addf %165, %166 : vector<8x128xf32>
      %cst_51 = arith.constant dense<0.000000e+00> : vector<128xf32>
      %168 = vector.multi_reduction <add>, %167, %cst_51 [0] : vector<8x128xf32> to vector<128xf32>
      %169 = vector.shape_cast %168 : vector<128xf32> to vector<1x128xf32>
      %cst_52 = arith.constant 8.000000e+00 : f32
      %170 = vector.broadcast %cst_52 : f32 to vector<1x128xf32>
      %171 = arith.divf %169, %170 : vector<1x128xf32>
      %c4_i32 = arith.constant 4 : i32
      %172 = arith.addi %19, %c4_i32 : i32
      %c8_i32_53 = arith.constant 8 : i32
      %173 = arith.muli %172, %c8_i32_53 : i32
      %174 = tpu.assume_multiple %173, 8 : i32
      %175 = arith.index_cast %174 : i32 to index
      %c0_54 = arith.constant 0 : index
      %176 = vector.load %arg8[%175, %c0_54] : memref<128x384xf32, #tpu.memory_space<vmem>>, vector<8x384xf32>
      %177 = arith.truncf %167 : vector<8x128xf32> to vector<8x128xbf16>
      %cst_55 = arith.constant dense<0.000000e+00> : vector<8x384xf32>
      %178 = tpu.matmul %177, %10, %cst_55 {dimension_numbers = #tpu.dot_dimension_numbers<[1], [0], [0], [1], [0, 0, 1, 1], [], []>} : vector<8x128xbf16>, vector<128x384xbf16>, vector<8x384xf32> -> vector<8x384xf32>
      %179 = vector.extract_strided_slice %176 {offsets = [0, 0], sizes = [8, 128], strides = [1, 1]} : vector<8x384xf32> to vector<8x128xf32>
      %180 = vector.extract_strided_slice %178 {offsets = [0, 0], sizes = [8, 128], strides = [1, 1]} : vector<8x384xf32> to vector<8x128xf32>
      %181 = arith.addf %179, %180 : vector<8x128xf32>
      %182 = arith.negf %181 : vector<8x128xf32>
      %183 = math.exp %182 : vector<8x128xf32>
      %cst_56 = arith.constant 1.000000e+00 : f32
      %184 = vector.broadcast %cst_56 : f32 to vector<8x128xf32>
      %185 = arith.addf %184, %183 : vector<8x128xf32>
      %186 = arith.divf %184, %185 : vector<8x128xf32>
      %187 = vector.extract_strided_slice %176 {offsets = [0, 128], sizes = [8, 128], strides = [1, 1]} : vector<8x384xf32> to vector<8x128xf32>
      %188 = vector.extract_strided_slice %178 {offsets = [0, 128], sizes = [8, 128], strides = [1, 1]} : vector<8x384xf32> to vector<8x128xf32>
      %189 = arith.addf %187, %188 : vector<8x128xf32>
      %190 = arith.negf %189 : vector<8x128xf32>
      %191 = math.exp %190 : vector<8x128xf32>
      %cst_57 = arith.constant 1.000000e+00 : f32
      %192 = vector.broadcast %cst_57 : f32 to vector<8x128xf32>
      %193 = arith.addf %192, %191 : vector<8x128xf32>
      %194 = arith.divf %192, %193 : vector<8x128xf32>
      %195 = vector.extract_strided_slice %176 {offsets = [0, 256], sizes = [8, 128], strides = [1, 1]} : vector<8x384xf32> to vector<8x128xf32>
      %196 = vector.extract_strided_slice %178 {offsets = [0, 256], sizes = [8, 128], strides = [1, 1]} : vector<8x384xf32> to vector<8x128xf32>
      %197 = arith.addf %196, %13 : vector<8x128xf32>
      %198 = arith.mulf %186, %197 : vector<8x128xf32>
      %199 = arith.addf %195, %198 : vector<8x128xf32>
      %200 = math.tanh %199 : vector<8x128xf32>
      %cst_58 = arith.constant 1.000000e+00 : f32
      %201 = vector.broadcast %cst_58 : f32 to vector<8x128xf32>
      %202 = arith.subf %201, %194 : vector<8x128xf32>
      %203 = arith.mulf %202, %200 : vector<8x128xf32>
      %204 = arith.mulf %194, %167 : vector<8x128xf32>
      %205 = arith.addf %203, %204 : vector<8x128xf32>
      %cst_59 = arith.constant dense<0.000000e+00> : vector<128xf32>
      %206 = vector.multi_reduction <add>, %205, %cst_59 [0] : vector<8x128xf32> to vector<128xf32>
      %207 = vector.shape_cast %206 : vector<128xf32> to vector<1x128xf32>
      %cst_60 = arith.constant 8.000000e+00 : f32
      %208 = vector.broadcast %cst_60 : f32 to vector<1x128xf32>
      %209 = arith.divf %207, %208 : vector<1x128xf32>
      %c5_i32 = arith.constant 5 : i32
      %210 = arith.addi %19, %c5_i32 : i32
      %c8_i32_61 = arith.constant 8 : i32
      %211 = arith.muli %210, %c8_i32_61 : i32
      %212 = tpu.assume_multiple %211, 8 : i32
      %213 = arith.index_cast %212 : i32 to index
      %c0_62 = arith.constant 0 : index
      %214 = vector.load %arg8[%213, %c0_62] : memref<128x384xf32, #tpu.memory_space<vmem>>, vector<8x384xf32>
      %215 = arith.truncf %205 : vector<8x128xf32> to vector<8x128xbf16>
      %cst_63 = arith.constant dense<0.000000e+00> : vector<8x384xf32>
      %216 = tpu.matmul %215, %10, %cst_63 {dimension_numbers = #tpu.dot_dimension_numbers<[1], [0], [0], [1], [0, 0, 1, 1], [], []>} : vector<8x128xbf16>, vector<128x384xbf16>, vector<8x384xf32> -> vector<8x384xf32>
      %217 = vector.extract_strided_slice %214 {offsets = [0, 0], sizes = [8, 128], strides = [1, 1]} : vector<8x384xf32> to vector<8x128xf32>
      %218 = vector.extract_strided_slice %216 {offsets = [0, 0], sizes = [8, 128], strides = [1, 1]} : vector<8x384xf32> to vector<8x128xf32>
      %219 = arith.addf %217, %218 : vector<8x128xf32>
      %220 = arith.negf %219 : vector<8x128xf32>
      %221 = math.exp %220 : vector<8x128xf32>
      %cst_64 = arith.constant 1.000000e+00 : f32
      %222 = vector.broadcast %cst_64 : f32 to vector<8x128xf32>
      %223 = arith.addf %222, %221 : vector<8x128xf32>
      %224 = arith.divf %222, %223 : vector<8x128xf32>
      %225 = vector.extract_strided_slice %214 {offsets = [0, 128], sizes = [8, 128], strides = [1, 1]} : vector<8x384xf32> to vector<8x128xf32>
      %226 = vector.extract_strided_slice %216 {offsets = [0, 128], sizes = [8, 128], strides = [1, 1]} : vector<8x384xf32> to vector<8x128xf32>
      %227 = arith.addf %225, %226 : vector<8x128xf32>
      %228 = arith.negf %227 : vector<8x128xf32>
      %229 = math.exp %228 : vector<8x128xf32>
      %cst_65 = arith.constant 1.000000e+00 : f32
      %230 = vector.broadcast %cst_65 : f32 to vector<8x128xf32>
      %231 = arith.addf %230, %229 : vector<8x128xf32>
      %232 = arith.divf %230, %231 : vector<8x128xf32>
      %233 = vector.extract_strided_slice %214 {offsets = [0, 256], sizes = [8, 128], strides = [1, 1]} : vector<8x384xf32> to vector<8x128xf32>
      %234 = vector.extract_strided_slice %216 {offsets = [0, 256], sizes = [8, 128], strides = [1, 1]} : vector<8x384xf32> to vector<8x128xf32>
      %235 = arith.addf %234, %13 : vector<8x128xf32>
      %236 = arith.mulf %224, %235 : vector<8x128xf32>
      %237 = arith.addf %233, %236 : vector<8x128xf32>
      %238 = math.tanh %237 : vector<8x128xf32>
      %cst_66 = arith.constant 1.000000e+00 : f32
      %239 = vector.broadcast %cst_66 : f32 to vector<8x128xf32>
      %240 = arith.subf %239, %232 : vector<8x128xf32>
      %241 = arith.mulf %240, %238 : vector<8x128xf32>
      %242 = arith.mulf %232, %205 : vector<8x128xf32>
      %243 = arith.addf %241, %242 : vector<8x128xf32>
      %cst_67 = arith.constant dense<0.000000e+00> : vector<128xf32>
      %244 = vector.multi_reduction <add>, %243, %cst_67 [0] : vector<8x128xf32> to vector<128xf32>
      %245 = vector.shape_cast %244 : vector<128xf32> to vector<1x128xf32>
      %cst_68 = arith.constant 8.000000e+00 : f32
      %246 = vector.broadcast %cst_68 : f32 to vector<1x128xf32>
      %247 = arith.divf %245, %246 : vector<1x128xf32>
      %c6_i32 = arith.constant 6 : i32
      %248 = arith.addi %19, %c6_i32 : i32
      %c8_i32_69 = arith.constant 8 : i32
      %249 = arith.muli %248, %c8_i32_69 : i32
      %250 = tpu.assume_multiple %249, 8 : i32
      %251 = arith.index_cast %250 : i32 to index
      %c0_70 = arith.constant 0 : index
      %252 = vector.load %arg8[%251, %c0_70] : memref<128x384xf32, #tpu.memory_space<vmem>>, vector<8x384xf32>
      %253 = arith.truncf %243 : vector<8x128xf32> to vector<8x128xbf16>
      %cst_71 = arith.constant dense<0.000000e+00> : vector<8x384xf32>
      %254 = tpu.matmul %253, %10, %cst_71 {dimension_numbers = #tpu.dot_dimension_numbers<[1], [0], [0], [1], [0, 0, 1, 1], [], []>} : vector<8x128xbf16>, vector<128x384xbf16>, vector<8x384xf32> -> vector<8x384xf32>
      %255 = vector.extract_strided_slice %252 {offsets = [0, 0], sizes = [8, 128], strides = [1, 1]} : vector<8x384xf32> to vector<8x128xf32>
      %256 = vector.extract_strided_slice %254 {offsets = [0, 0], sizes = [8, 128], strides = [1, 1]} : vector<8x384xf32> to vector<8x128xf32>
      %257 = arith.addf %255, %256 : vector<8x128xf32>
      %258 = arith.negf %257 : vector<8x128xf32>
      %259 = math.exp %258 : vector<8x128xf32>
      %cst_72 = arith.constant 1.000000e+00 : f32
      %260 = vector.broadcast %cst_72 : f32 to vector<8x128xf32>
      %261 = arith.addf %260, %259 : vector<8x128xf32>
      %262 = arith.divf %260, %261 : vector<8x128xf32>
      %263 = vector.extract_strided_slice %252 {offsets = [0, 128], sizes = [8, 128], strides = [1, 1]} : vector<8x384xf32> to vector<8x128xf32>
      %264 = vector.extract_strided_slice %254 {offsets = [0, 128], sizes = [8, 128], strides = [1, 1]} : vector<8x384xf32> to vector<8x128xf32>
      %265 = arith.addf %263, %264 : vector<8x128xf32>
      %266 = arith.negf %265 : vector<8x128xf32>
      %267 = math.exp %266 : vector<8x128xf32>
      %cst_73 = arith.constant 1.000000e+00 : f32
      %268 = vector.broadcast %cst_73 : f32 to vector<8x128xf32>
      %269 = arith.addf %268, %267 : vector<8x128xf32>
      %270 = arith.divf %268, %269 : vector<8x128xf32>
      %271 = vector.extract_strided_slice %252 {offsets = [0, 256], sizes = [8, 128], strides = [1, 1]} : vector<8x384xf32> to vector<8x128xf32>
      %272 = vector.extract_strided_slice %254 {offsets = [0, 256], sizes = [8, 128], strides = [1, 1]} : vector<8x384xf32> to vector<8x128xf32>
      %273 = arith.addf %272, %13 : vector<8x128xf32>
      %274 = arith.mulf %262, %273 : vector<8x128xf32>
      %275 = arith.addf %271, %274 : vector<8x128xf32>
      %276 = math.tanh %275 : vector<8x128xf32>
      %cst_74 = arith.constant 1.000000e+00 : f32
      %277 = vector.broadcast %cst_74 : f32 to vector<8x128xf32>
      %278 = arith.subf %277, %270 : vector<8x128xf32>
      %279 = arith.mulf %278, %276 : vector<8x128xf32>
      %280 = arith.mulf %270, %243 : vector<8x128xf32>
      %281 = arith.addf %279, %280 : vector<8x128xf32>
      %cst_75 = arith.constant dense<0.000000e+00> : vector<128xf32>
      %282 = vector.multi_reduction <add>, %281, %cst_75 [0] : vector<8x128xf32> to vector<128xf32>
      %283 = vector.shape_cast %282 : vector<128xf32> to vector<1x128xf32>
      %cst_76 = arith.constant 8.000000e+00 : f32
      %284 = vector.broadcast %cst_76 : f32 to vector<1x128xf32>
      %285 = arith.divf %283, %284 : vector<1x128xf32>
      %c7_i32 = arith.constant 7 : i32
      %286 = arith.addi %19, %c7_i32 : i32
      %c8_i32_77 = arith.constant 8 : i32
      %287 = arith.muli %286, %c8_i32_77 : i32
      %288 = tpu.assume_multiple %287, 8 : i32
      %289 = arith.index_cast %288 : i32 to index
      %c0_78 = arith.constant 0 : index
      %290 = vector.load %arg8[%289, %c0_78] : memref<128x384xf32, #tpu.memory_space<vmem>>, vector<8x384xf32>
      %291 = arith.truncf %281 : vector<8x128xf32> to vector<8x128xbf16>
      %cst_79 = arith.constant dense<0.000000e+00> : vector<8x384xf32>
      %292 = tpu.matmul %291, %10, %cst_79 {dimension_numbers = #tpu.dot_dimension_numbers<[1], [0], [0], [1], [0, 0, 1, 1], [], []>} : vector<8x128xbf16>, vector<128x384xbf16>, vector<8x384xf32> -> vector<8x384xf32>
      %293 = vector.extract_strided_slice %290 {offsets = [0, 0], sizes = [8, 128], strides = [1, 1]} : vector<8x384xf32> to vector<8x128xf32>
      %294 = vector.extract_strided_slice %292 {offsets = [0, 0], sizes = [8, 128], strides = [1, 1]} : vector<8x384xf32> to vector<8x128xf32>
      %295 = arith.addf %293, %294 : vector<8x128xf32>
      %296 = arith.negf %295 : vector<8x128xf32>
      %297 = math.exp %296 : vector<8x128xf32>
      %cst_80 = arith.constant 1.000000e+00 : f32
      %298 = vector.broadcast %cst_80 : f32 to vector<8x128xf32>
      %299 = arith.addf %298, %297 : vector<8x128xf32>
      %300 = arith.divf %298, %299 : vector<8x128xf32>
      %301 = vector.extract_strided_slice %290 {offsets = [0, 128], sizes = [8, 128], strides = [1, 1]} : vector<8x384xf32> to vector<8x128xf32>
      %302 = vector.extract_strided_slice %292 {offsets = [0, 128], sizes = [8, 128], strides = [1, 1]} : vector<8x384xf32> to vector<8x128xf32>
      %303 = arith.addf %301, %302 : vector<8x128xf32>
      %304 = arith.negf %303 : vector<8x128xf32>
      %305 = math.exp %304 : vector<8x128xf32>
      %cst_81 = arith.constant 1.000000e+00 : f32
      %306 = vector.broadcast %cst_81 : f32 to vector<8x128xf32>
      %307 = arith.addf %306, %305 : vector<8x128xf32>
      %308 = arith.divf %306, %307 : vector<8x128xf32>
      %309 = vector.extract_strided_slice %290 {offsets = [0, 256], sizes = [8, 128], strides = [1, 1]} : vector<8x384xf32> to vector<8x128xf32>
      %310 = vector.extract_strided_slice %292 {offsets = [0, 256], sizes = [8, 128], strides = [1, 1]} : vector<8x384xf32> to vector<8x128xf32>
      %311 = arith.addf %310, %13 : vector<8x128xf32>
      %312 = arith.mulf %300, %311 : vector<8x128xf32>
      %313 = arith.addf %309, %312 : vector<8x128xf32>
      %314 = math.tanh %313 : vector<8x128xf32>
      %cst_82 = arith.constant 1.000000e+00 : f32
      %315 = vector.broadcast %cst_82 : f32 to vector<8x128xf32>
      %316 = arith.subf %315, %308 : vector<8x128xf32>
      %317 = arith.mulf %316, %314 : vector<8x128xf32>
      %318 = arith.mulf %308, %281 : vector<8x128xf32>
      %319 = arith.addf %317, %318 : vector<8x128xf32>
      %cst_83 = arith.constant dense<0.000000e+00> : vector<128xf32>
      %320 = vector.multi_reduction <add>, %319, %cst_83 [0] : vector<8x128xf32> to vector<128xf32>
      %321 = vector.shape_cast %320 : vector<128xf32> to vector<1x128xf32>
      %cst_84 = arith.constant 8.000000e+00 : f32
      %322 = vector.broadcast %cst_84 : f32 to vector<1x128xf32>
      %323 = arith.divf %321, %322 : vector<1x128xf32>
      %324 = tpu.concatenate %57, %95, %133, %171, %209, %247, %285, %323 in 0 : vector<1x128xf32>, vector<1x128xf32>, vector<1x128xf32>, vector<1x128xf32>, vector<1x128xf32>, vector<1x128xf32>, vector<1x128xf32>, vector<1x128xf32> -> vector<8x128xf32>
      %325 = arith.index_cast %19 : i32 to index
      %c0_85 = arith.constant 0 : index
      %326 = vector.load %arg6[%325, %c0_85] : memref<16x128xf32, #tpu.memory_space<vmem>>, vector<8x128xf32>
      tpu.vector_store %arg6[%325, %c0_85], %324 {strides = array<i32>} : memref<16x128xf32, #tpu.memory_space<vmem>>, vector<8x128xf32>,
      scf.yield %319 : vector<8x128xf32>
    }
    %c2_i32_15 = arith.constant 2 : i32
    %c0_16 = arith.constant 0 : index
    %c0_17 = arith.constant 0 : index
    %17 = vector.load %arg7[%c0_16, %c0_17] : memref<8x128xf32, #tpu.memory_space<vmem>>, vector<8x128xf32>
    tpu.vector_store %arg7[%c0_16, %c0_17], %16 {strides = array<i32>} : memref<8x128xf32, #tpu.memory_space<vmem>>, vector<8x128xf32>,
    return
  }
  func.func @transform_0(%arg0: i32) -> (i32, i32) {
    %c0_i32 = arith.constant 0 : i32
    %c0_i32_0 = arith.constant 0 : i32
    return %arg0, %c0_i32 : i32, i32
  }
  func.func @transform_1(%arg0: i32) -> (i32, i32) {
    %c0_i32 = arith.constant 0 : i32
    %c0_i32_0 = arith.constant 0 : i32
    %c0_i32_1 = arith.constant 0 : i32
    return %c0_i32, %c0_i32_0 : i32, i32
  }
  func.func @transform_2(%arg0: i32) -> (i32, i32) {
    %c0_i32 = arith.constant 0 : i32
    %c0_i32_0 = arith.constant 0 : i32
    %c0_i32_1 = arith.constant 0 : i32
    return %c0_i32, %c0_i32_0 : i32, i32
  }
  func.func @transform_3(%arg0: i32) -> (i32, i32) {
    %c0_i32 = arith.constant 0 : i32
    %c0_i32_0 = arith.constant 0 : i32
    %c0_i32_1 = arith.constant 0 : i32
    return %c0_i32, %c0_i32_0 : i32, i32
  }
  func.func @transform_4(%arg0: i32) -> (i32, i32) {
    %c0_i32 = arith.constant 0 : i32
    %c0_i32_0 = arith.constant 0 : i32
    %c0_i32_1 = arith.constant 0 : i32
    return %c0_i32, %c0_i32_0 : i32, i32
  }
  func.func @transform_5(%arg0: i32) -> (i32, i32) {
    %c0_i32 = arith.constant 0 : i32
    %c0_i32_0 = arith.constant 0 : i32
    return %arg0, %c0_i32 : i32, i32
  }
}

module attributes {stable_mosaic.version = 11 : i64} {
  func.func @gcn_head_kernel(%arg0: i32, %arg1: memref<1x8x128xf32, #tpu.memory_space<vmem>>, %arg2: memref<1x8x8xbf16, #tpu.memory_space<vmem>>, %arg3: memref<2x128x128xbf16, #tpu.memory_space<vmem>>, %arg4: memref<2x1x128xf32, #tpu.memory_space<vmem>>, %arg5: memref<128x128xbf16, #tpu.memory_space<vmem>>, %arg6: memref<1x128xf32, #tpu.memory_space<vmem>>, %arg7: memref<128x128xbf16, #tpu.memory_space<vmem>>, %arg8: memref<1x128xf32, #tpu.memory_space<vmem>>, %arg9: memref<1x1x128xf32, #tpu.memory_space<vmem>>) attributes {dimension_semantics = [#tpu.dimension_semantics<parallel>], iteration_bounds = array<i64: 2>, scalar_prefetch = 0 : i64, scratch_operands = 0 : i64, tpu.core_type = #tpu.core_type<tc>, window_params = [{transform_indices = @transform_0, window_bounds = array<i64: 1, 8, 128>}, {transform_indices = @transform_1, window_bounds = array<i64: 1, 8, 8>}, {pipeline_mode = #tpu.pipeline_mode<synchronous>, transform_indices = @transform_2, window_bounds = array<i64: 2, 128, 128>}, {pipeline_mode = #tpu.pipeline_mode<synchronous>, transform_indices = @transform_3, window_bounds = array<i64: 2, 1, 128>}, {pipeline_mode = #tpu.pipeline_mode<synchronous>, transform_indices = @transform_4, window_bounds = array<i64: 128, 128>}, {pipeline_mode = #tpu.pipeline_mode<synchronous>, transform_indices = @transform_5, window_bounds = array<i64: 1, 128>}, {pipeline_mode = #tpu.pipeline_mode<synchronous>, transform_indices = @transform_6, window_bounds = array<i64: 128, 128>}, {pipeline_mode = #tpu.pipeline_mode<synchronous>, transform_indices = @transform_7, window_bounds = array<i64: 1, 128>}, {transform_indices = @transform_8, window_bounds = array<i64: 1, 1, 128>}]} {
    %c0 = arith.constant 0 : index
    %c0_0 = arith.constant 0 : index
    %c0_1 = arith.constant 0 : index
    %0 = vector.load %arg2[%c0, %c0_0, %c0_1] : memref<1x8x8xbf16, #tpu.memory_space<vmem>>, vector<1x8x8xbf16>
    %c0_2 = arith.constant 0 : index
    %c0_3 = arith.constant 0 : index
    %c0_4 = arith.constant 0 : index
    %1 = vector.load %arg1[%c0_2, %c0_3, %c0_4] : memref<1x8x128xf32, #tpu.memory_space<vmem>>, vector<1x8x128xf32>
    %2 = arith.truncf %1 : vector<1x8x128xf32> to vector<1x8x128xbf16>
    "tpu.trace_start"() <{level = 10 : i32, message = "bij,bjh->bih"}> : () -> ()
    %cst = arith.constant dense<0.000000e+00> : vector<1x8x128xf32>
    %3 = tpu.matmul %0, %2, %cst {dimension_numbers = #tpu.dot_dimension_numbers<[2], [1], [1], [2], [0, 0, 0, 1, 1, 2], [0], [0]>} : vector<1x8x8xbf16>, vector<1x8x128xbf16>, vector<1x8x128xf32> -> vector<1x8x128xf32>
    "tpu.trace_stop"() : () -> ()
    %4 = vector.shape_cast %3 : vector<1x8x128xf32> to vector<8x128xf32>
    %5 = arith.truncf %4 : vector<8x128xf32> to vector<8x128xbf16>
    %c0_5 = arith.constant 0 : index
    %c0_6 = arith.constant 0 : index
    %c0_7 = arith.constant 0 : index
    %6 = vector.load %arg3[%c0_5, %c0_6, %c0_7] : memref<2x128x128xbf16, #tpu.memory_space<vmem>>, vector<1x128x128xbf16>
    %7 = vector.shape_cast %6 : vector<1x128x128xbf16> to vector<128x128xbf16>
    %cst_8 = arith.constant dense<0.000000e+00> : vector<8x128xf32>
    %8 = tpu.matmul %5, %7, %cst_8 {dimension_numbers = #tpu.dot_dimension_numbers<[1], [0], [0], [1], [0, 0, 1, 1], [], []>} : vector<8x128xbf16>, vector<128x128xbf16>, vector<8x128xf32> -> vector<8x128xf32>
    %9 = vector.shape_cast %8 : vector<8x128xf32> to vector<1x8x128xf32>
    %c0_9 = arith.constant 0 : index
    %c0_10 = arith.constant 0 : index
    %c0_11 = arith.constant 0 : index
    %10 = vector.load %arg4[%c0_9, %c0_10, %c0_11] : memref<2x1x128xf32, #tpu.memory_space<vmem>>, vector<1x1x128xf32>
    %11 = vector.shape_cast %10 : vector<1x1x128xf32> to vector<1x128xf32>
    %12 = vector.shape_cast %11 : vector<1x128xf32> to vector<1x1x128xf32>
    %13 = vector.broadcast %12 : vector<1x1x128xf32> to vector<1x8x128xf32>
    %14 = arith.addf %9, %13 : vector<1x8x128xf32>
    %cst_12 = arith.constant 0.000000e+00 : f32
    %15 = vector.broadcast %cst_12 : f32 to vector<1x8x128xf32>
    %16 = arith.maximumf %14, %15 : vector<1x8x128xf32>
    %17 = arith.truncf %16 : vector<1x8x128xf32> to vector<1x8x128xbf16>
    "tpu.trace_start"() <{level = 10 : i32, message = "bij,bjh->bih"}> : () -> ()
    %cst_13 = arith.constant dense<0.000000e+00> : vector<1x8x128xf32>
    %18 = tpu.matmul %0, %17, %cst_13 {dimension_numbers = #tpu.dot_dimension_numbers<[2], [1], [1], [2], [0, 0, 0, 1, 1, 2], [0], [0]>} : vector<1x8x8xbf16>, vector<1x8x128xbf16>, vector<1x8x128xf32> -> vector<1x8x128xf32>
    "tpu.trace_stop"() : () -> ()
    %19 = vector.shape_cast %18 : vector<1x8x128xf32> to vector<8x128xf32>
    %20 = arith.truncf %19 : vector<8x128xf32> to vector<8x128xbf16>
    %c1 = arith.constant 1 : index
    %c0_14 = arith.constant 0 : index
    %c0_15 = arith.constant 0 : index
    %21 = vector.load %arg3[%c1, %c0_14, %c0_15] : memref<2x128x128xbf16, #tpu.memory_space<vmem>>, vector<1x128x128xbf16>
    %22 = vector.shape_cast %21 : vector<1x128x128xbf16> to vector<128x128xbf16>
    %cst_16 = arith.constant dense<0.000000e+00> : vector<8x128xf32>
    %23 = tpu.matmul %20, %22, %cst_16 {dimension_numbers = #tpu.dot_dimension_numbers<[1], [0], [0], [1], [0, 0, 1, 1], [], []>} : vector<8x128xbf16>, vector<128x128xbf16>, vector<8x128xf32> -> vector<8x128xf32>
    %24 = vector.shape_cast %23 : vector<8x128xf32> to vector<1x8x128xf32>
    %c1_17 = arith.constant 1 : index
    %c0_18 = arith.constant 0 : index
    %c0_19 = arith.constant 0 : index
    %25 = vector.load %arg4[%c1_17, %c0_18, %c0_19] : memref<2x1x128xf32, #tpu.memory_space<vmem>>, vector<1x1x128xf32>
    %26 = vector.shape_cast %25 : vector<1x1x128xf32> to vector<1x128xf32>
    %27 = vector.shape_cast %26 : vector<1x128xf32> to vector<1x1x128xf32>
    %28 = vector.broadcast %27 : vector<1x1x128xf32> to vector<1x8x128xf32>
    %29 = arith.addf %24, %28 : vector<1x8x128xf32>
    %cst_20 = arith.constant 0.000000e+00 : f32
    %30 = vector.broadcast %cst_20 : f32 to vector<1x8x128xf32>
    %31 = arith.maximumf %29, %30 : vector<1x8x128xf32>
    %cst_21 = arith.constant dense<0.000000e+00> : vector<1x128xf32>
    %32 = vector.multi_reduction <add>, %31, %cst_21 [1] : vector<1x8x128xf32> to vector<1x128xf32>
    %cst_22 = arith.constant 8.000000e+00 : f32
    %33 = vector.broadcast %cst_22 : f32 to vector<1x128xf32>
    %34 = arith.divf %32, %33 : vector<1x128xf32>
    %35 = arith.truncf %34 : vector<1x128xf32> to vector<1x128xbf16>
    %c0_23 = arith.constant 0 : index
    %c0_24 = arith.constant 0 : index
    %36 = vector.load %arg5[%c0_23, %c0_24] : memref<128x128xbf16, #tpu.memory_space<vmem>>, vector<128x128xbf16>
    %cst_25 = arith.constant dense<0.000000e+00> : vector<1x128xf32>
    %37 = tpu.matmul %35, %36, %cst_25 {dimension_numbers = #tpu.dot_dimension_numbers<[1], [0], [0], [1], [0, 0, 1, 1], [], []>} : vector<1x128xbf16>, vector<128x128xbf16>, vector<1x128xf32> -> vector<1x128xf32>
    %c0_26 = arith.constant 0 : index
    %c0_27 = arith.constant 0 : index
    %38 = vector.load %arg6[%c0_26, %c0_27] : memref<1x128xf32, #tpu.memory_space<vmem>>, vector<1x128xf32>
    %39 = arith.addf %37, %38 : vector<1x128xf32>
    %cst_28 = arith.constant 0.000000e+00 : f32
    %40 = vector.broadcast %cst_28 : f32 to vector<1x128xf32>
    %41 = arith.maximumf %39, %40 : vector<1x128xf32>
    %42 = arith.truncf %41 : vector<1x128xf32> to vector<1x128xbf16>
    %c0_29 = arith.constant 0 : index
    %c0_30 = arith.constant 0 : index
    %43 = vector.load %arg7[%c0_29, %c0_30] : memref<128x128xbf16, #tpu.memory_space<vmem>>, vector<128x128xbf16>
    %cst_31 = arith.constant dense<0.000000e+00> : vector<1x128xf32>
    %44 = tpu.matmul %42, %43, %cst_31 {dimension_numbers = #tpu.dot_dimension_numbers<[1], [0], [0], [1], [0, 0, 1, 1], [], []>} : vector<1x128xbf16>, vector<128x128xbf16>, vector<1x128xf32> -> vector<1x128xf32>
    %c0_32 = arith.constant 0 : index
    %c0_33 = arith.constant 0 : index
    %45 = vector.load %arg8[%c0_32, %c0_33] : memref<1x128xf32, #tpu.memory_space<vmem>>, vector<1x128xf32>
    %46 = arith.addf %44, %45 : vector<1x128xf32>
    %cst_34 = arith.constant dense<0xFF800000> : vector<1xf32>
    %47 = vector.multi_reduction <maximumf>, %46, %cst_34 [1] : vector<1x128xf32> to vector<1xf32>
    %48 = vector.shape_cast %47 : vector<1xf32> to vector<1x1xf32>
    %49 = vector.broadcast %48 : vector<1x1xf32> to vector<1x128xf32>
    %50 = arith.subf %46, %49 : vector<1x128xf32>
    %51 = math.exp %50 : vector<1x128xf32>
    %cst_35 = arith.constant dense<0.000000e+00> : vector<1xf32>
    %52 = vector.multi_reduction <add>, %51, %cst_35 [1] : vector<1x128xf32> to vector<1xf32>
    %53 = vector.shape_cast %52 : vector<1xf32> to vector<1x1xf32>
    %54 = tpu.reciprocal %53 {approx = true} : vector<1x1xf32> -> vector<1x1xf32>
    %55 = vector.broadcast %54 : vector<1x1xf32> to vector<1x128xf32>
    %56 = arith.mulf %51, %55 : vector<1x128xf32>
    %57 = vector.shape_cast %56 : vector<1x128xf32> to vector<1x1x128xf32>
    %c0_36 = arith.constant 0 : index
    %c0_37 = arith.constant 0 : index
    %c0_38 = arith.constant 0 : index
    %58 = vector.load %arg9[%c0_36, %c0_37, %c0_38] : memref<1x1x128xf32, #tpu.memory_space<vmem>>, vector<1x1x128xf32>
    tpu.vector_store %arg9[%c0_36, %c0_37, %c0_38], %57 {strides = array<i32>} : memref<1x1x128xf32, #tpu.memory_space<vmem>>, vector<1x1x128xf32>,
    return
  }
  func.func @transform_0(%arg0: i32) -> (i32, i32, i32) {
    %c0_i32 = arith.constant 0 : i32
    %c0_i32_0 = arith.constant 0 : i32
    %c0_i32_1 = arith.constant 0 : i32
    return %arg0, %c0_i32, %c0_i32_0 : i32, i32, i32
  }
  func.func @transform_1(%arg0: i32) -> (i32, i32, i32) {
    %c0_i32 = arith.constant 0 : i32
    %c0_i32_0 = arith.constant 0 : i32
    %c0_i32_1 = arith.constant 0 : i32
    return %arg0, %c0_i32, %c0_i32_0 : i32, i32, i32
  }
  func.func @transform_2(%arg0: i32) -> (i32, i32, i32) {
    %c0_i32 = arith.constant 0 : i32
    %c0_i32_0 = arith.constant 0 : i32
    %c0_i32_1 = arith.constant 0 : i32
    %c0_i32_2 = arith.constant 0 : i32
    return %c0_i32, %c0_i32_0, %c0_i32_1 : i32, i32, i32
  }
  func.func @transform_3(%arg0: i32) -> (i32, i32, i32) {
    %c0_i32 = arith.constant 0 : i32
    %c0_i32_0 = arith.constant 0 : i32
    %c0_i32_1 = arith.constant 0 : i32
    %c0_i32_2 = arith.constant 0 : i32
    return %c0_i32, %c0_i32_0, %c0_i32_1 : i32, i32, i32
  }
  func.func @transform_4(%arg0: i32) -> (i32, i32) {
    %c0_i32 = arith.constant 0 : i32
    %c0_i32_0 = arith.constant 0 : i32
    %c0_i32_1 = arith.constant 0 : i32
    return %c0_i32, %c0_i32_0 : i32, i32
  }
  func.func @transform_5(%arg0: i32) -> (i32, i32) {
    %c0_i32 = arith.constant 0 : i32
    %c0_i32_0 = arith.constant 0 : i32
    %c0_i32_1 = arith.constant 0 : i32
    return %c0_i32, %c0_i32_0 : i32, i32
  }
  func.func @transform_6(%arg0: i32) -> (i32, i32) {
    %c0_i32 = arith.constant 0 : i32
    %c0_i32_0 = arith.constant 0 : i32
    %c0_i32_1 = arith.constant 0 : i32
    return %c0_i32, %c0_i32_0 : i32, i32
  }
  func.func @transform_7(%arg0: i32) -> (i32, i32) {
    %c0_i32 = arith.constant 0 : i32
    %c0_i32_0 = arith.constant 0 : i32
    %c0_i32_1 = arith.constant 0 : i32
    return %c0_i32, %c0_i32_0 : i32, i32
  }
  func.func @transform_8(%arg0: i32) -> (i32, i32, i32) {
    %c0_i32 = arith.constant 0 : i32
    %c0_i32_0 = arith.constant 0 : i32
    %c0_i32_1 = arith.constant 0 : i32
    return %arg0, %c0_i32, %c0_i32_0 : i32, i32, i32
  }
}

</mosaic_0001>

<llo_original>
// kernel: expanded_spatial_graph_embedding_net.3
$region0: #{expanded_spatial_graph_embedding_net.3}
  #allocation0 [shape = 'u32[]', space=smem, size = 0x4, offset = 0x4, fixed_abs, tag = 'smem constant byte address 0x4 - core index']
  #allocation1 [shape = 'u32[144,128]{1,0:T(1,128)}', space=vmem, size = 0x12000, scoped, tag = 'internal scratch']
  %s0 = inlined_call_operand.vmem [shape: f32[2,8,128], index: 0, kind: input, shape index: {}]
  %s1 = inlined_call_operand.vmem [shape: bf16[2,8,8], index: 1, kind: input, shape index: {}]
  %s2 = inlined_call_operand.vmem [shape: bf16[2,128,128], index: 2, kind: input, shape index: {}]
  %s3 = inlined_call_operand.vmem [shape: f32[2,1,128], index: 3, kind: input, shape index: {}]
  %s4 = inlined_call_operand.vmem [shape: bf16[128,128], index: 4, kind: input, shape index: {}]
  %s5 = inlined_call_operand.vmem [shape: f32[1,128], index: 5, kind: input, shape index: {}]
  %s6 = inlined_call_operand.vmem [shape: bf16[128,128], index: 6, kind: input, shape index: {}]
  %s7 = inlined_call_operand.vmem [shape: f32[1,128], index: 7, kind: input, shape index: {}]
  %s8 = inlined_call_operand.hbm [shape: f32[2,1,128], index: 8, kind: output, shape index: {}]
  %s9 = sld [smem:[#allocation0]]
  $region65: #{expanded_spatial_graph_embedding_net.3} parent=0
    _
  %s11 = ssub.s32 1, %s9
  %s12 = scalar_select 0, %s11, %s9
  $region1: #{expanded_spatial_graph_embedding_net.3} parent=0
    #allocation2 [shape = 'u8[1024]{0}', space=vmem, size = 0x400, scoped, tag = 'output window, operand 0']
    #allocation3 [shape = 's32[2]{0}', space=sflag, size = 0x8, scoped, tag = 'scoped memory for expanded_spatial_graph_embedding_net.3']
    %13 = vsyncpa [#allocation3], 0
    %s14 = scalar_lea.sflag [#allocation3], 1
    %15 = vsyncpa %s14, 0
    loop: start=0, step=1, limit=4
    $region2: #{expanded_spatial_graph_embedding_net.3} parent=1 // loop_pre_header
      _
    $region3: #{expanded_spatial_graph_embedding_net.3} parent=1 // loop_header
      %s17 = sphi 0, %s21
      %p18 = scmp.ge.s32.totalorder %s17, 4
      %s27 = sphi 0, %s29
      %s30 = sphi 0, %s27
      %s31 = sphi 0, %s30
      %s47 = sphi 0, %s31
      %s53 = sphi 0, %s55
      %s56 = sphi 0, %s53
      %s57 = sphi 0, %s56
      %s73 = sphi 0, %s57
      %s77 = sphi 0, %s77
      %s79 = sphi 0, %s77
      %s80 = sphi 0, %s79
      %s94 = sphi 0, %s80
      %s98 = sphi 0, %s98
      %s100 = sphi 0, %s98
      %s101 = sphi 0, %s100
      %s115 = sphi 0, %s101
      %s119 = sphi 0, %s119
      %s121 = sphi 0, %s119
      %s122 = sphi 0, %s121
      %s136 = sphi 0, %s122
      %s140 = sphi 0, %s140
      %s142 = sphi 0, %s140
      %s143 = sphi 0, %s142
      %s157 = sphi 0, %s143
      %s161 = sphi 0, %s161
      %s163 = sphi 0, %s161
      %s164 = sphi 0, %s163
      %s178 = sphi 0, %s164
      %s182 = sphi 0, %s182
      %s184 = sphi 0, %s182
      %s185 = sphi 0, %s184
      %s199 = sphi 0, %s185
      %s205 = sphi 0, %s207
      %s208 = sphi 0, %s205
      %s209 = sphi 0, %s208
      %s225 = sphi 0, %s209
    $region4: #{expanded_spatial_graph_embedding_net.3} parent=1 // loop_header_branch
      %20 = sbr.rel (%p18) target = $region8
    $region5: #{expanded_spatial_graph_embedding_net.3} parent=1 // loop_body
      %s22 = ssub.s32 %s17, 1
      %s23 = ssub.s32 %s17, 2
      %s24 = sadd.s32 %s17, 1
      %s25 = ssub.s32 %s17, %s24
      %p26 = scmp.eq.s32.totalorder %s25, 0
      %s28 = sadd.s32 %s27, 1
      %s29 = scalar_select %p26, %s27, %s28
      %p32 = pneg %p26
      %p33 = scmp.eq.s32.totalorder %s17, 1
      %p34 = por %p32, %p33
      %p35 = scmp.ne.s32.totalorder %s27, %s30
      %p36 = scmp.eq.s32.totalorder %s17, 0
      %p37 = por %p35, %p36
      %p38 = scmp.ne.s32.totalorder %s27, %s30
      %p39 = scmp.eq.s32.totalorder %s22, 1
      %p40 = por %p38, %p39
      %p41 = scmp.ne.s32.totalorder %s30, %s31
      %p42 = scmp.eq.s32.totalorder %s22, 0
      %p43 = por %p41, %p42
      %p44 = scmp.ne.s32.totalorder %s30, %s31
      %p45 = scmp.eq.s32.totalorder %s23, 1
      %p46 = por %p44, %p45
      %p48 = scmp.ne.s32.totalorder %s31, %s47
      %p49 = scmp.eq.s32.totalorder %s23, 0
      %p50 = por %p48, %p49
      %s51 = ssub.s32 %s17, %s24
      %p52 = scmp.eq.s32.totalorder %s51, 0
      %s54 = sadd.s32 %s53, 1
      %s55 = scalar_select %p52, %s53, %s54
      %p58 = pneg %p52
      %p59 = scmp.eq.s32.totalorder %s17, 1
      %p60 = por %p58, %p59
      %p61 = scmp.ne.s32.totalorder %s53, %s56
      %p62 = scmp.eq.s32.totalorder %s17, 0
      %p63 = por %p61, %p62
      %p64 = scmp.ne.s32.totalorder %s53, %s56
      %p65 = scmp.eq.s32.totalorder %s22, 1
      %p66 = por %p64, %p65
      %p67 = scmp.ne.s32.totalorder %s56, %s57
      %p68 = scmp.eq.s32.totalorder %s22, 0
      %p69 = por %p67, %p68
      %p70 = scmp.ne.s32.totalorder %s56, %s57
      %p71 = scmp.eq.s32.totalorder %s23, 1
      %p72 = por %p70, %p71
      %p74 = scmp.ne.s32.totalorder %s57, %s73
      %p75 = scmp.eq.s32.totalorder %s23, 0
      %p76 = por %p74, %p75
      %s78 = sadd.s32 %s77, 1
      %p81 = scmp.eq.s32.totalorder %s17, 1
      %p82 = scmp.ne.s32.totalorder %s77, %s79
      %p83 = scmp.eq.s32.totalorder %s17, 0
      %p84 = por %p82, %p83
      %p85 = scmp.ne.s32.totalorder %s77, %s79
      %p86 = scmp.eq.s32.totalorder %s22, 1
      %p87 = por %p85, %p86
      %p88 = scmp.ne.s32.totalorder %s79, %s80
      %p89 = scmp.eq.s32.totalorder %s22, 0
      %p90 = por %p88, %p89
      %p91 = scmp.ne.s32.totalorder %s79, %s80
      %p92 = scmp.eq.s32.totalorder %s23, 1
      %p93 = por %p91, %p92
      %p95 = scmp.ne.s32.totalorder %s80, %s94
      %p96 = scmp.eq.s32.totalorder %s23, 0
      %p97 = por %p95, %p96
      %s99 = sadd.s32 %s98, 1
      %p102 = scmp.eq.s32.totalorder %s17, 1
      %p103 = scmp.ne.s32.totalorder %s98, %s100
      %p104 = scmp.eq.s32.totalorder %s17, 0
      %p105 = por %p103, %p104
      %p106 = scmp.ne.s32.totalorder %s98, %s100
      %p107 = scmp.eq.s32.totalorder %s22, 1
      %p108 = por %p106, %p107
      %p109 = scmp.ne.s32.totalorder %s100, %s101
      %p110 = scmp.eq.s32.totalorder %s22, 0
      %p111 = por %p109, %p110
      %p112 = scmp.ne.s32.totalorder %s100, %s101
      %p113 = scmp.eq.s32.totalorder %s23, 1
      %p114 = por %p112, %p113
      %p116 = scmp.ne.s32.totalorder %s101, %s115
      %p117 = scmp.eq.s32.totalorder %s23, 0
      %p118 = por %p116, %p117
      %s120 = sadd.s32 %s119, 1
      %p123 = scmp.eq.s32.totalorder %s17, 1
      %p124 = scmp.ne.s32.totalorder %s119, %s121
      %p125 = scmp.eq.s32.totalorder %s17, 0
      %p126 = por %p124, %p125
      %p127 = scmp.ne.s32.totalorder %s119, %s121
      %p128 = scmp.eq.s32.totalorder %s22, 1
      %p129 = por %p127, %p128
      %p130 = scmp.ne.s32.totalorder %s121, %s122
      %p131 = scmp.eq.s32.totalorder %s22, 0
      %p132 = por %p130, %p131
      %p133 = scmp.ne.s32.totalorder %s121, %s122
      %p134 = scmp.eq.s32.totalorder %s23, 1
      %p135 = por %p133, %p134
      %p137 = scmp.ne.s32.totalorder %s122, %s136
      %p138 = scmp.eq.s32.totalorder %s23, 0
      %p139 = por %p137, %p138
      %s141 = sadd.s32 %s140, 1
      %p144 = scmp.eq.s32.totalorder %s17, 1
      %p145 = scmp.ne.s32.totalorder %s140, %s142
      %p146 = scmp.eq.s32.totalorder %s17, 0
      %p147 = por %p145, %p146
      %p148 = scmp.ne.s32.totalorder %s140, %s142
      %p149 = scmp.eq.s32.totalorder %s22, 1
      %p150 = por %p148, %p149
      %p151 = scmp.ne.s32.totalorder %s142, %s143
      %p152 = scmp.eq.s32.totalorder %s22, 0
      %p153 = por %p151, %p152
      %p154 = scmp.ne.s32.totalorder %s142, %s143
      %p155 = scmp.eq.s32.totalorder %s23, 1
      %p156 = por %p154, %p155
      %p158 = scmp.ne.s32.totalorder %s143, %s157
      %p159 = scmp.eq.s32.totalorder %s23, 0
      %p160 = por %p158, %p159
      %s162 = sadd.s32 %s161, 1
      %p165 = scmp.eq.s32.totalorder %s17, 1
      %p166 = scmp.ne.s32.totalorder %s161, %s163
      %p167 = scmp.eq.s32.totalorder %s17, 0
      %p168 = por %p166, %p167
      %p169 = scmp.ne.s32.totalorder %s161, %s163
      %p170 = scmp.eq.s32.totalorder %s22, 1
      %p171 = por %p169, %p170
      %p172 = scmp.ne.s32.totalorder %s163, %s164
      %p173 = scmp.eq.s32.totalorder %s22, 0
      %p174 = por %p172, %p173
      %p175 = scmp.ne.s32.totalorder %s163, %s164
      %p176 = scmp.eq.s32.totalorder %s23, 1
      %p177 = por %p175, %p176
      %p179 = scmp.ne.s32.totalorder %s164, %s178
      %p180 = scmp.eq.s32.totalorder %s23, 0
      %p181 = por %p179, %p180
      %s183 = sadd.s32 %s182, 1
      %p186 = scmp.eq.s32.totalorder %s17, 1
      %p187 = scmp.ne.s32.totalorder %s182, %s184
      %p188 = scmp.eq.s32.totalorder %s17, 0
      %p189 = por %p187, %p188
      %p190 = scmp.ne.s32.totalorder %s182, %s184
      %p191 = scmp.eq.s32.totalorder %s22, 1
      %p192 = por %p190, %p191
      %p193 = scmp.ne.s32.totalorder %s184, %s185
      %p194 = scmp.eq.s32.totalorder %s22, 0
      %p195 = por %p193, %p194
      %p196 = scmp.ne.s32.totalorder %s184, %s185
      %p197 = scmp.eq.s32.totalorder %s23, 1
      %p198 = por %p196, %p197
      %p200 = scmp.ne.s32.totalorder %s185, %s199
      %p201 = scmp.eq.s32.totalorder %s23, 0
      %p202 = por %p200, %p201
      %s203 = ssub.s32 %s17, %s24
      %p204 = scmp.eq.s32.totalorder %s203, 0
      %s206 = sadd.s32 %s205, 1
      %s207 = scalar_select %p204, %s205, %s206
      %p210 = pneg %p204
      %p211 = scmp.eq.s32.totalorder %s17, 1
      %p212 = por %p210, %p211
      %p213 = scmp.ne.s32.totalorder %s205, %s208
      %p214 = scmp.eq.s32.totalorder %s17, 0
      %p215 = por %p213, %p214
      %p216 = scmp.ne.s32.totalorder %s205, %s208
      %p217 = scmp.eq.s32.totalorder %s22, 1
      %p218 = por %p216, %p217
      %p219 = scmp.ne.s32.totalorder %s208, %s209
      %p220 = scmp.eq.s32.totalorder %s22, 0
      %p221 = por %p219, %p220
      %p222 = scmp.ne.s32.totalorder %s208, %s209
      %p223 = scmp.eq.s32.totalorder %s23, 1
      %p224 = por %p222, %p223
      %p226 = scmp.ne.s32.totalorder %s209, %s225
      %p227 = scmp.eq.s32.totalorder %s23, 0
      %p228 = por %p226, %p227
      %p229 = scmp.le.s32.totalorder 1, %s17
      %p230 = scmp.lt.s32.totalorder %s17, 3
      %p231 = pnand %p229, %p230
      %p232 = pneg %p231
      // Predicated region
      $region9: #{expanded_spatial_graph_embedding_net.3} parent=5 // pred_check
        _
      $region10: #{expanded_spatial_graph_embedding_net.3} parent=5 // pred_check_branch
        %234 = sbr.rel (%p231) target = $region12
      $region11: #{expanded_spatial_graph_embedding_net.3} parent=5 // pred_region
        %s235 = ssub.s32 %s17, 1
        // Predicated region
        $region13: #{expanded_spatial_graph_embedding_net.3} parent=11 // pred_check
          %p236 = pneg %p90
        $region14: #{expanded_spatial_graph_embedding_net.3} parent=11 // pred_check_branch
          %238 = sbr.rel (%p236) target = $region16
        $region15: #{expanded_spatial_graph_embedding_net.3} parent=11 // pred_region
          _
        $region16: #{expanded_spatial_graph_embedding_net.3} parent=11 // pred_fallthru
          _
        // Predicated region
        $region17: #{expanded_spatial_graph_embedding_net.3} parent=11 // pred_check
          %p239 = pneg %p111
        $region18: #{expanded_spatial_graph_embedding_net.3} parent=11 // pred_check_branch
          %241 = sbr.rel (%p239) target = $region20
        $region19: #{expanded_spatial_graph_embedding_net.3} parent=11 // pred_region
          _
        $region20: #{expanded_spatial_graph_embedding_net.3} parent=11 // pred_fallthru
          _
        // Predicated region
        $region21: #{expanded_spatial_graph_embedding_net.3} parent=11 // pred_check
          %p242 = pneg %p132
        $region22: #{expanded_spatial_graph_embedding_net.3} parent=11 // pred_check_branch
          %244 = sbr.rel (%p242) target = $region24
        $region23: #{expanded_spatial_graph_embedding_net.3} parent=11 // pred_region
          _
        $region24: #{expanded_spatial_graph_embedding_net.3} parent=11 // pred_fallthru
          _
        // Predicated region
        $region25: #{expanded_spatial_graph_embedding_net.3} parent=11 // pred_check
          %p245 = pneg %p153
        $region26: #{expanded_spatial_graph_embedding_net.3} parent=11 // pred_check_branch
          %247 = sbr.rel (%p245) target = $region28
        $region27: #{expanded_spatial_graph_embedding_net.3} parent=11 // pred_region
          _
        $region28: #{expanded_spatial_graph_embedding_net.3} parent=11 // pred_fallthru
          _
        // Predicated region
        $region29: #{expanded_spatial_graph_embedding_net.3} parent=11 // pred_check
          %p248 = pneg %p174
        $region30: #{expanded_spatial_graph_embedding_net.3} parent=11 // pred_check_branch
          %250 = sbr.rel (%p248) target = $region32
        $region31: #{expanded_spatial_graph_embedding_net.3} parent=11 // pred_region
          _
        $region32: #{expanded_spatial_graph_embedding_net.3} parent=11 // pred_fallthru
          _
        // Predicated region
        $region33: #{expanded_spatial_graph_embedding_net.3} parent=11 // pred_check
          %p251 = pneg %p195
        $region34: #{expanded_spatial_graph_embedding_net.3} parent=11 // pred_check_branch
          %253 = sbr.rel (%p251) target = $region36
        $region35: #{expanded_spatial_graph_embedding_net.3} parent=11 // pred_region
          _
        $region36: #{expanded_spatial_graph_embedding_net.3} parent=11 // pred_fallthru
          _
      $region12: #{expanded_spatial_graph_embedding_net.3} parent=5 // pred_fallthru
        _
      %p254 = scmp.lt.s32.totalorder %s17, 2
      // Predicated region
      $region37: #{expanded_spatial_graph_embedding_net.3} parent=5 // pred_check
        %p255 = pneg %p254
      $region38: #{expanded_spatial_graph_embedding_net.3} parent=5 // pred_check_branch
        %257 = sbr.rel (%p255) target = $region40
      $region39: #{expanded_spatial_graph_embedding_net.3} parent=5 // pred_region
        // Predicated region
        $region41: #{expanded_spatial_graph_embedding_net.3} parent=39 // pred_check
          %p258 = pneg %p37
        $region42: #{expanded_spatial_graph_embedding_net.3} parent=39 // pred_check_branch
          %260 = sbr.rel (%p258) target = $region44
        $region43: #{expanded_spatial_graph_embedding_net.3} parent=39 // pred_region
          %p261 = scmp.lt.s32.totalorder %s17, 1
          %s262 = scalar_select %p261, %s17, 1
          %s263 = smul.addr %s262, 8
          %s264 = scalar_lea.vmem %s0, %s263
        $region44: #{expanded_spatial_graph_embedding_net.3} parent=39 // pred_fallthru
          _
        // Predicated region
        $region45: #{expanded_spatial_graph_embedding_net.3} parent=39 // pred_check
          %p265 = pneg %p63
        $region46: #{expanded_spatial_graph_embedding_net.3} parent=39 // pred_check_branch
          %267 = sbr.rel (%p265) target = $region48
        $region47: #{expanded_spatial_graph_embedding_net.3} parent=39 // pred_region
          %p268 = scmp.lt.s32.totalorder %s17, 1
          %s269 = scalar_select %p268, %s17, 1
          %s270 = smul.addr %s269, 4
          %s271 = scalar_lea.vmem %s1, %s270
        $region48: #{expanded_spatial_graph_embedding_net.3} parent=39 // pred_fallthru
          _
      $region40: #{expanded_spatial_graph_embedding_net.3} parent=5 // pred_fallthru
        _
      %p272 = scmp.le.s32.totalorder 1, %s17
      %p273 = scmp.lt.s32.totalorder %s17, 3
      %p274 = pnand %p272, %p273
      %p275 = pneg %p274
      // Predicated region
      $region49: #{expanded_spatial_graph_embedding_net.3} parent=5 // pred_check
        _
      $region50: #{expanded_spatial_graph_embedding_net.3} parent=5 // pred_check_branch
        %277 = sbr.rel (%p274) target = $region52
      $region51: #{expanded_spatial_graph_embedding_net.3} parent=5 // pred_region
        %s278 = ssub.s32 %s17, 1
        %p279 = scmp.lt.s32.totalorder %s22, 1
        %s280 = scalar_select %p279, %s22, 1
        %s281 = smul.addr %s280, 8
        %s282 = scalar_lea.vmem %s0, %s281
        %p283 = pneg %p43
        %p284 = pneg %p40
        %p285 = scmp.lt.s32.totalorder %s22, 1
        %s286 = scalar_select %p285, %s22, 1
        %s287 = smul.addr %s286, 4
        %s288 = scalar_lea.vmem %s1, %s287
        %p289 = pneg %p69
        %p290 = pneg %p66
        %p291 = pneg %p90
        %p292 = pneg %p87
        %p293 = pneg %p111
        %p294 = pneg %p108
        %p295 = pneg %p132
        %p296 = pneg %p129
        %p297 = pneg %p153
        %p298 = pneg %p150
        %p299 = pneg %p174
        %p300 = pneg %p171
        %p301 = pneg %p195
        %p302 = pneg %p192
        %p303 = pneg %p221
        %p304 = pneg %p218
        %s305 = sand.u32 %s208, 1
        %s306 = scalar_lea.sflag [#allocation3], %s305
        %s307 = sand.u32 %s208, 1
        %s308 = scalar_lea.vmem [#allocation2], %s307
        %p309 = scmp.lt.s32.totalorder %s22, 1
        %s310 = scalar_select %p309, %s22, 1
        %s311 = smul.addr %s310, 8
        %s312 = scalar_lea.vmem %s0, %s311
        %p313 = scmp.lt.s32.totalorder %s22, 1
        %s314 = scalar_select %p313, %s22, 1
        %s315 = smul.addr %s314, 4
        %s316 = scalar_lea.vmem %s1, %s315
        %v318 = vld [vmem:[%s316] sm:$0xf]
        %v319 = vld [vmem:[%s312] sm:$0xff]
        %v320 = vpack.c.bf16 %v319, %v319
        %vm321 = vcmask 64512
        %v323 = vsel %vm321, %v318, 0
        %vm325 = vcmask 1043456
        %v327 = vsel %vm325, %v320, 0
        %329 = vmatprep.subr.bf16.mxu0 0
        %330 = vmatpush1.bf16.msra.mxu0 %v327
        %331 = vmatprep.subr.bf16.mxu0 0
        %332 = vmatpush1.bf16.msra.mxu0 0
        %333 = vmatprep.subr.bf16.mxu0 0
        %334 = vmatpush1.bf16.msra.mxu0 0
        %335 = vmatprep.subr.bf16.mxu0 0
        %336 = vmatpush1.bf16.msra.mxu0 0
        %337 = vmatprep.subr.bf16.mxu0 0
        %338 = vmatpush1.bf16.msra.mxu0 0
        %339 = vmatprep.subr.bf16.mxu0 0
        %340 = vmatpush1.bf16.msra.mxu0 0
        %341 = vmatprep.subr.bf16.mxu0 0
        %342 = vmatpush1.bf16.msra.mxu0 0
        %343 = vmatprep.subr.bf16.mxu0 0
        %344 = vmatpush1.bf16.msra.mxu0 0
        %345 = vmatprep.subr.bf16.mxu0 0
        %346 = vmatpush1.bf16.msra.mxu0 0
        %347 = vmatprep.subr.bf16.mxu0 0
        %348 = vmatpush1.bf16.msra.mxu0 0
        %349 = vmatprep.subr.bf16.mxu0 0
        %350 = vmatpush1.bf16.msra.mxu0 0
        %351 = vmatprep.subr.bf16.mxu0 0
        %352 = vmatpush1.bf16.msra.mxu0 0
        %353 = vmatprep.subr.bf16.mxu0 0
        %354 = vmatpush1.bf16.msra.mxu0 0
        %355 = vmatprep.subr.bf16.mxu0 0
        %356 = vmatpush1.bf16.msra.mxu0 0
        %357 = vmatprep.subr.bf16.mxu0 0
        %358 = vmatpush1.bf16.msra.mxu0 0
        %359 = vmatprep.subr.bf16.mxu0 0
        %360 = vmatpush1.bf16.msra.mxu0 0
        %361 = vmatprep.mubr.bf16.mxu0 0
        %362 = vmatmul.mubr.bf16.gmra.mrb[0].mxu0 %v323
        %v363 = vpop.f32.mrb[0].mxu0
        %v364 = vadd.f32 0.0, %v363
        %v365 = vpop.f32.mrb[0].mxu0
        %v366 = vpop.f32.mrb[0].mxu0
        %v367 = vpop.f32.mrb[0].mxu0
        %368 = vdwg.mxu0
        %v369 = vpack.c.bf16 %v364, %v364
        %v370 = vld [vmem:[%s2] sm:$0xf]
        %v371 = vld [vmem:[%s2 + $0x4] sm:$0xf]
        %v372 = vld [vmem:[%s2 + $0x8] sm:$0xf]
        %v373 = vld [vmem:[%s2 + $0xc] sm:$0xf]
        %v374 = vld [vmem:[%s2 + $0x10] sm:$0xf]
        %v375 = vld [vmem:[%s2 + $0x14] sm:$0xf]
        %v376 = vld [vmem:[%s2 + $0x18] sm:$0xf]
        %v377 = vld [vmem:[%s2 + $0x1c] sm:$0xf]
        %v378 = vld [vmem:[%s2 + $0x20] sm:$0xf]
        %v379 = vld [vmem:[%s2 + $0x24] sm:$0xf]
        %v380 = vld [vmem:[%s2 + $0x28] sm:$0xf]
        %v381 = vld [vmem:[%s2 + $0x2c] sm:$0xf]
        %v382 = vld [vmem:[%s2 + $0x30] sm:$0xf]
        %v383 = vld [vmem:[%s2 + $0x34] sm:$0xf]
        %v384 = vld [vmem:[%s2 + $0x38] sm:$0xf]
        %v385 = vld [vmem:[%s2 + $0x3c] sm:$0xf]
        %v402 = vunpack.c.l.b16 %v370
        %v403 = vunpack.c.l.b16 %v371
        %v404 = vunpack.c.l.b16 %v372
        %v405 = vunpack.c.l.b16 %v373
        %v406 = vunpack.c.l.b16 %v374
        %v407 = vunpack.c.l.b16 %v375
        %v408 = vunpack.c.l.b16 %v376
        %v409 = vunpack.c.l.b16 %v377
        %v410 = vunpack.c.l.b16 %v378
        %v411 = vunpack.c.l.b16 %v379
        %v412 = vunpack.c.l.b16 %v380
        %v413 = vunpack.c.l.b16 %v381
        %v414 = vunpack.c.l.b16 %v382
        %v415 = vunpack.c.l.b16 %v383
        %v416 = vunpack.c.l.b16 %v384
        %v417 = vunpack.c.l.b16 %v385
        %v418 = vpack.c.b16 %v403, %v402
        %v419 = vpack.c.b16 %v405, %v404
        %v420 = vpack.c.b16 %v407, %v406
        %v421 = vpack.c.b16 %v409, %v408
        %v422 = vpack.c.b16 %v411, %v410
        %v423 = vpack.c.b16 %v413, %v412
        %v424 = vpack.c.b16 %v415, %v414
        %v425 = vpack.c.b16 %v417, %v416
        %434 = vmatprep.subr.bf16.mxu0 0
        %435 = vmatpush1.bf16.msra.mxu0 %v418
        %436 = vmatprep.subr.bf16.mxu0 0
        %437 = vmatpush1.bf16.msra.mxu0 %v419
        %438 = vmatprep.subr.bf16.mxu0 0
        %439 = vmatpush1.bf16.msra.mxu0 %v420
        %440 = vmatprep.subr.bf16.mxu0 0
        %441 = vmatpush1.bf16.msra.mxu0 %v421
        %442 = vmatprep.subr.bf16.mxu0 0
        %443 = vmatpush1.bf16.msra.mxu0 %v422
        %444 = vmatprep.subr.bf16.mxu0 0
        %445 = vmatpush1.bf16.msra.mxu0 %v423
        %446 = vmatprep.subr.bf16.mxu0 0
        %447 = vmatpush1.bf16.msra.mxu0 %v424
        %448 = vmatprep.subr.bf16.mxu0 0
        %449 = vmatpush1.bf16.msra.mxu0 %v425
        %450 = vmatprep.subr.bf16.mxu0 0
        %451 = vmatpush1.bf16.msra.mxu0 0
        %452 = vmatprep.subr.bf16.mxu0 0
        %453 = vmatpush1.bf16.msra.mxu0 0
        %454 = vmatprep.subr.bf16.mxu0 0
        %455 = vmatpush1.bf16.msra.mxu0 0
        %456 = vmatprep.subr.bf16.mxu0 0
        %457 = vmatpush1.bf16.msra.mxu0 0
        %458 = vmatprep.subr.bf16.mxu0 0
        %459 = vmatpush1.bf16.msra.mxu0 0
        %460 = vmatprep.subr.bf16.mxu0 0
        %461 = vmatpush1.bf16.msra.mxu0 0
        %462 = vmatprep.subr.bf16.mxu0 0
        %463 = vmatpush1.bf16.msra.mxu0 0
        %464 = vmatprep.subr.bf16.mxu0 0
        %465 = vmatpush1.bf16.msra.mxu0 0
        %466 = vmatprep.mubr.bf16.mxu0 0
        %467 = vmatmul.mubr.bf16.gmra.mrb[0].mxu0 %v369
        %v468 = vpop.f32.mrb[0].mxu0
        %v469 = vadd.f32 0.0, %v468
        %v470 = vpop.f32.mrb[0].mxu0
        %v471 = vpop.f32.mrb[0].mxu0
        %v472 = vpop.f32.mrb[0].mxu0
        %473 = vdwg.mxu0
        %v474 = vld [vmem:[%s3] sm:$0x1]
        %v476 = vlaneseq
        %v477 = vshrl.u32 %v476, 7
        %v478 = vsub.s32 0, %v477
        %v479 = vrot.slane %v474, %v478
        %v481 = vadd.f32 %v469, %v479
        %v482 = vmax.f32 %v481, 0.0
        %v483 = vpack.c.bf16 %v482, %v482
        %v485 = vsel %vm325, %v483, 0
        %487 = vmatprep.subr.bf16.mxu0 0
        %488 = vmatpush1.bf16.msra.mxu0 %v485
        %489 = vmatprep.subr.bf16.mxu0 0
        %490 = vmatpush1.bf16.msra.mxu0 0
        %491 = vmatprep.subr.bf16.mxu0 0
        %492 = vmatpush1.bf16.msra.mxu0 0
        %493 = vmatprep.subr.bf16.mxu0 0
        %494 = vmatpush1.bf16.msra.mxu0 0
        %495 = vmatprep.subr.bf16.mxu0 0
        %496 = vmatpush1.bf16.msra.mxu0 0
        %497 = vmatprep.subr.bf16.mxu0 0
        %498 = vmatpush1.bf16.msra.mxu0 0
        %499 = vmatprep.subr.bf16.mxu0 0
        %500 = vmatpush1.bf16.msra.mxu0 0
        %501 = vmatprep.subr.bf16.mxu0 0
        %502 = vmatpush1.bf16.msra.mxu0 0
        %503 = vmatprep.subr.bf16.mxu0 0
        %504 = vmatpush1.bf16.msra.mxu0 0
        %505 = vmatprep.subr.bf16.mxu0 0
        %506 = vmatpush1.bf16.msra.mxu0 0
        %507 = vmatprep.subr.bf16.mxu0 0
        %508 = vmatpush1.bf16.msra.mxu0 0
        %509 = vmatprep.subr.bf16.mxu0 0
        %510 = vmatpush1.bf16.msra.mxu0 0
        %511 = vmatprep.subr.bf16.mxu0 0
        %512 = vmatpush1.bf16.msra.mxu0 0
        %513 = vmatprep.subr.bf16.mxu0 0
        %514 = vmatpush1.bf16.msra.mxu0 0
        %515 = vmatprep.subr.bf16.mxu0 0
        %516 = vmatpush1.bf16.msra.mxu0 0
        %517 = vmatprep.subr.bf16.mxu0 0
        %518 = vmatpush1.bf16.msra.mxu0 0
        %519 = vmatprep.mubr.bf16.mxu0 0
        %520 = vmatmul.mubr.bf16.gmra.mrb[0].mxu0 %v323
        %v521 = vpop.f32.mrb[0].mxu0
        %v522 = vadd.f32 0.0, %v521
        %v523 = vpop.f32.mrb[0].mxu0
        %v524 = vpop.f32.mrb[0].mxu0
        %v525 = vpop.f32.mrb[0].mxu0
        %526 = vdwg.mxu0
        %v527 = vpack.c.bf16 %v522, %v522
        %s528 = scalar_lea.vmem %s2, 64
        %v529 = vld [vmem:[%s528] sm:$0xf]
        %v530 = vld [vmem:[%s528 + $0x4] sm:$0xf]
        %v531 = vld [vmem:[%s528 + $0x8] sm:$0xf]
        %v532 = vld [vmem:[%s528 + $0xc] sm:$0xf]
        %v533 = vld [vmem:[%s528 + $0x10] sm:$0xf]
        %v534 = vld [vmem:[%s528 + $0x14] sm:$0xf]
        %v535 = vld [vmem:[%s528 + $0x18] sm:$0xf]
        %v536 = vld [vmem:[%s528 + $0x1c] sm:$0xf]
        %v537 = vld [vmem:[%s528 + $0x20] sm:$0xf]
        %v538 = vld [vmem:[%s528 + $0x24] sm:$0xf]
        %v539 = vld [vmem:[%s528 + $0x28] sm:$0xf]
        %v540 = vld [vmem:[%s528 + $0x2c] sm:$0xf]
        %v541 = vld [vmem:[%s528 + $0x30] sm:$0xf]
        %v542 = vld [vmem:[%s528 + $0x34] sm:$0xf]
        %v543 = vld [vmem:[%s528 + $0x38] sm:$0xf]
        %v544 = vld [vmem:[%s528 + $0x3c] sm:$0xf]
        %v561 = vunpack.c.l.b16 %v529
        %v562 = vunpack.c.l.b16 %v530
        %v563 = vunpack.c.l.b16 %v531
        %v564 = vunpack.c.l.b16 %v532
        %v565 = vunpack.c.l.b16 %v533
        %v566 = vunpack.c.l.b16 %v534
        %v567 = vunpack.c.l.b16 %v535
        %v568 = vunpack.c.l.b16 %v536
        %v569 = vunpack.c.l.b16 %v537
        %v570 = vunpack.c.l.b16 %v538
        %v571 = vunpack.c.l.b16 %v539
        %v572 = vunpack.c.l.b16 %v540
        %v573 = vunpack.c.l.b16 %v541
        %v574 = vunpack.c.l.b16 %v542
        %v575 = vunpack.c.l.b16 %v543
        %v576 = vunpack.c.l.b16 %v544
        %v577 = vpack.c.b16 %v562, %v561
        %v578 = vpack.c.b16 %v564, %v563
        %v579 = vpack.c.b16 %v566, %v565
        %v580 = vpack.c.b16 %v568, %v567
        %v581 = vpack.c.b16 %v570, %v569
        %v582 = vpack.c.b16 %v572, %v571
        %v583 = vpack.c.b16 %v574, %v573
        %v584 = vpack.c.b16 %v576, %v575
        %593 = vmatprep.subr.bf16.mxu0 0
        %594 = vmatpush1.bf16.msra.mxu0 %v577
        %595 = vmatprep.subr.bf16.mxu0 0
        %596 = vmatpush1.bf16.msra.mxu0 %v578
        %597 = vmatprep.subr.bf16.mxu0 0
        %598 = vmatpush1.bf16.msra.mxu0 %v579
        %599 = vmatprep.subr.bf16.mxu0 0
        %600 = vmatpush1.bf16.msra.mxu0 %v580
        %601 = vmatprep.subr.bf16.mxu0 0
        %602 = vmatpush1.bf16.msra.mxu0 %v581
        %603 = vmatprep.subr.bf16.mxu0 0
        %604 = vmatpush1.bf16.msra.mxu0 %v582
        %605 = vmatprep.subr.bf16.mxu0 0
        %606 = vmatpush1.bf16.msra.mxu0 %v583
        %607 = vmatprep.subr.bf16.mxu0 0
        %608 = vmatpush1.bf16.msra.mxu0 %v584
        %609 = vmatprep.subr.bf16.mxu0 0
        %610 = vmatpush1.bf16.msra.mxu0 0
        %611 = vmatprep.subr.bf16.mxu0 0
        %612 = vmatpush1.bf16.msra.mxu0 0
        %613 = vmatprep.subr.bf16.mxu0 0
        %614 = vmatpush1.bf16.msra.mxu0 0
        %615 = vmatprep.subr.bf16.mxu0 0
        %616 = vmatpush1.bf16.msra.mxu0 0
        %617 = vmatprep.subr.bf16.mxu0 0
        %618 = vmatpush1.bf16.msra.mxu0 0
        %619 = vmatprep.subr.bf16.mxu0 0
        %620 = vmatpush1.bf16.msra.mxu0 0
        %621 = vmatprep.subr.bf16.mxu0 0
        %622 = vmatpush1.bf16.msra.mxu0 0
        %623 = vmatprep.subr.bf16.mxu0 0
        %624 = vmatpush1.bf16.msra.mxu0 0
        %625 = vmatprep.mubr.bf16.mxu0 0
        %626 = vmatmul.mubr.bf16.gmra.mrb[0].mxu0 %v527
        %v627 = vpop.f32.mrb[0].mxu0
        %v628 = vadd.f32 0.0, %v627
        %v629 = vpop.f32.mrb[0].mxu0
        %v630 = vpop.f32.mrb[0].mxu0
        %v631 = vpop.f32.mrb[0].mxu0
        %632 = vdwg.mxu0
        %s633 = scalar_lea.vmem %s3, 1
        %v634 = vld [vmem:[%s633] sm:$0x1]
        %v636 = vlaneseq
        %v637 = vshrl.u32 %v636, 7
        %v638 = vsub.s32 0, %v637
        %v639 = vrot.slane %v634, %v638
        %v641 = vadd.f32 %v628, %v639
        %v642 = vmax.f32 %v641, 0.0
        %v643 = vrot.slane %v642, 4
        %v644 = vadd.f32 %v642, %v643
        %v645 = vrot.slane %v644, 2
        %v646 = vadd.f32 %v644, %v645
        %v647 = vrot.slane %v646, 1
        %v648 = vadd.f32 %v646, %v647
        %v649 = vrcp.pop 8.0
        %v650 = vmul.f32 %v648, %v649
        %v651 = vpack.c.bf16 %v650, %v650
        %v652 = vld [vmem:[%s4] sm:$0xf]
        %v653 = vld [vmem:[%s4 + $0x4] sm:$0xf]
        %v654 = vld [vmem:[%s4 + $0x8] sm:$0xf]
        %v655 = vld [vmem:[%s4 + $0xc] sm:$0xf]
        %v656 = vld [vmem:[%s4 + $0x10] sm:$0xf]
        %v657 = vld [vmem:[%s4 + $0x14] sm:$0xf]
        %v658 = vld [vmem:[%s4 + $0x18] sm:$0xf]
        %v659 = vld [vmem:[%s4 + $0x1c] sm:$0xf]
        %v660 = vld [vmem:[%s4 + $0x20] sm:$0xf]
        %v661 = vld [vmem:[%s4 + $0x24] sm:$0xf]
        %v662 = vld [vmem:[%s4 + $0x28] sm:$0xf]
        %v663 = vld [vmem:[%s4 + $0x2c] sm:$0xf]
        %v664 = vld [vmem:[%s4 + $0x30] sm:$0xf]
        %v665 = vld [vmem:[%s4 + $0x34] sm:$0xf]
        %v666 = vld [vmem:[%s4 + $0x38] sm:$0xf]
        %v667 = vld [vmem:[%s4 + $0x3c] sm:$0xf]
        %v668 = vld [vmem:[%s5] sm:$0x1]
        %v685 = vunpack.c.l.b16 %v652
        %v686 = vunpack.c.l.b16 %v653
        %v687 = vunpack.c.l.b16 %v654
        %v688 = vunpack.c.l.b16 %v655
        %v689 = vunpack.c.l.b16 %v656
        %v690 = vunpack.c.l.b16 %v657
        %v691 = vunpack.c.l.b16 %v658
        %v692 = vunpack.c.l.b16 %v659
        %v693 = vunpack.c.l.b16 %v660
        %v694 = vunpack.c.l.b16 %v661
        %v695 = vunpack.c.l.b16 %v662
        %v696 = vunpack.c.l.b16 %v663
        %v697 = vunpack.c.l.b16 %v664
        %v698 = vunpack.c.l.b16 %v665
        %v699 = vunpack.c.l.b16 %v666
        %v700 = vunpack.c.l.b16 %v667
        %v701 = vpack.c.b16 %v686, %v685
        %v702 = vpack.c.b16 %v688, %v687
        %v703 = vpack.c.b16 %v690, %v689
        %v704 = vpack.c.b16 %v692, %v691
        %v705 = vpack.c.b16 %v694, %v693
        %v706 = vpack.c.b16 %v696, %v695
        %v707 = vpack.c.b16 %v698, %v697
        %v708 = vpack.c.b16 %v700, %v699
        %717 = vmatprep.subr.bf16.mxu0 0
        %718 = vmatpush1.bf16.msra.mxu0 %v701
        %719 = vmatprep.subr.bf16.mxu0 0
        %720 = vmatpush1.bf16.msra.mxu0 %v702
        %721 = vmatprep.subr.bf16.mxu0 0
        %722 = vmatpush1.bf16.msra.mxu0 %v703
        %723 = vmatprep.subr.bf16.mxu0 0
        %724 = vmatpush1.bf16.msra.mxu0 %v704
        %725 = vmatprep.subr.bf16.mxu0 0
        %726 = vmatpush1.bf16.msra.mxu0 %v705
        %727 = vmatprep.subr.bf16.mxu0 0
        %728 = vmatpush1.bf16.msra.mxu0 %v706
        %729 = vmatprep.subr.bf16.mxu0 0
        %730 = vmatpush1.bf16.msra.mxu0 %v707
        %731 = vmatprep.subr.bf16.mxu0 0
        %732 = vmatpush1.bf16.msra.mxu0 %v708
        %733 = vmatprep.subr.bf16.mxu0 0
        %734 = vmatpush1.bf16.msra.mxu0 0
        %735 = vmatprep.subr.bf16.mxu0 0
        %736 = vmatpush1.bf16.msra.mxu0 0
        %737 = vmatprep.subr.bf16.mxu0 0
        %738 = vmatpush1.bf16.msra.mxu0 0
        %739 = vmatprep.subr.bf16.mxu0 0
        %740 = vmatpush1.bf16.msra.mxu0 0
        %741 = vmatprep.subr.bf16.mxu0 0
        %742 = vmatpush1.bf16.msra.mxu0 0
        %743 = vmatprep.subr.bf16.mxu0 0
        %744 = vmatpush1.bf16.msra.mxu0 0
        %745 = vmatprep.subr.bf16.mxu0 0
        %746 = vmatpush1.bf16.msra.mxu0 0
        %747 = vmatprep.subr.bf16.mxu0 0
        %748 = vmatpush1.bf16.msra.mxu0 0
        %749 = vmatprep.mubr.bf16.mxu0 0
        %750 = vmatmul.mubr.bf16.gmra.mrb[0].mxu0 %v651
        %v751 = vpop.f32.mrb[0].mxu0
        %v752 = vadd.f32 %v668, %v751
        %v753 = vpop.f32.mrb[0].mxu0
        %v754 = vpop.f32.mrb[0].mxu0
        %v755 = vpop.f32.mrb[0].mxu0
        %756 = vdwg.mxu0
        %v757 = vmax.f32 %v752, 0.0
        %v758 = vpack.c.bf16 %v757, %v757
        %v759 = vld [vmem:[%s6] sm:$0xf]
        %v760 = vld [vmem:[%s6 + $0x4] sm:$0xf]
        %v761 = vld [vmem:[%s6 + $0x8] sm:$0xf]
        %v762 = vld [vmem:[%s6 + $0xc] sm:$0xf]
        %v763 = vld [vmem:[%s6 + $0x10] sm:$0xf]
        %v764 = vld [vmem:[%s6 + $0x14] sm:$0xf]
        %v765 = vld [vmem:[%s6 + $0x18] sm:$0xf]
        %v766 = vld [vmem:[%s6 + $0x1c] sm:$0xf]
        %v767 = vld [vmem:[%s6 + $0x20] sm:$0xf]
        %v768 = vld [vmem:[%s6 + $0x24] sm:$0xf]
        %v769 = vld [vmem:[%s6 + $0x28] sm:$0xf]
        %v770 = vld [vmem:[%s6 + $0x2c] sm:$0xf]
        %v771 = vld [vmem:[%s6 + $0x30] sm:$0xf]
        %v772 = vld [vmem:[%s6 + $0x34] sm:$0xf]
        %v773 = vld [vmem:[%s6 + $0x38] sm:$0xf]
        %v774 = vld [vmem:[%s6 + $0x3c] sm:$0xf]
        %v775 = vld [vmem:[%s7] sm:$0x1]
        %v792 = vunpack.c.l.b16 %v759
        %v793 = vunpack.c.l.b16 %v760
        %v794 = vunpack.c.l.b16 %v761
        %v795 = vunpack.c.l.b16 %v762
        %v796 = vunpack.c.l.b16 %v763
        %v797 = vunpack.c.l.b16 %v764
        %v798 = vunpack.c.l.b16 %v765
        %v799 = vunpack.c.l.b16 %v766
        %v800 = vunpack.c.l.b16 %v767
        %v801 = vunpack.c.l.b16 %v768
        %v802 = vunpack.c.l.b16 %v769
        %v803 = vunpack.c.l.b16 %v770
        %v804 = vunpack.c.l.b16 %v771
        %v805 = vunpack.c.l.b16 %v772
        %v806 = vunpack.c.l.b16 %v773
        %v807 = vunpack.c.l.b16 %v774
        %v808 = vpack.c.b16 %v793, %v792
        %v809 = vpack.c.b16 %v795, %v794
        %v810 = vpack.c.b16 %v797, %v796
        %v811 = vpack.c.b16 %v799, %v798
        %v812 = vpack.c.b16 %v801, %v800
        %v813 = vpack.c.b16 %v803, %v802
        %v814 = vpack.c.b16 %v805, %v804
        %v815 = vpack.c.b16 %v807, %v806
        %824 = vmatprep.subr.bf16.mxu0 0
        %825 = vmatpush1.bf16.msra.mxu0 %v808
        %826 = vmatprep.subr.bf16.mxu0 0
        %827 = vmatpush1.bf16.msra.mxu0 %v809
        %828 = vmatprep.subr.bf16.mxu0 0
        %829 = vmatpush1.bf16.msra.mxu0 %v810
        %830 = vmatprep.subr.bf16.mxu0 0
        %831 = vmatpush1.bf16.msra.mxu0 %v811
        %832 = vmatprep.subr.bf16.mxu0 0
        %833 = vmatpush1.bf16.msra.mxu0 %v812
        %834 = vmatprep.subr.bf16.mxu0 0
        %835 = vmatpush1.bf16.msra.mxu0 %v813
        %836 = vmatprep.subr.bf16.mxu0 0
        %837 = vmatpush1.bf16.msra.mxu0 %v814
        %838 = vmatprep.subr.bf16.mxu0 0
        %839 = vmatpush1.bf16.msra.mxu0 %v815
        %840 = vmatprep.subr.bf16.mxu0 0
        %841 = vmatpush1.bf16.msra.mxu0 0
        %842 = vmatprep.subr.bf16.mxu0 0
        %843 = vmatpush1.bf16.msra.mxu0 0
        %844 = vmatprep.subr.bf16.mxu0 0
        %845 = vmatpush1.bf16.msra.mxu0 0
        %846 = vmatprep.subr.bf16.mxu0 0
        %847 = vmatpush1.bf16.msra.mxu0 0
        %848 = vmatprep.subr.bf16.mxu0 0
        %849 = vmatpush1.bf16.msra.mxu0 0
        %850 = vmatprep.subr.bf16.mxu0 0
        %851 = vmatpush1.bf16.msra.mxu0 0
        %852 = vmatprep.subr.bf16.mxu0 0
        %853 = vmatpush1.bf16.msra.mxu0 0
        %854 = vmatprep.subr.bf16.mxu0 0
        %855 = vmatpush1.bf16.msra.mxu0 0
        %856 = vmatprep.mubr.bf16.mxu0 0
        %857 = vmatmul.mubr.bf16.gmra.mrb[0].mxu0 %v758
        %v858 = vpop.f32.mrb[0].mxu0
        %v859 = vadd.f32 %v775, %v858
        %v860 = vpop.f32.mrb[0].mxu0
        %v861 = vpop.f32.mrb[0].mxu0
        %v862 = vpop.f32.mrb[0].mxu0
        %863 = vdwg.mxu0
        %vm864 = vcmask 1040384
        %v865 = vsel %vm864, %v859, -inf
        %866 = vmax.xlane.f32.xlu0 %v865
        %v867 = vpop.xlane.xlu0 %866
        %v868 = vsub.f32 %v859, %v867
        %v869 = vmul.f32 %v868, 1.442695
        %v870 = vpow.pop %v869
        %v871 = vsel %vm864, %v870, 0.0
        %872 = vadd.xlane.f32.xlu0 %v871
        %v873 = vpop.xlane.xlu0 %872
        %v874 = vrcp.pop %v873
        %v875 = vmul.f32 %v870, %v874
        %876 = vst [vmem:[%s308] sm:$0x1] %v875
        %s877 = sand.u32 %s208, 1
        %s878 = scalar_lea.sflag [#allocation3], %s877
        %s879 = sand.u32 %s208, 1
        %s880 = scalar_lea.vmem [#allocation2], %s879
        // Predicated region
        $region53: #{expanded_spatial_graph_embedding_net.3} parent=51 // pred_check
          %p881 = pneg %p218
        $region54: #{expanded_spatial_graph_embedding_net.3} parent=51 // pred_check_branch
          %883 = sbr.rel (%p881) target = $region56
        $region55: #{expanded_spatial_graph_embedding_net.3} parent=51 // pred_region
          %s885 = ssub.s32 16, 16
          %886 = vsyncadd %s878, %s885
          %s887 = smul.addr %s22, 16
          %s888 = scalar_lea.hbm %s8, %s887
          %s890 = sshll.u32 %s880, 4
          %s891 = int_to_ptr.vmem [resolvable:$true] %s890
          %893 = dma.vmem_to_hbm [thread:$0]  %s891, 16, %s888, %s878
        $region56: #{expanded_spatial_graph_embedding_net.3} parent=51 // pred_fallthru
          _
      $region52: #{expanded_spatial_graph_embedding_net.3} parent=5 // pred_fallthru
        _
      %p894 = scmp.le.s32.totalorder 2, %s17
      // Predicated region
      $region57: #{expanded_spatial_graph_embedding_net.3} parent=5 // pred_check
        %p895 = pneg %p894
      $region58: #{expanded_spatial_graph_embedding_net.3} parent=5 // pred_check_branch
        %897 = sbr.rel (%p895) target = $region60
      $region59: #{expanded_spatial_graph_embedding_net.3} parent=5 // pred_region
        %s898 = ssub.s32 %s17, 2
        // Predicated region
        $region61: #{expanded_spatial_graph_embedding_net.3} parent=59 // pred_check
          %p899 = pneg %p224
        $region62: #{expanded_spatial_graph_embedding_net.3} parent=59 // pred_check_branch
          %901 = sbr.rel (%p899) target = $region64
        $region63: #{expanded_spatial_graph_embedding_net.3} parent=59 // pred_region
          %s902 = sand.u32 %s209, 1
          %s903 = scalar_lea.sflag [#allocation3], %s902
          %s904 = sand.u32 %s209, 1
          %s905 = scalar_lea.vmem [#allocation2], %s904
          %906 = dma.done %s903, 16
        $region64: #{expanded_spatial_graph_embedding_net.3} parent=59 // pred_fallthru
          _
      $region60: #{expanded_spatial_graph_embedding_net.3} parent=5 // pred_fallthru
        _
    $region6: #{expanded_spatial_graph_embedding_net.3} parent=1 // loop_footer
      %s21 = sadd.s32 1, %s17
    $region7: #{expanded_spatial_graph_embedding_net.3} parent=1 // loop_footer_branch
      %16 = sbr.rel target = $region3
    $region8: #{expanded_spatial_graph_embedding_net.3} parent=1 // loop_exit
      _
    %907 = vsyncpa [#allocation3], 1
    %s908 = scalar_lea.sflag [#allocation3], 1
    %909 = vsyncpa %s908, 1

// kernel: expanded_spatial_graph_embedding_net.2
$region0: #{expanded_spatial_graph_embedding_net.2}
  #allocation0 [shape = 'u32[]', space=smem, size = 0x4, offset = 0x4, fixed_abs, tag = 'smem constant byte address 0x4 - core index']
  #allocation1 [shape = 'u32[144,128]{1,0:T(1,128)}', space=vmem, size = 0x12000, scoped, tag = 'internal scratch']
  #allocation2 [shape = 'f32[8,128]{1,0:T(8,128)}', space=vmem, size = 0x1000, scoped, tag = 'scratch operand']
  #allocation3 [shape = 'f32[128,384]{1,0:T(8,128)}', space=vmem, size = 0x30000, scoped, tag = 'scratch operand']
  %s0 = inlined_call_operand.vmem [shape: bf16[128,8], index: 0, kind: input, shape index: {}]
  %s1 = inlined_call_operand.vmem [shape: bf16[8,384], index: 1, kind: input, shape index: {}]
  %s2 = inlined_call_operand.vmem [shape: bf16[128,384], index: 2, kind: input, shape index: {}]
  %s3 = inlined_call_operand.vmem [shape: f32[1,384], index: 3, kind: input, shape index: {}]
  %s4 = inlined_call_operand.vmem [shape: f32[1,128], index: 4, kind: input, shape index: {}]
  %s5 = inlined_call_operand.vmem [shape: f32[16,128], index: 5, kind: output, shape index: {}]
  %s6 = sld [smem:[#allocation0]]
  $region41: #{expanded_spatial_graph_embedding_net.2} parent=0
    _
  %s8 = ssub.s32 1, %s6
  %s9 = scalar_select 0, %s8, %s6
  // Predicated region
  $region2: #{expanded_spatial_graph_embedding_net.2} parent=0 // pred_check
    _
  $region3: #{expanded_spatial_graph_embedding_net.2} parent=0 // pred_check_branch
    %11 = sbr.rel (0) target = $region5
  $region4: #{expanded_spatial_graph_embedding_net.2} parent=0 // pred_region
    _
  $region5: #{expanded_spatial_graph_embedding_net.2} parent=0 // pred_fallthru
    _
  // Predicated region
  $region6: #{expanded_spatial_graph_embedding_net.2} parent=0 // pred_check
    _
  $region7: #{expanded_spatial_graph_embedding_net.2} parent=0 // pred_check_branch
    %13 = sbr.rel (0) target = $region9
  $region8: #{expanded_spatial_graph_embedding_net.2} parent=0 // pred_region
    _
  $region9: #{expanded_spatial_graph_embedding_net.2} parent=0 // pred_fallthru
    _
  // Predicated region
  $region10: #{expanded_spatial_graph_embedding_net.2} parent=0 // pred_check
    _
  $region11: #{expanded_spatial_graph_embedding_net.2} parent=0 // pred_check_branch
    %15 = sbr.rel (0) target = $region13
  $region12: #{expanded_spatial_graph_embedding_net.2} parent=0 // pred_region
    _
  $region13: #{expanded_spatial_graph_embedding_net.2} parent=0 // pred_fallthru
    _
  // Predicated region
  $region14: #{expanded_spatial_graph_embedding_net.2} parent=0 // pred_check
    _
  $region15: #{expanded_spatial_graph_embedding_net.2} parent=0 // pred_check_branch
    %17 = sbr.rel (0) target = $region17
  $region16: #{expanded_spatial_graph_embedding_net.2} parent=0 // pred_region
    _
  $region17: #{expanded_spatial_graph_embedding_net.2} parent=0 // pred_fallthru
    _
  // Predicated region
  $region18: #{expanded_spatial_graph_embedding_net.2} parent=0 // pred_check
    _
  $region19: #{expanded_spatial_graph_embedding_net.2} parent=0 // pred_check_branch
    %19 = sbr.rel (0) target = $region21
  $region20: #{expanded_spatial_graph_embedding_net.2} parent=0 // pred_region
    _
  $region21: #{expanded_spatial_graph_embedding_net.2} parent=0 // pred_fallthru
    _
  %p21 = scmp.eq.s32.totalorder 0, 0
  // Predicated region
  $region22: #{expanded_spatial_graph_embedding_net.2} parent=0 // pred_check
    %p22 = pneg %p21
  $region23: #{expanded_spatial_graph_embedding_net.2} parent=0 // pred_check_branch
    %24 = sbr.rel (%p22) target = $region25
  $region24: #{expanded_spatial_graph_embedding_net.2} parent=0 // pred_region
    %25 = vst [vmem:[#allocation2] sm:$0xff] 0.0
  $region25: #{expanded_spatial_graph_embedding_net.2} parent=0 // pred_fallthru
    _
  %v26 = vld [vmem:[%s0] sm:$0xf]
  %v27 = vld [vmem:[%s0 + $0x4] sm:$0xf]
  %v28 = vld [vmem:[%s0 + $0x8] sm:$0xf]
  %v29 = vld [vmem:[%s0 + $0xc] sm:$0xf]
  %v30 = vld [vmem:[%s0 + $0x10] sm:$0xf]
  %v31 = vld [vmem:[%s0 + $0x14] sm:$0xf]
  %v32 = vld [vmem:[%s0 + $0x18] sm:$0xf]
  %v33 = vld [vmem:[%s0 + $0x1c] sm:$0xf]
  %v34 = vld [vmem:[%s0 + $0x20] sm:$0xf]
  %v35 = vld [vmem:[%s0 + $0x24] sm:$0xf]
  %v36 = vld [vmem:[%s0 + $0x28] sm:$0xf]
  %v37 = vld [vmem:[%s0 + $0x2c] sm:$0xf]
  %v38 = vld [vmem:[%s0 + $0x30] sm:$0xf]
  %v39 = vld [vmem:[%s0 + $0x34] sm:$0xf]
  %v40 = vld [vmem:[%s0 + $0x38] sm:$0xf]
  %v41 = vld [vmem:[%s0 + $0x3c] sm:$0xf]
  %v42 = vld [vmem:[%s1] sm:$0xff]
  %v43 = vld [vmem:[%s1 + $0x8] sm:$0xf]
  %v44 = vld [vmem:[%s3] sm:$0x7]
  %v46 = vlaneseq
  %v47 = vshrl.u32 %v46, 7
  %v48 = vsub.s32 0, %v47
  %v49 = vrot.slane %v44, %v48
  %v50 = vlaneseq
  %v51 = vshrl.u32 %v50, 7
  %v52 = vsub.s32 1, %v51
  %v53 = vrot.slane %v44, %v52
  %v54 = vlaneseq
  %v55 = vshrl.u32 %v54, 7
  %v56 = vsub.s32 2, %v55
  %v57 = vrot.slane %v44, %v56
  %v77 = vunpack.c.l.b16 %v26
  %v78 = vunpack.c.l.b16 %v27
  %v79 = vunpack.c.l.b16 %v28
  %v80 = vunpack.c.l.b16 %v29
  %v81 = vunpack.c.l.b16 %v30
  %v82 = vunpack.c.l.b16 %v31
  %v83 = vunpack.c.l.b16 %v32
  %v84 = vunpack.c.l.b16 %v33
  %v85 = vunpack.c.l.b16 %v34
  %v86 = vunpack.c.l.b16 %v35
  %v87 = vunpack.c.l.b16 %v36
  %v88 = vunpack.c.l.b16 %v37
  %v89 = vunpack.c.l.b16 %v38
  %v90 = vunpack.c.l.b16 %v39
  %v91 = vunpack.c.l.b16 %v40
  %v92 = vunpack.c.l.b16 %v41
  %v93 = vpack.c.b16 %v78, %v77
  %v94 = vpack.c.b16 %v80, %v79
  %v95 = vpack.c.b16 %v82, %v81
  %v96 = vpack.c.b16 %v84, %v83
  %v97 = vpack.c.b16 %v86, %v85
  %v98 = vpack.c.b16 %v88, %v87
  %v99 = vpack.c.b16 %v90, %v89
  %v100 = vpack.c.b16 %v92, %v91
  %v103 = vunpack.c.l.b16 %v42
  %v104 = vunpack.c.h.b16 %v42
  %v105 = vunpack.c.l.b16 %v43
  %v106 = vpack.c.b16 %v103, %v103
  %v107 = vpack.c.b16 %v104, %v104
  %v108 = vpack.c.b16 %v105, %v105
  %vm109 = vcmask 64512
  %v111 = vsel %vm109, %v93, 0
  %v114 = vsel %vm109, %v94, 0
  %v117 = vsel %vm109, %v95, 0
  %v120 = vsel %vm109, %v96, 0
  %v123 = vsel %vm109, %v97, 0
  %v126 = vsel %vm109, %v98, 0
  %v129 = vsel %vm109, %v99, 0
  %v132 = vsel %vm109, %v100, 0
  %vm134 = vcmask 1043456
  %v136 = vsel %vm134, %v106, 0
  %v139 = vsel %vm134, %v107, 0
  %v142 = vsel %vm134, %v108, 0
  %144 = vmatprep.subr.bf16.mxu0 %v139
  %145 = vmatpush1.bf16.msra.mxu0 %v136
  %146 = vmatprep.subr.bf16.mxu0 0
  %147 = vmatpush1.bf16.msra.mxu0 0
  %148 = vmatprep.subr.bf16.mxu0 0
  %149 = vmatpush1.bf16.msra.mxu0 0
  %150 = vmatprep.subr.bf16.mxu0 0
  %151 = vmatpush1.bf16.msra.mxu0 0
  %152 = vmatprep.subr.bf16.mxu0 0
  %153 = vmatpush1.bf16.msra.mxu0 0
  %154 = vmatprep.subr.bf16.mxu0 0
  %155 = vmatpush1.bf16.msra.mxu0 0
  %156 = vmatprep.subr.bf16.mxu0 0
  %157 = vmatpush1.bf16.msra.mxu0 0
  %158 = vmatprep.subr.bf16.mxu0 0
  %159 = vmatpush1.bf16.msra.mxu0 0
  %160 = vmatprep.subr.bf16.mxu0 0
  %161 = vmatpush1.bf16.msra.mxu0 0
  %162 = vmatprep.subr.bf16.mxu0 0
  %163 = vmatpush1.bf16.msra.mxu0 0
  %164 = vmatprep.subr.bf16.mxu0 0
  %165 = vmatpush1.bf16.msra.mxu0 0
  %166 = vmatprep.subr.bf16.mxu0 0
  %167 = vmatpush1.bf16.msra.mxu0 0
  %168 = vmatprep.subr.bf16.mxu0 0
  %169 = vmatpush1.bf16.msra.mxu0 0
  %170 = vmatprep.subr.bf16.mxu0 0
  %171 = vmatpush1.bf16.msra.mxu0 0
  %172 = vmatprep.subr.bf16.mxu0 0
  %173 = vmatpush1.bf16.msra.mxu0 0
  %174 = vmatprep.subr.bf16.mxu0 0
  %175 = vmatpush1.bf16.msra.mxu0 0
  %176 = vmatprep.mubr.bf16.mxu0 0
  %177 = vmatmul.mubr.bf16.gmra.mrb[0].mxu0 %v111
  %v178 = vpop.f32.mrb[0].mxu0
  %v179 = vadd.f32 %v49, %v178
  %v180 = vpop.f32.mrb[0].mxu0
  %v181 = vadd.f32 %v53, %v180
  %v182 = vpop.f32.mrb[0].mxu0
  %v183 = vadd.f32 %v49, %v182
  %v184 = vpop.f32.mrb[0].mxu0
  %v185 = vadd.f32 %v53, %v184
  %186 = vmatprep.mubr.bf16.mxu0 0
  %187 = vmatmul.mubr.bf16.gmra.mrb[0].mxu0 %v114
  %v188 = vpop.f32.mrb[0].mxu0
  %v189 = vadd.f32 %v49, %v188
  %v190 = vpop.f32.mrb[0].mxu0
  %v191 = vadd.f32 %v53, %v190
  %v192 = vpop.f32.mrb[0].mxu0
  %v193 = vadd.f32 %v49, %v192
  %v194 = vpop.f32.mrb[0].mxu0
  %v195 = vadd.f32 %v53, %v194
  %196 = vmatprep.mubr.bf16.mxu0 0
  %197 = vmatmul.mubr.bf16.gmra.mrb[0].mxu0 %v117
  %v198 = vpop.f32.mrb[0].mxu0
  %v199 = vadd.f32 %v49, %v198
  %v200 = vpop.f32.mrb[0].mxu0
  %v201 = vadd.f32 %v53, %v200
  %v202 = vpop.f32.mrb[0].mxu0
  %v203 = vadd.f32 %v49, %v202
  %v204 = vpop.f32.mrb[0].mxu0
  %v205 = vadd.f32 %v53, %v204
  %206 = vmatprep.mubr.bf16.mxu0 0
  %207 = vmatmul.mubr.bf16.gmra.mrb[0].mxu0 %v120
  %v208 = vpop.f32.mrb[0].mxu0
  %v209 = vadd.f32 %v49, %v208
  %v210 = vpop.f32.mrb[0].mxu0
  %v211 = vadd.f32 %v53, %v210
  %v212 = vpop.f32.mrb[0].mxu0
  %v213 = vadd.f32 %v49, %v212
  %v214 = vpop.f32.mrb[0].mxu0
  %v215 = vadd.f32 %v53, %v214
  %216 = vmatprep.mubr.bf16.mxu0 0
  %217 = vmatmul.mubr.bf16.gmra.mrb[0].mxu0 %v123
  %v218 = vpop.f32.mrb[0].mxu0
  %v219 = vadd.f32 %v49, %v218
  %v220 = vpop.f32.mrb[0].mxu0
  %v221 = vadd.f32 %v53, %v220
  %v222 = vpop.f32.mrb[0].mxu0
  %v223 = vadd.f32 %v49, %v222
  %v224 = vpop.f32.mrb[0].mxu0
  %v225 = vadd.f32 %v53, %v224
  %226 = vmatprep.mubr.bf16.mxu0 0
  %227 = vmatmul.mubr.bf16.gmra.mrb[0].mxu0 %v126
  %v228 = vpop.f32.mrb[0].mxu0
  %v229 = vadd.f32 %v49, %v228
  %v230 = vpop.f32.mrb[0].mxu0
  %v231 = vadd.f32 %v53, %v230
  %v232 = vpop.f32.mrb[0].mxu0
  %v233 = vadd.f32 %v49, %v232
  %v234 = vpop.f32.mrb[0].mxu0
  %v235 = vadd.f32 %v53, %v234
  %236 = vmatprep.mubr.bf16.mxu0 0
  %237 = vmatmul.mubr.bf16.gmra.mrb[0].mxu0 %v129
  %v238 = vpop.f32.mrb[0].mxu0
  %v239 = vadd.f32 %v49, %v238
  %v240 = vpop.f32.mrb[0].mxu0
  %v241 = vadd.f32 %v53, %v240
  %v242 = vpop.f32.mrb[0].mxu0
  %v243 = vadd.f32 %v49, %v242
  %v244 = vpop.f32.mrb[0].mxu0
  %v245 = vadd.f32 %v53, %v244
  %246 = vmatprep.mubr.bf16.mxu0 0
  %247 = vmatmul.mubr.bf16.gmra.mrb[0].mxu0 %v132
  %v248 = vpop.f32.mrb[0].mxu0
  %v249 = vadd.f32 %v49, %v248
  %v250 = vpop.f32.mrb[0].mxu0
  %v251 = vadd.f32 %v53, %v250
  %v252 = vpop.f32.mrb[0].mxu0
  %v253 = vadd.f32 %v49, %v252
  %v254 = vpop.f32.mrb[0].mxu0
  %v255 = vadd.f32 %v53, %v254
  %256 = vdwg.mxu0
  %257 = vmatprep.subr.bf16.mxu0 0
  %258 = vmatpush1.bf16.msra.mxu0 %v142
  %259 = vmatprep.subr.bf16.mxu0 0
  %260 = vmatpush1.bf16.msra.mxu0 0
  %261 = vmatprep.subr.bf16.mxu0 0
  %262 = vmatpush1.bf16.msra.mxu0 0
  %263 = vmatprep.subr.bf16.mxu0 0
  %264 = vmatpush1.bf16.msra.mxu0 0
  %265 = vmatprep.subr.bf16.mxu0 0
  %266 = vmatpush1.bf16.msra.mxu0 0
  %267 = vmatprep.subr.bf16.mxu0 0
  %268 = vmatpush1.bf16.msra.mxu0 0
  %269 = vmatprep.subr.bf16.mxu0 0
  %270 = vmatpush1.bf16.msra.mxu0 0
  %271 = vmatprep.subr.bf16.mxu0 0
  %272 = vmatpush1.bf16.msra.mxu0 0
  %273 = vmatprep.subr.bf16.mxu0 0
  %274 = vmatpush1.bf16.msra.mxu0 0
  %275 = vmatprep.subr.bf16.mxu0 0
  %276 = vmatpush1.bf16.msra.mxu0 0
  %277 = vmatprep.subr.bf16.mxu0 0
  %278 = vmatpush1.bf16.msra.mxu0 0
  %279 = vmatprep.subr.bf16.mxu0 0
  %280 = vmatpush1.bf16.msra.mxu0 0
  %281 = vmatprep.subr.bf16.mxu0 0
  %282 = vmatpush1.bf16.msra.mxu0 0
  %283 = vmatprep.subr.bf16.mxu0 0
  %284 = vmatpush1.bf16.msra.mxu0 0
  %285 = vmatprep.subr.bf16.mxu0 0
  %286 = vmatpush1.bf16.msra.mxu0 0
  %287 = vmatprep.subr.bf16.mxu0 0
  %288 = vmatpush1.bf16.msra.mxu0 0
  %289 = vmatprep.mubr.bf16.mxu0 0
  %290 = vmatmul.mubr.bf16.gmra.mrb[0].mxu0 %v111
  %v291 = vpop.f32.mrb[0].mxu0
  %v292 = vadd.f32 %v57, %v291
  %v293 = vpop.f32.mrb[0].mxu0
  %v294 = vpop.f32.mrb[0].mxu0
  %v295 = vadd.f32 %v57, %v294
  %v296 = vpop.f32.mrb[0].mxu0
  %297 = vmatprep.mubr.bf16.mxu0 0
  %298 = vmatmul.mubr.bf16.gmra.mrb[0].mxu0 %v114
  %v299 = vpop.f32.mrb[0].mxu0
  %v300 = vadd.f32 %v57, %v299
  %v301 = vpop.f32.mrb[0].mxu0
  %v302 = vpop.f32.mrb[0].mxu0
  %v303 = vadd.f32 %v57, %v302
  %v304 = vpop.f32.mrb[0].mxu0
  %305 = vmatprep.mubr.bf16.mxu0 0
  %306 = vmatmul.mubr.bf16.gmra.mrb[0].mxu0 %v117
  %v307 = vpop.f32.mrb[0].mxu0
  %v308 = vadd.f32 %v57, %v307
  %v309 = vpop.f32.mrb[0].mxu0
  %v310 = vpop.f32.mrb[0].mxu0
  %v311 = vadd.f32 %v57, %v310
  %v312 = vpop.f32.mrb[0].mxu0
  %313 = vmatprep.mubr.bf16.mxu0 0
  %314 = vmatmul.mubr.bf16.gmra.mrb[0].mxu0 %v120
  %v315 = vpop.f32.mrb[0].mxu0
  %v316 = vadd.f32 %v57, %v315
  %v317 = vpop.f32.mrb[0].mxu0
  %v318 = vpop.f32.mrb[0].mxu0
  %v319 = vadd.f32 %v57, %v318
  %v320 = vpop.f32.mrb[0].mxu0
  %321 = vmatprep.mubr.bf16.mxu0 0
  %322 = vmatmul.mubr.bf16.gmra.mrb[0].mxu0 %v123
  %v323 = vpop.f32.mrb[0].mxu0
  %v324 = vadd.f32 %v57, %v323
  %v325 = vpop.f32.mrb[0].mxu0
  %v326 = vpop.f32.mrb[0].mxu0
  %v327 = vadd.f32 %v57, %v326
  %v328 = vpop.f32.mrb[0].mxu0
  %329 = vmatprep.mubr.bf16.mxu0 0
  %330 = vmatmul.mubr.bf16.gmra.mrb[0].mxu0 %v126
  %v331 = vpop.f32.mrb[0].mxu0
  %v332 = vadd.f32 %v57, %v331
  %v333 = vpop.f32.mrb[0].mxu0
  %v334 = vpop.f32.mrb[0].mxu0
  %v335 = vadd.f32 %v57, %v334
  %v336 = vpop.f32.mrb[0].mxu0
  %337 = vmatprep.mubr.bf16.mxu0 0
  %338 = vmatmul.mubr.bf16.gmra.mrb[0].mxu0 %v129
  %v339 = vpop.f32.mrb[0].mxu0
  %v340 = vadd.f32 %v57, %v339
  %v341 = vpop.f32.mrb[0].mxu0
  %v342 = vpop.f32.mrb[0].mxu0
  %v343 = vadd.f32 %v57, %v342
  %v344 = vpop.f32.mrb[0].mxu0
  %345 = vmatprep.mubr.bf16.mxu0 0
  %346 = vmatmul.mubr.bf16.gmra.mrb[0].mxu0 %v132
  %v347 = vpop.f32.mrb[0].mxu0
  %v348 = vadd.f32 %v57, %v347
  %v349 = vpop.f32.mrb[0].mxu0
  %v350 = vpop.f32.mrb[0].mxu0
  %v351 = vadd.f32 %v57, %v350
  %v352 = vpop.f32.mrb[0].mxu0
  %353 = vdwg.mxu0
  %354 = vst [vmem:[#allocation3] sm:$0xff] %v179
  %355 = vst [vmem:[#allocation3 + $0x8] sm:$0xff] %v181
  %356 = vst [vmem:[#allocation3 + $0x10] sm:$0xff] %v292
  %357 = vst [vmem:[#allocation3 + $0x18] sm:$0xff] %v183
  %358 = vst [vmem:[#allocation3 + $0x20] sm:$0xff] %v185
  %359 = vst [vmem:[#allocation3 + $0x28] sm:$0xff] %v295
  %360 = vst [vmem:[#allocation3 + $0x30] sm:$0xff] %v189
  %361 = vst [vmem:[#allocation3 + $0x38] sm:$0xff] %v191
  %362 = vst [vmem:[#allocation3 + $0x40] sm:$0xff] %v300
  %363 = vst [vmem:[#allocation3 + $0x48] sm:$0xff] %v193
  %364 = vst [vmem:[#allocation3 + $0x50] sm:$0xff] %v195
  %365 = vst [vmem:[#allocation3 + $0x58] sm:$0xff] %v303
  %366 = vst [vmem:[#allocation3 + $0x60] sm:$0xff] %v199
  %367 = vst [vmem:[#allocation3 + $0x68] sm:$0xff] %v201
  %368 = vst [vmem:[#allocation3 + $0x70] sm:$0xff] %v308
  %369 = vst [vmem:[#allocation3 + $0x78] sm:$0xff] %v203
  %370 = vst [vmem:[#allocation3 + $0x80] sm:$0xff] %v205
  %371 = vst [vmem:[#allocation3 + $0x88] sm:$0xff] %v311
  %372 = vst [vmem:[#allocation3 + $0x90] sm:$0xff] %v209
  %373 = vst [vmem:[#allocation3 + $0x98] sm:$0xff] %v211
  %374 = vst [vmem:[#allocation3 + $0xa0] sm:$0xff] %v316
  %375 = vst [vmem:[#allocation3 + $0xa8] sm:$0xff] %v213
  %376 = vst [vmem:[#allocation3 + $0xb0] sm:$0xff] %v215
  %377 = vst [vmem:[#allocation3 + $0xb8] sm:$0xff] %v319
  %378 = vst [vmem:[#allocation3 + $0xc0] sm:$0xff] %v219
  %379 = vst [vmem:[#allocation3 + $0xc8] sm:$0xff] %v221
  %380 = vst [vmem:[#allocation3 + $0xd0] sm:$0xff] %v324
  %381 = vst [vmem:[#allocation3 + $0xd8] sm:$0xff] %v223
  %382 = vst [vmem:[#allocation3 + $0xe0] sm:$0xff] %v225
  %383 = vst [vmem:[#allocation3 + $0xe8] sm:$0xff] %v327
  %384 = vst [vmem:[#allocation3 + $0xf0] sm:$0xff] %v229
  %385 = vst [vmem:[#allocation3 + $0xf8] sm:$0xff] %v231
  %386 = vst [vmem:[#allocation3 + $0x100] sm:$0xff] %v332
  %387 = vst [vmem:[#allocation3 + $0x108] sm:$0xff] %v233
  %388 = vst [vmem:[#allocation3 + $0x110] sm:$0xff] %v235
  %389 = vst [vmem:[#allocation3 + $0x118] sm:$0xff] %v335
  %390 = vst [vmem:[#allocation3 + $0x120] sm:$0xff] %v239
  %391 = vst [vmem:[#allocation3 + $0x128] sm:$0xff] %v241
  %392 = vst [vmem:[#allocation3 + $0x130] sm:$0xff] %v340
  %393 = vst [vmem:[#allocation3 + $0x138] sm:$0xff] %v243
  %394 = vst [vmem:[#allocation3 + $0x140] sm:$0xff] %v245
  %395 = vst [vmem:[#allocation3 + $0x148] sm:$0xff] %v343
  %396 = vst [vmem:[#allocation3 + $0x150] sm:$0xff] %v249
  %397 = vst [vmem:[#allocation3 + $0x158] sm:$0xff] %v251
  %398 = vst [vmem:[#allocation3 + $0x160] sm:$0xff] %v348
  %399 = vst [vmem:[#allocation3 + $0x168] sm:$0xff] %v253
  %400 = vst [vmem:[#allocation3 + $0x170] sm:$0xff] %v255
  %401 = vst [vmem:[#allocation3 + $0x178] sm:$0xff] %v351
  %v402 = vld [vmem:[%s2] sm:$0xff]
  %v403 = vld [vmem:[%s2 + $0x8] sm:$0xf]
  %v404 = vld [vmem:[%s2 + $0xc] sm:$0xff]
  %v405 = vld [vmem:[%s2 + $0x14] sm:$0xf]
  %v406 = vld [vmem:[%s2 + $0x18] sm:$0xff]
  %v407 = vld [vmem:[%s2 + $0x20] sm:$0xf]
  %v408 = vld [vmem:[%s2 + $0x24] sm:$0xff]
  %v409 = vld [vmem:[%s2 + $0x2c] sm:$0xf]
  %v410 = vld [vmem:[%s2 + $0x30] sm:$0xff]
  %v411 = vld [vmem:[%s2 + $0x38] sm:$0xf]
  %v412 = vld [vmem:[%s2 + $0x3c] sm:$0xff]
  %v413 = vld [vmem:[%s2 + $0x44] sm:$0xf]
  %v414 = vld [vmem:[%s2 + $0x48] sm:$0xff]
  %v415 = vld [vmem:[%s2 + $0x50] sm:$0xf]
  %v416 = vld [vmem:[%s2 + $0x54] sm:$0xff]
  %v417 = vld [vmem:[%s2 + $0x5c] sm:$0xf]
  %v418 = vld [vmem:[%s2 + $0x60] sm:$0xff]
  %v419 = vld [vmem:[%s2 + $0x68] sm:$0xf]
  %v420 = vld [vmem:[%s2 + $0x6c] sm:$0xff]
  %v421 = vld [vmem:[%s2 + $0x74] sm:$0xf]
  %v422 = vld [vmem:[%s2 + $0x78] sm:$0xff]
  %v423 = vld [vmem:[%s2 + $0x80] sm:$0xf]
  %v424 = vld [vmem:[%s2 + $0x84] sm:$0xff]
  %v425 = vld [vmem:[%s2 + $0x8c] sm:$0xf]
  %v426 = vld [vmem:[%s2 + $0x90] sm:$0xff]
  %v427 = vld [vmem:[%s2 + $0x98] sm:$0xf]
  %v428 = vld [vmem:[%s2 + $0x9c] sm:$0xff]
  %v429 = vld [vmem:[%s2 + $0xa4] sm:$0xf]
  %v430 = vld [vmem:[%s2 + $0xa8] sm:$0xff]
  %v431 = vld [vmem:[%s2 + $0xb0] sm:$0xf]
  %v432 = vld [vmem:[%s2 + $0xb4] sm:$0xff]
  %v433 = vld [vmem:[%s2 + $0xbc] sm:$0xf]
  %v434 = vld [vmem:[%s4] sm:$0x1]
  %v436 = vlaneseq
  %v437 = vshrl.u32 %v436, 7
  %v438 = vsub.s32 0, %v437
  %v439 = vrot.slane %v434, %v438
  %v441 = vld [vmem:[#allocation2] sm:$0xff]
  loop: start=0, step=1, limit=2
  $region26: #{expanded_spatial_graph_embedding_net.2} parent=0 // loop_pre_header
    _
  $region27: #{expanded_spatial_graph_embedding_net.2} parent=0 // loop_header
    %s443 = sphi 0, %s447
    %p444 = scmp.ge.s32.totalorder %s443, 2
    %v448 = vphi %v441, %v1538
  $region28: #{expanded_spatial_graph_embedding_net.2} parent=0 // loop_header_branch
    %446 = sbr.rel (%p444) target = $region32
  $region29: #{expanded_spatial_graph_embedding_net.2} parent=0 // loop_body
    %s449 = smul.u32 %s443, 8
    %s450 = smul.u32 %s449, 8
    %s451 = sshra.s32 %s450, 3
    %s452 = sand.u32 %s450, 7
    %s453 = smul.u32 %s451, 3
    %s454 = smul.addr %s453, 8
    %s455 = scalar_lea.vmem [#allocation3], %s454
    %v456 = vld [vmem:[%s455] sm:$0xff]
    %v457 = vld [vmem:[%s455 + $0x8] sm:$0xff]
    %v458 = vld [vmem:[%s455 + $0x10] sm:$0xff]
    %v459 = vpack.c.bf16 %v448, %v448
    %v492 = vunpack.c.l.b16 %v402
    %v493 = vunpack.c.h.b16 %v402
    %v494 = vunpack.c.l.b16 %v403
    %v495 = vunpack.c.l.b16 %v404
    %v496 = vunpack.c.h.b16 %v404
    %v497 = vunpack.c.l.b16 %v405
    %v498 = vunpack.c.l.b16 %v406
    %v499 = vunpack.c.h.b16 %v406
    %v500 = vunpack.c.l.b16 %v407
    %v501 = vunpack.c.l.b16 %v408
    %v502 = vunpack.c.h.b16 %v408
    %v503 = vunpack.c.l.b16 %v409
    %v504 = vunpack.c.l.b16 %v410
    %v505 = vunpack.c.h.b16 %v410
    %v506 = vunpack.c.l.b16 %v411
    %v507 = vunpack.c.l.b16 %v412
    %v508 = vunpack.c.h.b16 %v412
    %v509 = vunpack.c.l.b16 %v413
    %v510 = vunpack.c.l.b16 %v414
    %v511 = vunpack.c.h.b16 %v414
    %v512 = vunpack.c.l.b16 %v415
    %v513 = vunpack.c.l.b16 %v416
    %v514 = vunpack.c.h.b16 %v416
    %v515 = vunpack.c.l.b16 %v417
    %v516 = vunpack.c.l.b16 %v418
    %v517 = vunpack.c.h.b16 %v418
    %v518 = vunpack.c.l.b16 %v419
    %v519 = vunpack.c.l.b16 %v420
    %v520 = vunpack.c.h.b16 %v420
    %v521 = vunpack.c.l.b16 %v421
    %v522 = vunpack.c.l.b16 %v422
    %v523 = vunpack.c.h.b16 %v422
    %v524 = vunpack.c.l.b16 %v423
    %v525 = vunpack.c.l.b16 %v424
    %v526 = vunpack.c.h.b16 %v424
    %v527 = vunpack.c.l.b16 %v425
    %v528 = vunpack.c.l.b16 %v426
    %v529 = vunpack.c.h.b16 %v426
    %v530 = vunpack.c.l.b16 %v427
    %v531 = vunpack.c.l.b16 %v428
    %v532 = vunpack.c.h.b16 %v428
    %v533 = vunpack.c.l.b16 %v429
    %v534 = vunpack.c.l.b16 %v430
    %v535 = vunpack.c.h.b16 %v430
    %v536 = vunpack.c.l.b16 %v431
    %v537 = vunpack.c.l.b16 %v432
    %v538 = vunpack.c.h.b16 %v432
    %v539 = vunpack.c.l.b16 %v433
    %v540 = vpack.c.b16 %v495, %v492
    %v541 = vpack.c.b16 %v496, %v493
    %v542 = vpack.c.b16 %v497, %v494
    %v543 = vpack.c.b16 %v501, %v498
    %v544 = vpack.c.b16 %v502, %v499
    %v545 = vpack.c.b16 %v503, %v500
    %v546 = vpack.c.b16 %v507, %v504
    %v547 = vpack.c.b16 %v508, %v505
    %v548 = vpack.c.b16 %v509, %v506
    %v549 = vpack.c.b16 %v513, %v510
    %v550 = vpack.c.b16 %v514, %v511
    %v551 = vpack.c.b16 %v515, %v512
    %v552 = vpack.c.b16 %v519, %v516
    %v553 = vpack.c.b16 %v520, %v517
    %v554 = vpack.c.b16 %v521, %v518
    %v555 = vpack.c.b16 %v525, %v522
    %v556 = vpack.c.b16 %v526, %v523
    %v557 = vpack.c.b16 %v527, %v524
    %v558 = vpack.c.b16 %v531, %v528
    %v559 = vpack.c.b16 %v532, %v529
    %v560 = vpack.c.b16 %v533, %v530
    %v561 = vpack.c.b16 %v537, %v534
    %v562 = vpack.c.b16 %v538, %v535
    %v563 = vpack.c.b16 %v539, %v536
    %588 = vmatprep.subr.bf16.mxu0 %v541
    %589 = vmatpush1.bf16.msra.mxu0 %v540
    %590 = vmatprep.subr.bf16.mxu0 %v544
    %591 = vmatpush1.bf16.msra.mxu0 %v543
    %592 = vmatprep.subr.bf16.mxu0 %v547
    %593 = vmatpush1.bf16.msra.mxu0 %v546
    %594 = vmatprep.subr.bf16.mxu0 %v550
    %595 = vmatpush1.bf16.msra.mxu0 %v549
    %596 = vmatprep.subr.bf16.mxu0 %v553
    %597 = vmatpush1.bf16.msra.mxu0 %v552
    %598 = vmatprep.subr.bf16.mxu0 %v556
    %599 = vmatpush1.bf16.msra.mxu0 %v555
    %600 = vmatprep.subr.bf16.mxu0 %v559
    %601 = vmatpush1.bf16.msra.mxu0 %v558
    %602 = vmatprep.subr.bf16.mxu0 %v562
    %603 = vmatpush1.bf16.msra.mxu0 %v561
    %604 = vmatprep.subr.bf16.mxu0 0
    %605 = vmatpush1.bf16.msra.mxu0 0
    %606 = vmatprep.subr.bf16.mxu0 0
    %607 = vmatpush1.bf16.msra.mxu0 0
    %608 = vmatprep.subr.bf16.mxu0 0
    %609 = vmatpush1.bf16.msra.mxu0 0
    %610 = vmatprep.subr.bf16.mxu0 0
    %611 = vmatpush1.bf16.msra.mxu0 0
    %612 = vmatprep.subr.bf16.mxu0 0
    %613 = vmatpush1.bf16.msra.mxu0 0
    %614 = vmatprep.subr.bf16.mxu0 0
    %615 = vmatpush1.bf16.msra.mxu0 0
    %616 = vmatprep.subr.bf16.mxu0 0
    %617 = vmatpush1.bf16.msra.mxu0 0
    %618 = vmatprep.subr.bf16.mxu0 0
    %619 = vmatpush1.bf16.msra.mxu0 0
    %620 = vmatprep.mubr.bf16.mxu0 0
    %621 = vmatmul.mubr.bf16.gmra.mrb[0].mxu0 %v459
    %v622 = vpop.f32.mrb[0].mxu0
    %v623 = vadd.f32 0.0, %v622
    %v624 = vpop.f32.mrb[0].mxu0
    %v625 = vadd.f32 0.0, %v624
    %v626 = vpop.f32.mrb[0].mxu0
    %v627 = vpop.f32.mrb[0].mxu0
    %628 = vdwg.mxu0
    %629 = vmatprep.subr.bf16.mxu0 0
    %630 = vmatpush1.bf16.msra.mxu0 %v542
    %631 = vmatprep.subr.bf16.mxu0 0
    %632 = vmatpush1.bf16.msra.mxu0 %v545
    %633 = vmatprep.subr.bf16.mxu0 0
    %634 = vmatpush1.bf16.msra.mxu0 %v548
    %635 = vmatprep.subr.bf16.mxu0 0
    %636 = vmatpush1.bf16.msra.mxu0 %v551
    %637 = vmatprep.subr.bf16.mxu0 0
    %638 = vmatpush1.bf16.msra.mxu0 %v554
    %639 = vmatprep.subr.bf16.mxu0 0
    %640 = vmatpush1.bf16.msra.mxu0 %v557
    %641 = vmatprep.subr.bf16.mxu0 0
    %642 = vmatpush1.bf16.msra.mxu0 %v560
    %643 = vmatprep.subr.bf16.mxu0 0
    %644 = vmatpush1.bf16.msra.mxu0 %v563
    %645 = vmatprep.subr.bf16.mxu0 0
    %646 = vmatpush1.bf16.msra.mxu0 0
    %647 = vmatprep.subr.bf16.mxu0 0
    %648 = vmatpush1.bf16.msra.mxu0 0
    %649 = vmatprep.subr.bf16.mxu0 0
    %650 = vmatpush1.bf16.msra.mxu0 0
    %651 = vmatprep.subr.bf16.mxu0 0
    %652 = vmatpush1.bf16.msra.mxu0 0
    %653 = vmatprep.subr.bf16.mxu0 0
    %654 = vmatpush1.bf16.msra.mxu0 0
    %655 = vmatprep.subr.bf16.mxu0 0
    %656 = vmatpush1.bf16.msra.mxu0 0
    %657 = vmatprep.subr.bf16.mxu0 0
    %658 = vmatpush1.bf16.msra.mxu0 0
    %659 = vmatprep.subr.bf16.mxu0 0
    %660 = vmatpush1.bf16.msra.mxu0 0
    %661 = vmatprep.mubr.bf16.mxu0 0
    %662 = vmatmul.mubr.bf16.gmra.mrb[0].mxu0 %v459
    %v663 = vpop.f32.mrb[0].mxu0
    %v664 = vadd.f32 0.0, %v663
    %v665 = vpop.f32.mrb[0].mxu0
    %v666 = vpop.f32.mrb[0].mxu0
    %v667 = vpop.f32.mrb[0].mxu0
    %668 = vdwg.mxu0
    %v669 = vadd.f32 %v456, %v623
    %v670 = vxor.u32 %v669, 2147483648
    %v671 = vmul.f32 %v670, 1.442695
    %v672 = vpow.pop %v671
    %v673 = vadd.f32 %v672, 1.0
    %v674 = vrcp.pop %v673
    %v675 = vmul.f32 1.0, %v674
    %v676 = vadd.f32 %v457, %v625
    %v677 = vxor.u32 %v676, 2147483648
    %v678 = vmul.f32 %v677, 1.442695
    %v679 = vpow.pop %v678
    %v680 = vadd.f32 %v679, 1.0
    %v681 = vrcp.pop %v680
    %v682 = vmul.f32 1.0, %v681
    %v683 = vadd.f32 %v664, %v439
    %v684 = vmul.f32 %v675, %v683
    %v685 = vadd.f32 %v458, %v684
    %v686 = vtanh.pop %v685
    %v687 = vsub.f32 1.0, %v682
    %v688 = vmul.f32 %v687, %v686
    %v689 = vmul.f32 %v682, %v448
    %v690 = vadd.f32 %v688, %v689
    %v691 = vrot.slane %v690, 4
    %v692 = vadd.f32 %v690, %v691
    %v693 = vrot.slane %v692, 2
    %v694 = vadd.f32 %v692, %v693
    %v695 = vrot.slane %v694, 1
    %v696 = vadd.f32 %v694, %v695
    %v697 = vrcp.pop 8.0
    %v698 = vmul.f32 %v696, %v697
    %s699 = sadd.s32 %s449, 1
    %s700 = smul.u32 %s699, 8
    %s701 = sshra.s32 %s700, 3
    %s702 = sand.u32 %s700, 7
    %s703 = smul.u32 %s701, 3
    %s704 = smul.addr %s703, 8
    %s705 = scalar_lea.vmem [#allocation3], %s704
    %v706 = vld [vmem:[%s705] sm:$0xff]
    %v707 = vld [vmem:[%s705 + $0x8] sm:$0xff]
    %v708 = vld [vmem:[%s705 + $0x10] sm:$0xff]
    %v709 = vpack.c.bf16 %v690, %v690
    %710 = vmatprep.subr.bf16.mxu0 %v541
    %711 = vmatpush1.bf16.msra.mxu0 %v540
    %712 = vmatprep.subr.bf16.mxu0 %v544
    %713 = vmatpush1.bf16.msra.mxu0 %v543
    %714 = vmatprep.subr.bf16.mxu0 %v547
    %715 = vmatpush1.bf16.msra.mxu0 %v546
    %716 = vmatprep.subr.bf16.mxu0 %v550
    %717 = vmatpush1.bf16.msra.mxu0 %v549
    %718 = vmatprep.subr.bf16.mxu0 %v553
    %719 = vmatpush1.bf16.msra.mxu0 %v552
    %720 = vmatprep.subr.bf16.mxu0 %v556
    %721 = vmatpush1.bf16.msra.mxu0 %v555
    %722 = vmatprep.subr.bf16.mxu0 %v559
    %723 = vmatpush1.bf16.msra.mxu0 %v558
    %724 = vmatprep.subr.bf16.mxu0 %v562
    %725 = vmatpush1.bf16.msra.mxu0 %v561
    %726 = vmatprep.subr.bf16.mxu0 0
    %727 = vmatpush1.bf16.msra.mxu0 0
    %728 = vmatprep.subr.bf16.mxu0 0
    %729 = vmatpush1.bf16.msra.mxu0 0
    %730 = vmatprep.subr.bf16.mxu0 0
    %731 = vmatpush1.bf16.msra.mxu0 0
    %732 = vmatprep.subr.bf16.mxu0 0
    %733 = vmatpush1.bf16.msra.mxu0 0
    %734 = vmatprep.subr.bf16.mxu0 0
    %735 = vmatpush1.bf16.msra.mxu0 0
    %736 = vmatprep.subr.bf16.mxu0 0
    %737 = vmatpush1.bf16.msra.mxu0 0
    %738 = vmatprep.subr.bf16.mxu0 0
    %739 = vmatpush1.bf16.msra.mxu0 0
    %740 = vmatprep.subr.bf16.mxu0 0
    %741 = vmatpush1.bf16.msra.mxu0 0
    %742 = vmatprep.mubr.bf16.mxu0 0
    %743 = vmatmul.mubr.bf16.gmra.mrb[0].mxu0 %v709
    %v744 = vpop.f32.mrb[0].mxu0
    %v745 = vadd.f32 0.0, %v744
    %v746 = vpop.f32.mrb[0].mxu0
    %v747 = vadd.f32 0.0, %v746
    %v748 = vpop.f32.mrb[0].mxu0
    %v749 = vpop.f32.mrb[0].mxu0
    %750 = vdwg.mxu0
    %751 = vmatprep.subr.bf16.mxu0 0
    %752 = vmatpush1.bf16.msra.mxu0 %v542
    %753 = vmatprep.subr.bf16.mxu0 0
    %754 = vmatpush1.bf16.msra.mxu0 %v545
    %755 = vmatprep.subr.bf16.mxu0 0
    %756 = vmatpush1.bf16.msra.mxu0 %v548
    %757 = vmatprep.subr.bf16.mxu0 0
    %758 = vmatpush1.bf16.msra.mxu0 %v551
    %759 = vmatprep.subr.bf16.mxu0 0
    %760 = vmatpush1.bf16.msra.mxu0 %v554
    %761 = vmatprep.subr.bf16.mxu0 0
    %762 = vmatpush1.bf16.msra.mxu0 %v557
    %763 = vmatprep.subr.bf16.mxu0 0
    %764 = vmatpush1.bf16.msra.mxu0 %v560
    %765 = vmatprep.subr.bf16.mxu0 0
    %766 = vmatpush1.bf16.msra.mxu0 %v563
    %767 = vmatprep.subr.bf16.mxu0 0
    %768 = vmatpush1.bf16.msra.mxu0 0
    %769 = vmatprep.subr.bf16.mxu0 0
    %770 = vmatpush1.bf16.msra.mxu0 0
    %771 = vmatprep.subr.bf16.mxu0 0
    %772 = vmatpush1.bf16.msra.mxu0 0
    %773 = vmatprep.subr.bf16.mxu0 0
    %774 = vmatpush1.bf16.msra.mxu0 0
    %775 = vmatprep.subr.bf16.mxu0 0
    %776 = vmatpush1.bf16.msra.mxu0 0
    %777 = vmatprep.subr.bf16.mxu0 0
    %778 = vmatpush1.bf16.msra.mxu0 0
    %779 = vmatprep.subr.bf16.mxu0 0
    %780 = vmatpush1.bf16.msra.mxu0 0
    %781 = vmatprep.subr.bf16.mxu0 0
    %782 = vmatpush1.bf16.msra.mxu0 0
    %783 = vmatprep.mubr.bf16.mxu0 0
    %784 = vmatmul.mubr.bf16.gmra.mrb[0].mxu0 %v709
    %v785 = vpop.f32.mrb[0].mxu0
    %v786 = vadd.f32 0.0, %v785
    %v787 = vpop.f32.mrb[0].mxu0
    %v788 = vpop.f32.mrb[0].mxu0
    %v789 = vpop.f32.mrb[0].mxu0
    %790 = vdwg.mxu0
    %v791 = vadd.f32 %v706, %v745
    %v792 = vxor.u32 %v791, 2147483648
    %v793 = vmul.f32 %v792, 1.442695
    %v794 = vpow.pop %v793
    %v795 = vadd.f32 %v794, 1.0
    %v796 = vrcp.pop %v795
    %v797 = vmul.f32 1.0, %v796
    %v798 = vadd.f32 %v707, %v747
    %v799 = vxor.u32 %v798, 2147483648
    %v800 = vmul.f32 %v799, 1.442695
    %v801 = vpow.pop %v800
    %v802 = vadd.f32 %v801, 1.0
    %v803 = vrcp.pop %v802
    %v804 = vmul.f32 1.0, %v803
    %v805 = vadd.f32 %v786, %v439
    %v806 = vmul.f32 %v797, %v805
    %v807 = vadd.f32 %v708, %v806
    %v808 = vtanh.pop %v807
    %v809 = vsub.f32 1.0, %v804
    %v810 = vmul.f32 %v809, %v808
    %v811 = vmul.f32 %v804, %v690
    %v812 = vadd.f32 %v810, %v811
    %v813 = vrot.slane %v812, 4
    %v814 = vadd.f32 %v812, %v813
    %v815 = vrot.slane %v814, 2
    %v816 = vadd.f32 %v814, %v815
    %v817 = vrot.slane %v816, 1
    %v818 = vadd.f32 %v816, %v817
    %v819 = vmul.f32 %v818, %v697
    %s820 = sadd.s32 %s449, 2
    %s821 = smul.u32 %s820, 8
    %s822 = sshra.s32 %s821, 3
    %s823 = sand.u32 %s821, 7
    %s824 = smul.u32 %s822, 3
    %s825 = smul.addr %s824, 8
    %s826 = scalar_lea.vmem [#allocation3], %s825
    %v827 = vld [vmem:[%s826] sm:$0xff]
    %v828 = vld [vmem:[%s826 + $0x8] sm:$0xff]
    %v829 = vld [vmem:[%s826 + $0x10] sm:$0xff]
    %v830 = vpack.c.bf16 %v812, %v812
    %831 = vmatprep.subr.bf16.mxu0 %v541
    %832 = vmatpush1.bf16.msra.mxu0 %v540
    %833 = vmatprep.subr.bf16.mxu0 %v544
    %834 = vmatpush1.bf16.msra.mxu0 %v543
    %835 = vmatprep.subr.bf16.mxu0 %v547
    %836 = vmatpush1.bf16.msra.mxu0 %v546
    %837 = vmatprep.subr.bf16.mxu0 %v550
    %838 = vmatpush1.bf16.msra.mxu0 %v549
    %839 = vmatprep.subr.bf16.mxu0 %v553
    %840 = vmatpush1.bf16.msra.mxu0 %v552
    %841 = vmatprep.subr.bf16.mxu0 %v556
    %842 = vmatpush1.bf16.msra.mxu0 %v555
    %843 = vmatprep.subr.bf16.mxu0 %v559
    %844 = vmatpush1.bf16.msra.mxu0 %v558
    %845 = vmatprep.subr.bf16.mxu0 %v562
    %846 = vmatpush1.bf16.msra.mxu0 %v561
    %847 = vmatprep.subr.bf16.mxu0 0
    %848 = vmatpush1.bf16.msra.mxu0 0
    %849 = vmatprep.subr.bf16.mxu0 0
    %850 = vmatpush1.bf16.msra.mxu0 0
    %851 = vmatprep.subr.bf16.mxu0 0
    %852 = vmatpush1.bf16.msra.mxu0 0
    %853 = vmatprep.subr.bf16.mxu0 0
    %854 = vmatpush1.bf16.msra.mxu0 0
    %855 = vmatprep.subr.bf16.mxu0 0
    %856 = vmatpush1.bf16.msra.mxu0 0
    %857 = vmatprep.subr.bf16.mxu0 0
    %858 = vmatpush1.bf16.msra.mxu0 0
    %859 = vmatprep.subr.bf16.mxu0 0
    %860 = vmatpush1.bf16.msra.mxu0 0
    %861 = vmatprep.subr.bf16.mxu0 0
    %862 = vmatpush1.bf16.msra.mxu0 0
    %863 = vmatprep.mubr.bf16.mxu0 0
    %864 = vmatmul.mubr.bf16.gmra.mrb[0].mxu0 %v830
    %v865 = vpop.f32.mrb[0].mxu0
    %v866 = vadd.f32 0.0, %v865
    %v867 = vpop.f32.mrb[0].mxu0
    %v868 = vadd.f32 0.0, %v867
    %v869 = vpop.f32.mrb[0].mxu0
    %v870 = vpop.f32.mrb[0].mxu0
    %871 = vdwg.mxu0
    %872 = vmatprep.subr.bf16.mxu0 0
    %873 = vmatpush1.bf16.msra.mxu0 %v542
    %874 = vmatprep.subr.bf16.mxu0 0
    %875 = vmatpush1.bf16.msra.mxu0 %v545
    %876 = vmatprep.subr.bf16.mxu0 0
    %877 = vmatpush1.bf16.msra.mxu0 %v548
    %878 = vmatprep.subr.bf16.mxu0 0
    %879 = vmatpush1.bf16.msra.mxu0 %v551
    %880 = vmatprep.subr.bf16.mxu0 0
    %881 = vmatpush1.bf16.msra.mxu0 %v554
    %882 = vmatprep.subr.bf16.mxu0 0
    %883 = vmatpush1.bf16.msra.mxu0 %v557
    %884 = vmatprep.subr.bf16.mxu0 0
    %885 = vmatpush1.bf16.msra.mxu0 %v560
    %886 = vmatprep.subr.bf16.mxu0 0
    %887 = vmatpush1.bf16.msra.mxu0 %v563
    %888 = vmatprep.subr.bf16.mxu0 0
    %889 = vmatpush1.bf16.msra.mxu0 0
    %890 = vmatprep.subr.bf16.mxu0 0
    %891 = vmatpush1.bf16.msra.mxu0 0
    %892 = vmatprep.subr.bf16.mxu0 0
    %893 = vmatpush1.bf16.msra.mxu0 0
    %894 = vmatprep.subr.bf16.mxu0 0
    %895 = vmatpush1.bf16.msra.mxu0 0
    %896 = vmatprep.subr.bf16.mxu0 0
    %897 = vmatpush1.bf16.msra.mxu0 0
    %898 = vmatprep.subr.bf16.mxu0 0
    %899 = vmatpush1.bf16.msra.mxu0 0
    %900 = vmatprep.subr.bf16.mxu0 0
    %901 = vmatpush1.bf16.msra.mxu0 0
    %902 = vmatprep.subr.bf16.mxu0 0
    %903 = vmatpush1.bf16.msra.mxu0 0
    %904 = vmatprep.mubr.bf16.mxu0 0
    %905 = vmatmul.mubr.bf16.gmra.mrb[0].mxu0 %v830
    %v906 = vpop.f32.mrb[0].mxu0
    %v907 = vadd.f32 0.0, %v906
    %v908 = vpop.f32.mrb[0].mxu0
    %v909 = vpop.f32.mrb[0].mxu0
    %v910 = vpop.f32.mrb[0].mxu0
    %911 = vdwg.mxu0
    %v912 = vadd.f32 %v827, %v866
    %v913 = vxor.u32 %v912, 2147483648
    %v914 = vmul.f32 %v913, 1.442695
    %v915 = vpow.pop %v914
    %v916 = vadd.f32 %v915, 1.0
    %v917 = vrcp.pop %v916
    %v918 = vmul.f32 1.0, %v917
    %v919 = vadd.f32 %v828, %v868
    %v920 = vxor.u32 %v919, 2147483648
    %v921 = vmul.f32 %v920, 1.442695
    %v922 = vpow.pop %v921
    %v923 = vadd.f32 %v922, 1.0
    %v924 = vrcp.pop %v923
    %v925 = vmul.f32 1.0, %v924
    %v926 = vadd.f32 %v907, %v439
    %v927 = vmul.f32 %v918, %v926
    %v928 = vadd.f32 %v829, %v927
    %v929 = vtanh.pop %v928
    %v930 = vsub.f32 1.0, %v925
    %v931 = vmul.f32 %v930, %v929
    %v932 = vmul.f32 %v925, %v812
    %v933 = vadd.f32 %v931, %v932
    %v934 = vrot.slane %v933, 4
    %v935 = vadd.f32 %v933, %v934
    %v936 = vrot.slane %v935, 2
    %v937 = vadd.f32 %v935, %v936
    %v938 = vrot.slane %v937, 1
    %v939 = vadd.f32 %v937, %v938
    %v940 = vmul.f32 %v939, %v697
    %s941 = sadd.s32 %s449, 3
    %s942 = smul.u32 %s941, 8
    %s943 = sshra.s32 %s942, 3
    %s944 = sand.u32 %s942, 7
    %s945 = smul.u32 %s943, 3
    %s946 = smul.addr %s945, 8
    %s947 = scalar_lea.vmem [#allocation3], %s946
    %v948 = vld [vmem:[%s947] sm:$0xff]
    %v949 = vld [vmem:[%s947 + $0x8] sm:$0xff]
    %v950 = vld [vmem:[%s947 + $0x10] sm:$0xff]
    %v951 = vpack.c.bf16 %v933, %v933
    %952 = vmatprep.subr.bf16.mxu0 %v541
    %953 = vmatpush1.bf16.msra.mxu0 %v540
    %954 = vmatprep.subr.bf16.mxu0 %v544
    %955 = vmatpush1.bf16.msra.mxu0 %v543
    %956 = vmatprep.subr.bf16.mxu0 %v547
    %957 = vmatpush1.bf16.msra.mxu0 %v546
    %958 = vmatprep.subr.bf16.mxu0 %v550
    %959 = vmatpush1.bf16.msra.mxu0 %v549
    %960 = vmatprep.subr.bf16.mxu0 %v553
    %961 = vmatpush1.bf16.msra.mxu0 %v552
    %962 = vmatprep.subr.bf16.mxu0 %v556
    %963 = vmatpush1.bf16.msra.mxu0 %v555
    %964 = vmatprep.subr.bf16.mxu0 %v559
    %965 = vmatpush1.bf16.msra.mxu0 %v558
    %966 = vmatprep.subr.bf16.mxu0 %v562
    %967 = vmatpush1.bf16.msra.mxu0 %v561
    %968 = vmatprep.subr.bf16.mxu0 0
    %969 = vmatpush1.bf16.msra.mxu0 0
    %970 = vmatprep.subr.bf16.mxu0 0
    %971 = vmatpush1.bf16.msra.mxu0 0
    %972 = vmatprep.subr.bf16.mxu0 0
    %973 = vmatpush1.bf16.msra.mxu0 0
    %974 = vmatprep.subr.bf16.mxu0 0
    %975 = vmatpush1.bf16.msra.mxu0 0
    %976 = vmatprep.subr.bf16.mxu0 0
    %977 = vmatpush1.bf16.msra.mxu0 0
    %978 = vmatprep.subr.bf16.mxu0 0
    %979 = vmatpush1.bf16.msra.mxu0 0
    %980 = vmatprep.subr.bf16.mxu0 0
    %981 = vmatpush1.bf16.msra.mxu0 0
    %982 = vmatprep.subr.bf16.mxu0 0
    %983 = vmatpush1.bf16.msra.mxu0 0
    %984 = vmatprep.mubr.bf16.mxu0 0
    %985 = vmatmul.mubr.bf16.gmra.mrb[0].mxu0 %v951
    %v986 = vpop.f32.mrb[0].mxu0
    %v987 = vadd.f32 0.0, %v986
    %v988 = vpop.f32.mrb[0].mxu0
    %v989 = vadd.f32 0.0, %v988
    %v990 = vpop.f32.mrb[0].mxu0
    %v991 = vpop.f32.mrb[0].mxu0
    %992 = vdwg.mxu0
    %993 = vmatprep.subr.bf16.mxu0 0
    %994 = vmatpush1.bf16.msra.mxu0 %v542
    %995 = vmatprep.subr.bf16.mxu0 0
    %996 = vmatpush1.bf16.msra.mxu0 %v545
    %997 = vmatprep.subr.bf16.mxu0 0
    %998 = vmatpush1.bf16.msra.mxu0 %v548
    %999 = vmatprep.subr.bf16.mxu0 0
    %1000 = vmatpush1.bf16.msra.mxu0 %v551
    %1001 = vmatprep.subr.bf16.mxu0 0
    %1002 = vmatpush1.bf16.msra.mxu0 %v554
    %1003 = vmatprep.subr.bf16.mxu0 0
    %1004 = vmatpush1.bf16.msra.mxu0 %v557
    %1005 = vmatprep.subr.bf16.mxu0 0
    %1006 = vmatpush1.bf16.msra.mxu0 %v560
    %1007 = vmatprep.subr.bf16.mxu0 0
    %1008 = vmatpush1.bf16.msra.mxu0 %v563
    %1009 = vmatprep.subr.bf16.mxu0 0
    %1010 = vmatpush1.bf16.msra.mxu0 0
    %1011 = vmatprep.subr.bf16.mxu0 0
    %1012 = vmatpush1.bf16.msra.mxu0 0
    %1013 = vmatprep.subr.bf16.mxu0 0
    %1014 = vmatpush1.bf16.msra.mxu0 0
    %1015 = vmatprep.subr.bf16.mxu0 0
    %1016 = vmatpush1.bf16.msra.mxu0 0
    %1017 = vmatprep.subr.bf16.mxu0 0
    %1018 = vmatpush1.bf16.msra.mxu0 0
    %1019 = vmatprep.subr.bf16.mxu0 0
    %1020 = vmatpush1.bf16.msra.mxu0 0
    %1021 = vmatprep.subr.bf16.mxu0 0
    %1022 = vmatpush1.bf16.msra.mxu0 0
    %1023 = vmatprep.subr.bf16.mxu0 0
    %1024 = vmatpush1.bf16.msra.mxu0 0
    %1025 = vmatprep.mubr.bf16.mxu0 0
    %1026 = vmatmul.mubr.bf16.gmra.mrb[0].mxu0 %v951
    %v1027 = vpop.f32.mrb[0].mxu0
    %v1028 = vadd.f32 0.0, %v1027
    %v1029 = vpop.f32.mrb[0].mxu0
    %v1030 = vpop.f32.mrb[0].mxu0
    %v1031 = vpop.f32.mrb[0].mxu0
    %1032 = vdwg.mxu0
    %v1033 = vadd.f32 %v948, %v987
    %v1034 = vxor.u32 %v1033, 2147483648
    %v1035 = vmul.f32 %v1034, 1.442695
    %v1036 = vpow.pop %v1035
    %v1037 = vadd.f32 %v1036, 1.0
    %v1038 = vrcp.pop %v1037
    %v1039 = vmul.f32 1.0, %v1038
    %v1040 = vadd.f32 %v949, %v989
    %v1041 = vxor.u32 %v1040, 2147483648
    %v1042 = vmul.f32 %v1041, 1.442695
    %v1043 = vpow.pop %v1042
    %v1044 = vadd.f32 %v1043, 1.0
    %v1045 = vrcp.pop %v1044
    %v1046 = vmul.f32 1.0, %v1045
    %v1047 = vadd.f32 %v1028, %v439
    %v1048 = vmul.f32 %v1039, %v1047
    %v1049 = vadd.f32 %v950, %v1048
    %v1050 = vtanh.pop %v1049
    %v1051 = vsub.f32 1.0, %v1046
    %v1052 = vmul.f32 %v1051, %v1050
    %v1053 = vmul.f32 %v1046, %v933
    %v1054 = vadd.f32 %v1052, %v1053
    %v1055 = vrot.slane %v1054, 4
    %v1056 = vadd.f32 %v1054, %v1055
    %v1057 = vrot.slane %v1056, 2
    %v1058 = vadd.f32 %v1056, %v1057
    %v1059 = vrot.slane %v1058, 1
    %v1060 = vadd.f32 %v1058, %v1059
    %v1061 = vmul.f32 %v1060, %v697
    %s1062 = sadd.s32 %s449, 4
    %s1063 = smul.u32 %s1062, 8
    %s1064 = sshra.s32 %s1063, 3
    %s1065 = sand.u32 %s1063, 7
    %s1066 = smul.u32 %s1064, 3
    %s1067 = smul.addr %s1066, 8
    %s1068 = scalar_lea.vmem [#allocation3], %s1067
    %v1069 = vld [vmem:[%s1068] sm:$0xff]
    %v1070 = vld [vmem:[%s1068 + $0x8] sm:$0xff]
    %v1071 = vld [vmem:[%s1068 + $0x10] sm:$0xff]
    %v1072 = vpack.c.bf16 %v1054, %v1054
    %1073 = vmatprep.subr.bf16.mxu0 %v541
    %1074 = vmatpush1.bf16.msra.mxu0 %v540
    %1075 = vmatprep.subr.bf16.mxu0 %v544
    %1076 = vmatpush1.bf16.msra.mxu0 %v543
    %1077 = vmatprep.subr.bf16.mxu0 %v547
    %1078 = vmatpush1.bf16.msra.mxu0 %v546
    %1079 = vmatprep.subr.bf16.mxu0 %v550
    %1080 = vmatpush1.bf16.msra.mxu0 %v549
    %1081 = vmatprep.subr.bf16.mxu0 %v553
    %1082 = vmatpush1.bf16.msra.mxu0 %v552
    %1083 = vmatprep.subr.bf16.mxu0 %v556
    %1084 = vmatpush1.bf16.msra.mxu0 %v555
    %1085 = vmatprep.subr.bf16.mxu0 %v559
    %1086 = vmatpush1.bf16.msra.mxu0 %v558
    %1087 = vmatprep.subr.bf16.mxu0 %v562
    %1088 = vmatpush1.bf16.msra.mxu0 %v561
    %1089 = vmatprep.subr.bf16.mxu0 0
    %1090 = vmatpush1.bf16.msra.mxu0 0
    %1091 = vmatprep.subr.bf16.mxu0 0
    %1092 = vmatpush1.bf16.msra.mxu0 0
    %1093 = vmatprep.subr.bf16.mxu0 0
    %1094 = vmatpush1.bf16.msra.mxu0 0
    %1095 = vmatprep.subr.bf16.mxu0 0
    %1096 = vmatpush1.bf16.msra.mxu0 0
    %1097 = vmatprep.subr.bf16.mxu0 0
    %1098 = vmatpush1.bf16.msra.mxu0 0
    %1099 = vmatprep.subr.bf16.mxu0 0
    %1100 = vmatpush1.bf16.msra.mxu0 0
    %1101 = vmatprep.subr.bf16.mxu0 0
    %1102 = vmatpush1.bf16.msra.mxu0 0
    %1103 = vmatprep.subr.bf16.mxu0 0
    %1104 = vmatpush1.bf16.msra.mxu0 0
    %1105 = vmatprep.mubr.bf16.mxu0 0
    %1106 = vmatmul.mubr.bf16.gmra.mrb[0].mxu0 %v1072
    %v1107 = vpop.f32.mrb[0].mxu0
    %v1108 = vadd.f32 0.0, %v1107
    %v1109 = vpop.f32.mrb[0].mxu0
    %v1110 = vadd.f32 0.0, %v1109
    %v1111 = vpop.f32.mrb[0].mxu0
    %v1112 = vpop.f32.mrb[0].mxu0
    %1113 = vdwg.mxu0
    %1114 = vmatprep.subr.bf16.mxu0 0
    %1115 = vmatpush1.bf16.msra.mxu0 %v542
    %1116 = vmatprep.subr.bf16.mxu0 0
    %1117 = vmatpush1.bf16.msra.mxu0 %v545
    %1118 = vmatprep.subr.bf16.mxu0 0
    %1119 = vmatpush1.bf16.msra.mxu0 %v548
    %1120 = vmatprep.subr.bf16.mxu0 0
    %1121 = vmatpush1.bf16.msra.mxu0 %v551
    %1122 = vmatprep.subr.bf16.mxu0 0
    %1123 = vmatpush1.bf16.msra.mxu0 %v554
    %1124 = vmatprep.subr.bf16.mxu0 0
    %1125 = vmatpush1.bf16.msra.mxu0 %v557
    %1126 = vmatprep.subr.bf16.mxu0 0
    %1127 = vmatpush1.bf16.msra.mxu0 %v560
    %1128 = vmatprep.subr.bf16.mxu0 0
    %1129 = vmatpush1.bf16.msra.mxu0 %v563
    %1130 = vmatprep.subr.bf16.mxu0 0
    %1131 = vmatpush1.bf16.msra.mxu0 0
    %1132 = vmatprep.subr.bf16.mxu0 0
    %1133 = vmatpush1.bf16.msra.mxu0 0
    %1134 = vmatprep.subr.bf16.mxu0 0
    %1135 = vmatpush1.bf16.msra.mxu0 0
    %1136 = vmatprep.subr.bf16.mxu0 0
    %1137 = vmatpush1.bf16.msra.mxu0 0
    %1138 = vmatprep.subr.bf16.mxu0 0
    %1139 = vmatpush1.bf16.msra.mxu0 0
    %1140 = vmatprep.subr.bf16.mxu0 0
    %1141 = vmatpush1.bf16.msra.mxu0 0
    %1142 = vmatprep.subr.bf16.mxu0 0
    %1143 = vmatpush1.bf16.msra.mxu0 0
    %1144 = vmatprep.subr.bf16.mxu0 0
    %1145 = vmatpush1.bf16.msra.mxu0 0
    %1146 = vmatprep.mubr.bf16.mxu0 0
    %1147 = vmatmul.mubr.bf16.gmra.mrb[0].mxu0 %v1072
    %v1148 = vpop.f32.mrb[0].mxu0
    %v1149 = vadd.f32 0.0, %v1148
    %v1150 = vpop.f32.mrb[0].mxu0
    %v1151 = vpop.f32.mrb[0].mxu0
    %v1152 = vpop.f32.mrb[0].mxu0
    %1153 = vdwg.mxu0
    %v1154 = vadd.f32 %v1069, %v1108
    %v1155 = vxor.u32 %v1154, 2147483648
    %v1156 = vmul.f32 %v1155, 1.442695
    %v1157 = vpow.pop %v1156
    %v1158 = vadd.f32 %v1157, 1.0
    %v1159 = vrcp.pop %v1158
    %v1160 = vmul.f32 1.0, %v1159
    %v1161 = vadd.f32 %v1070, %v1110
    %v1162 = vxor.u32 %v1161, 2147483648
    %v1163 = vmul.f32 %v1162, 1.442695
    %v1164 = vpow.pop %v1163
    %v1165 = vadd.f32 %v1164, 1.0
    %v1166 = vrcp.pop %v1165
    %v1167 = vmul.f32 1.0, %v1166
    %v1168 = vadd.f32 %v1149, %v439
    %v1169 = vmul.f32 %v1160, %v1168
    %v1170 = vadd.f32 %v1071, %v1169
    %v1171 = vtanh.pop %v1170
    %v1172 = vsub.f32 1.0, %v1167
    %v1173 = vmul.f32 %v1172, %v1171
    %v1174 = vmul.f32 %v1167, %v1054
    %v1175 = vadd.f32 %v1173, %v1174
    %v1176 = vrot.slane %v1175, 4
    %v1177 = vadd.f32 %v1175, %v1176
    %v1178 = vrot.slane %v1177, 2
    %v1179 = vadd.f32 %v1177, %v1178
    %v1180 = vrot.slane %v1179, 1
    %v1181 = vadd.f32 %v1179, %v1180
    %v1182 = vmul.f32 %v1181, %v697
    %s1183 = sadd.s32 %s449, 5
    %s1184 = smul.u32 %s1183, 8
    %s1185 = sshra.s32 %s1184, 3
    %s1186 = sand.u32 %s1184, 7
    %s1187 = smul.u32 %s1185, 3
    %s1188 = smul.addr %s1187, 8
    %s1189 = scalar_lea.vmem [#allocation3], %s1188
    %v1190 = vld [vmem:[%s1189] sm:$0xff]
    %v1191 = vld [vmem:[%s1189 + $0x8] sm:$0xff]
    %v1192 = vld [vmem:[%s1189 + $0x10] sm:$0xff]
    %v1193 = vpack.c.bf16 %v1175, %v1175
    %1194 = vmatprep.subr.bf16.mxu0 %v541
    %1195 = vmatpush1.bf16.msra.mxu0 %v540
    %1196 = vmatprep.subr.bf16.mxu0 %v544
    %1197 = vmatpush1.bf16.msra.mxu0 %v543
    %1198 = vmatprep.subr.bf16.mxu0 %v547
    %1199 = vmatpush1.bf16.msra.mxu0 %v546
    %1200 = vmatprep.subr.bf16.mxu0 %v550
    %1201 = vmatpush1.bf16.msra.mxu0 %v549
    %1202 = vmatprep.subr.bf16.mxu0 %v553
    %1203 = vmatpush1.bf16.msra.mxu0 %v552
    %1204 = vmatprep.subr.bf16.mxu0 %v556
    %1205 = vmatpush1.bf16.msra.mxu0 %v555
    %1206 = vmatprep.subr.bf16.mxu0 %v559
    %1207 = vmatpush1.bf16.msra.mxu0 %v558
    %1208 = vmatprep.subr.bf16.mxu0 %v562
    %1209 = vmatpush1.bf16.msra.mxu0 %v561
    %1210 = vmatprep.subr.bf16.mxu0 0
    %1211 = vmatpush1.bf16.msra.mxu0 0
    %1212 = vmatprep.subr.bf16.mxu0 0
    %1213 = vmatpush1.bf16.msra.mxu0 0
    %1214 = vmatprep.subr.bf16.mxu0 0
    %1215 = vmatpush1.bf16.msra.mxu0 0
    %1216 = vmatprep.subr.bf16.mxu0 0
    %1217 = vmatpush1.bf16.msra.mxu0 0
    %1218 = vmatprep.subr.bf16.mxu0 0
    %1219 = vmatpush1.bf16.msra.mxu0 0
    %1220 = vmatprep.subr.bf16.mxu0 0
    %1221 = vmatpush1.bf16.msra.mxu0 0
    %1222 = vmatprep.subr.bf16.mxu0 0
    %1223 = vmatpush1.bf16.msra.mxu0 0
    %1224 = vmatprep.subr.bf16.mxu0 0
    %1225 = vmatpush1.bf16.msra.mxu0 0
    %1226 = vmatprep.mubr.bf16.mxu0 0
    %1227 = vmatmul.mubr.bf16.gmra.mrb[0].mxu0 %v1193
    %v1228 = vpop.f32.mrb[0].mxu0
    %v1229 = vadd.f32 0.0, %v1228
    %v1230 = vpop.f32.mrb[0].mxu0
    %v1231 = vadd.f32 0.0, %v1230
    %v1232 = vpop.f32.mrb[0].mxu0
    %v1233 = vpop.f32.mrb[0].mxu0
    %1234 = vdwg.mxu0
    %1235 = vmatprep.subr.bf16.mxu0 0
    %1236 = vmatpush1.bf16.msra.mxu0 %v542
    %1237 = vmatprep.subr.bf16.mxu0 0
    %1238 = vmatpush1.bf16.msra.mxu0 %v545
    %1239 = vmatprep.subr.bf16.mxu0 0
    %1240 = vmatpush1.bf16.msra.mxu0 %v548
    %1241 = vmatprep.subr.bf16.mxu0 0
    %1242 = vmatpush1.bf16.msra.mxu0 %v551
    %1243 = vmatprep.subr.bf16.mxu0 0
    %1244 = vmatpush1.bf16.msra.mxu0 %v554
    %1245 = vmatprep.subr.bf16.mxu0 0
    %1246 = vmatpush1.bf16.msra.mxu0 %v557
    %1247 = vmatprep.subr.bf16.mxu0 0
    %1248 = vmatpush1.bf16.msra.mxu0 %v560
    %1249 = vmatprep.subr.bf16.mxu0 0
    %1250 = vmatpush1.bf16.msra.mxu0 %v563
    %1251 = vmatprep.subr.bf16.mxu0 0
    %1252 = vmatpush1.bf16.msra.mxu0 0
    %1253 = vmatprep.subr.bf16.mxu0 0
    %1254 = vmatpush1.bf16.msra.mxu0 0
    %1255 = vmatprep.subr.bf16.mxu0 0
    %1256 = vmatpush1.bf16.msra.mxu0 0
    %1257 = vmatprep.subr.bf16.mxu0 0
    %1258 = vmatpush1.bf16.msra.mxu0 0
    %1259 = vmatprep.subr.bf16.mxu0 0
    %1260 = vmatpush1.bf16.msra.mxu0 0
    %1261 = vmatprep.subr.bf16.mxu0 0
    %1262 = vmatpush1.bf16.msra.mxu0 0
    %1263 = vmatprep.subr.bf16.mxu0 0
    %1264 = vmatpush1.bf16.msra.mxu0 0
    %1265 = vmatprep.subr.bf16.mxu0 0
    %1266 = vmatpush1.bf16.msra.mxu0 0
    %1267 = vmatprep.mubr.bf16.mxu0 0
    %1268 = vmatmul.mubr.bf16.gmra.mrb[0].mxu0 %v1193
    %v1269 = vpop.f32.mrb[0].mxu0
    %v1270 = vadd.f32 0.0, %v1269
    %v1271 = vpop.f32.mrb[0].mxu0
    %v1272 = vpop.f32.mrb[0].mxu0
    %v1273 = vpop.f32.mrb[0].mxu0
    %1274 = vdwg.mxu0
    %v1275 = vadd.f32 %v1190, %v1229
    %v1276 = vxor.u32 %v1275, 2147483648
    %v1277 = vmul.f32 %v1276, 1.442695
    %v1278 = vpow.pop %v1277
    %v1279 = vadd.f32 %v1278, 1.0
    %v1280 = vrcp.pop %v1279
    %v1281 = vmul.f32 1.0, %v1280
    %v1282 = vadd.f32 %v1191, %v1231
    %v1283 = vxor.u32 %v1282, 2147483648
    %v1284 = vmul.f32 %v1283, 1.442695
    %v1285 = vpow.pop %v1284
    %v1286 = vadd.f32 %v1285, 1.0
    %v1287 = vrcp.pop %v1286
    %v1288 = vmul.f32 1.0, %v1287
    %v1289 = vadd.f32 %v1270, %v439
    %v1290 = vmul.f32 %v1281, %v1289
    %v1291 = vadd.f32 %v1192, %v1290
    %v1292 = vtanh.pop %v1291
    %v1293 = vsub.f32 1.0, %v1288
    %v1294 = vmul.f32 %v1293, %v1292
    %v1295 = vmul.f32 %v1288, %v1175
    %v1296 = vadd.f32 %v1294, %v1295
    %v1297 = vrot.slane %v1296, 4
    %v1298 = vadd.f32 %v1296, %v1297
    %v1299 = vrot.slane %v1298, 2
    %v1300 = vadd.f32 %v1298, %v1299
    %v1301 = vrot.slane %v1300, 1
    %v1302 = vadd.f32 %v1300, %v1301
    %v1303 = vmul.f32 %v1302, %v697
    %s1304 = sadd.s32 %s449, 6
    %s1305 = smul.u32 %s1304, 8
    %s1306 = sshra.s32 %s1305, 3
    %s1307 = sand.u32 %s1305, 7
    %s1308 = smul.u32 %s1306, 3
    %s1309 = smul.addr %s1308, 8
    %s1310 = scalar_lea.vmem [#allocation3], %s1309
    %v1311 = vld [vmem:[%s1310] sm:$0xff]
    %v1312 = vld [vmem:[%s1310 + $0x8] sm:$0xff]
    %v1313 = vld [vmem:[%s1310 + $0x10] sm:$0xff]
    %v1314 = vpack.c.bf16 %v1296, %v1296
    %1315 = vmatprep.subr.bf16.mxu0 %v541
    %1316 = vmatpush1.bf16.msra.mxu0 %v540
    %1317 = vmatprep.subr.bf16.mxu0 %v544
    %1318 = vmatpush1.bf16.msra.mxu0 %v543
    %1319 = vmatprep.subr.bf16.mxu0 %v547
    %1320 = vmatpush1.bf16.msra.mxu0 %v546
    %1321 = vmatprep.subr.bf16.mxu0 %v550
    %1322 = vmatpush1.bf16.msra.mxu0 %v549
    %1323 = vmatprep.subr.bf16.mxu0 %v553
    %1324 = vmatpush1.bf16.msra.mxu0 %v552
    %1325 = vmatprep.subr.bf16.mxu0 %v556
    %1326 = vmatpush1.bf16.msra.mxu0 %v555
    %1327 = vmatprep.subr.bf16.mxu0 %v559
    %1328 = vmatpush1.bf16.msra.mxu0 %v558
    %1329 = vmatprep.subr.bf16.mxu0 %v562
    %1330 = vmatpush1.bf16.msra.mxu0 %v561
    %1331 = vmatprep.subr.bf16.mxu0 0
    %1332 = vmatpush1.bf16.msra.mxu0 0
    %1333 = vmatprep.subr.bf16.mxu0 0
    %1334 = vmatpush1.bf16.msra.mxu0 0
    %1335 = vmatprep.subr.bf16.mxu0 0
    %1336 = vmatpush1.bf16.msra.mxu0 0
    %1337 = vmatprep.subr.bf16.mxu0 0
    %1338 = vmatpush1.bf16.msra.mxu0 0
    %1339 = vmatprep.subr.bf16.mxu0 0
    %1340 = vmatpush1.bf16.msra.mxu0 0
    %1341 = vmatprep.subr.bf16.mxu0 0
    %1342 = vmatpush1.bf16.msra.mxu0 0
    %1343 = vmatprep.subr.bf16.mxu0 0
    %1344 = vmatpush1.bf16.msra.mxu0 0
    %1345 = vmatprep.subr.bf16.mxu0 0
    %1346 = vmatpush1.bf16.msra.mxu0 0
    %1347 = vmatprep.mubr.bf16.mxu0 0
    %1348 = vmatmul.mubr.bf16.gmra.mrb[0].mxu0 %v1314
    %v1349 = vpop.f32.mrb[0].mxu0
    %v1350 = vadd.f32 0.0, %v1349
    %v1351 = vpop.f32.mrb[0].mxu0
    %v1352 = vadd.f32 0.0, %v1351
    %v1353 = vpop.f32.mrb[0].mxu0
    %v1354 = vpop.f32.mrb[0].mxu0
    %1355 = vdwg.mxu0
    %1356 = vmatprep.subr.bf16.mxu0 0
    %1357 = vmatpush1.bf16.msra.mxu0 %v542
    %1358 = vmatprep.subr.bf16.mxu0 0
    %1359 = vmatpush1.bf16.msra.mxu0 %v545
    %1360 = vmatprep.subr.bf16.mxu0 0
    %1361 = vmatpush1.bf16.msra.mxu0 %v548
    %1362 = vmatprep.subr.bf16.mxu0 0
    %1363 = vmatpush1.bf16.msra.mxu0 %v551
    %1364 = vmatprep.subr.bf16.mxu0 0
    %1365 = vmatpush1.bf16.msra.mxu0 %v554
    %1366 = vmatprep.subr.bf16.mxu0 0
    %1367 = vmatpush1.bf16.msra.mxu0 %v557
    %1368 = vmatprep.subr.bf16.mxu0 0
    %1369 = vmatpush1.bf16.msra.mxu0 %v560
    %1370 = vmatprep.subr.bf16.mxu0 0
    %1371 = vmatpush1.bf16.msra.mxu0 %v563
    %1372 = vmatprep.subr.bf16.mxu0 0
    %1373 = vmatpush1.bf16.msra.mxu0 0
    %1374 = vmatprep.subr.bf16.mxu0 0
    %1375 = vmatpush1.bf16.msra.mxu0 0
    %1376 = vmatprep.subr.bf16.mxu0 0
    %1377 = vmatpush1.bf16.msra.mxu0 0
    %1378 = vmatprep.subr.bf16.mxu0 0
    %1379 = vmatpush1.bf16.msra.mxu0 0
    %1380 = vmatprep.subr.bf16.mxu0 0
    %1381 = vmatpush1.bf16.msra.mxu0 0
    %1382 = vmatprep.subr.bf16.mxu0 0
    %1383 = vmatpush1.bf16.msra.mxu0 0
    %1384 = vmatprep.subr.bf16.mxu0 0
    %1385 = vmatpush1.bf16.msra.mxu0 0
    %1386 = vmatprep.subr.bf16.mxu0 0
    %1387 = vmatpush1.bf16.msra.mxu0 0
    %1388 = vmatprep.mubr.bf16.mxu0 0
    %1389 = vmatmul.mubr.bf16.gmra.mrb[0].mxu0 %v1314
    %v1390 = vpop.f32.mrb[0].mxu0
    %v1391 = vadd.f32 0.0, %v1390
    %v1392 = vpop.f32.mrb[0].mxu0
    %v1393 = vpop.f32.mrb[0].mxu0
    %v1394 = vpop.f32.mrb[0].mxu0
    %1395 = vdwg.mxu0
    %v1396 = vadd.f32 %v1311, %v1350
    %v1397 = vxor.u32 %v1396, 2147483648
    %v1398 = vmul.f32 %v1397, 1.442695
    %v1399 = vpow.pop %v1398
    %v1400 = vadd.f32 %v1399, 1.0
    %v1401 = vrcp.pop %v1400
    %v1402 = vmul.f32 1.0, %v1401
    %v1403 = vadd.f32 %v1312, %v1352
    %v1404 = vxor.u32 %v1403, 2147483648
    %v1405 = vmul.f32 %v1404, 1.442695
    %v1406 = vpow.pop %v1405
    %v1407 = vadd.f32 %v1406, 1.0
    %v1408 = vrcp.pop %v1407
    %v1409 = vmul.f32 1.0, %v1408
    %v1410 = vadd.f32 %v1391, %v439
    %v1411 = vmul.f32 %v1402, %v1410
    %v1412 = vadd.f32 %v1313, %v1411
    %v1413 = vtanh.pop %v1412
    %v1414 = vsub.f32 1.0, %v1409
    %v1415 = vmul.f32 %v1414, %v1413
    %v1416 = vmul.f32 %v1409, %v1296
    %v1417 = vadd.f32 %v1415, %v1416
    %v1418 = vrot.slane %v1417, 4
    %v1419 = vadd.f32 %v1417, %v1418
    %v1420 = vrot.slane %v1419, 2
    %v1421 = vadd.f32 %v1419, %v1420
    %v1422 = vrot.slane %v1421, 1
    %v1423 = vadd.f32 %v1421, %v1422
    %v1424 = vmul.f32 %v1423, %v697
    %s1425 = sadd.s32 %s449, 7
    %s1426 = smul.u32 %s1425, 8
    %s1427 = sshra.s32 %s1426, 3
    %s1428 = sand.u32 %s1426, 7
    %s1429 = smul.u32 %s1427, 3
    %s1430 = smul.addr %s1429, 8
    %s1431 = scalar_lea.vmem [#allocation3], %s1430
    %v1432 = vld [vmem:[%s1431] sm:$0xff]
    %v1433 = vld [vmem:[%s1431 + $0x8] sm:$0xff]
    %v1434 = vld [vmem:[%s1431 + $0x10] sm:$0xff]
    %v1435 = vpack.c.bf16 %v1417, %v1417
    %1436 = vmatprep.subr.bf16.mxu0 %v541
    %1437 = vmatpush1.bf16.msra.mxu0 %v540
    %1438 = vmatprep.subr.bf16.mxu0 %v544
    %1439 = vmatpush1.bf16.msra.mxu0 %v543
    %1440 = vmatprep.subr.bf16.mxu0 %v547
    %1441 = vmatpush1.bf16.msra.mxu0 %v546
    %1442 = vmatprep.subr.bf16.mxu0 %v550
    %1443 = vmatpush1.bf16.msra.mxu0 %v549
    %1444 = vmatprep.subr.bf16.mxu0 %v553
    %1445 = vmatpush1.bf16.msra.mxu0 %v552
    %1446 = vmatprep.subr.bf16.mxu0 %v556
    %1447 = vmatpush1.bf16.msra.mxu0 %v555
    %1448 = vmatprep.subr.bf16.mxu0 %v559
    %1449 = vmatpush1.bf16.msra.mxu0 %v558
    %1450 = vmatprep.subr.bf16.mxu0 %v562
    %1451 = vmatpush1.bf16.msra.mxu0 %v561
    %1452 = vmatprep.subr.bf16.mxu0 0
    %1453 = vmatpush1.bf16.msra.mxu0 0
    %1454 = vmatprep.subr.bf16.mxu0 0
    %1455 = vmatpush1.bf16.msra.mxu0 0
    %1456 = vmatprep.subr.bf16.mxu0 0
    %1457 = vmatpush1.bf16.msra.mxu0 0
    %1458 = vmatprep.subr.bf16.mxu0 0
    %1459 = vmatpush1.bf16.msra.mxu0 0
    %1460 = vmatprep.subr.bf16.mxu0 0
    %1461 = vmatpush1.bf16.msra.mxu0 0
    %1462 = vmatprep.subr.bf16.mxu0 0
    %1463 = vmatpush1.bf16.msra.mxu0 0
    %1464 = vmatprep.subr.bf16.mxu0 0
    %1465 = vmatpush1.bf16.msra.mxu0 0
    %1466 = vmatprep.subr.bf16.mxu0 0
    %1467 = vmatpush1.bf16.msra.mxu0 0
    %1468 = vmatprep.mubr.bf16.mxu0 0
    %1469 = vmatmul.mubr.bf16.gmra.mrb[0].mxu0 %v1435
    %v1470 = vpop.f32.mrb[0].mxu0
    %v1471 = vadd.f32 0.0, %v1470
    %v1472 = vpop.f32.mrb[0].mxu0
    %v1473 = vadd.f32 0.0, %v1472
    %v1474 = vpop.f32.mrb[0].mxu0
    %v1475 = vpop.f32.mrb[0].mxu0
    %1476 = vdwg.mxu0
    %1477 = vmatprep.subr.bf16.mxu0 0
    %1478 = vmatpush1.bf16.msra.mxu0 %v542
    %1479 = vmatprep.subr.bf16.mxu0 0
    %1480 = vmatpush1.bf16.msra.mxu0 %v545
    %1481 = vmatprep.subr.bf16.mxu0 0
    %1482 = vmatpush1.bf16.msra.mxu0 %v548
    %1483 = vmatprep.subr.bf16.mxu0 0
    %1484 = vmatpush1.bf16.msra.mxu0 %v551
    %1485 = vmatprep.subr.bf16.mxu0 0
    %1486 = vmatpush1.bf16.msra.mxu0 %v554
    %1487 = vmatprep.subr.bf16.mxu0 0
    %1488 = vmatpush1.bf16.msra.mxu0 %v557
    %1489 = vmatprep.subr.bf16.mxu0 0
    %1490 = vmatpush1.bf16.msra.mxu0 %v560
    %1491 = vmatprep.subr.bf16.mxu0 0
    %1492 = vmatpush1.bf16.msra.mxu0 %v563
    %1493 = vmatprep.subr.bf16.mxu0 0
    %1494 = vmatpush1.bf16.msra.mxu0 0
    %1495 = vmatprep.subr.bf16.mxu0 0
    %1496 = vmatpush1.bf16.msra.mxu0 0
    %1497 = vmatprep.subr.bf16.mxu0 0
    %1498 = vmatpush1.bf16.msra.mxu0 0
    %1499 = vmatprep.subr.bf16.mxu0 0
    %1500 = vmatpush1.bf16.msra.mxu0 0
    %1501 = vmatprep.subr.bf16.mxu0 0
    %1502 = vmatpush1.bf16.msra.mxu0 0
    %1503 = vmatprep.subr.bf16.mxu0 0
    %1504 = vmatpush1.bf16.msra.mxu0 0
    %1505 = vmatprep.subr.bf16.mxu0 0
    %1506 = vmatpush1.bf16.msra.mxu0 0
    %1507 = vmatprep.subr.bf16.mxu0 0
    %1508 = vmatpush1.bf16.msra.mxu0 0
    %1509 = vmatprep.mubr.bf16.mxu0 0
    %1510 = vmatmul.mubr.bf16.gmra.mrb[0].mxu0 %v1435
    %v1511 = vpop.f32.mrb[0].mxu0
    %v1512 = vadd.f32 0.0, %v1511
    %v1513 = vpop.f32.mrb[0].mxu0
    %v1514 = vpop.f32.mrb[0].mxu0
    %v1515 = vpop.f32.mrb[0].mxu0
    %1516 = vdwg.mxu0
    %v1517 = vadd.f32 %v1432, %v1471
    %v1518 = vxor.u32 %v1517, 2147483648
    %v1519 = vmul.f32 %v1518, 1.442695
    %v1520 = vpow.pop %v1519
    %v1521 = vadd.f32 %v1520, 1.0
    %v1522 = vrcp.pop %v1521
    %v1523 = vmul.f32 1.0, %v1522
    %v1524 = vadd.f32 %v1433, %v1473
    %v1525 = vxor.u32 %v1524, 2147483648
    %v1526 = vmul.f32 %v1525, 1.442695
    %v1527 = vpow.pop %v1526
    %v1528 = vadd.f32 %v1527, 1.0
    %v1529 = vrcp.pop %v1528
    %v1530 = vmul.f32 1.0, %v1529
    %v1531 = vadd.f32 %v1512, %v439
    %v1532 = vmul.f32 %v1523, %v1531
    %v1533 = vadd.f32 %v1434, %v1532
    %v1534 = vtanh.pop %v1533
    %v1535 = vsub.f32 1.0, %v1530
    %v1536 = vmul.f32 %v1535, %v1534
    %v1537 = vmul.f32 %v1530, %v1417
    %v1538 = vadd.f32 %v1536, %v1537
    %v1539 = vrot.slane %v1538, 4
    %v1540 = vadd.f32 %v1538, %v1539
    %v1541 = vrot.slane %v1540, 2
    %v1542 = vadd.f32 %v1540, %v1541
    %v1543 = vrot.slane %v1542, 1
    %v1544 = vadd.f32 %v1542, %v1543
    %v1545 = vmul.f32 %v1544, %v697
    %vm1546 = vcmask 1040384
    %v1547 = vsel %vm1546, %v698, %v819
    %vm1548 = vcmask 1041408
    %v1549 = vsel %vm1548, %v1547, %v940
    %vm1550 = vcmask 1042432
    %v1551 = vsel %vm1550, %v1549, %v1061
    %v1552 = vsel %vm134, %v1551, %v1182
    %vm1553 = vcmask 1044480
    %v1554 = vsel %vm1553, %v1552, %v1303
    %vm1555 = vcmask 1045504
    %v1556 = vsel %vm1555, %v1554, %v1424
    %vm1557 = vcmask 1046528
    %v1558 = vsel %vm1557, %v1556, %v1545
    %s1559 = scalar_lea.vmem %s5, %s449
    %1560 = vst [vmem:[%s1559] sm:$0xff] %v1558
  $region30: #{expanded_spatial_graph_embedding_net.2} parent=0 // loop_footer
    %s447 = sadd.s32 1, %s443
  $region31: #{expanded_spatial_graph_embedding_net.2} parent=0 // loop_footer_branch
    %442 = sbr.rel target = $region27
  $region32: #{expanded_spatial_graph_embedding_net.2} parent=0 // loop_exit
    _
  %1561 = vst [vmem:[#allocation2] sm:$0xff] %v448
  // Predicated region
  $region33: #{expanded_spatial_graph_embedding_net.2} parent=0 // pred_check
    _
  $region34: #{expanded_spatial_graph_embedding_net.2} parent=0 // pred_check_branch
    %1563 = sbr.rel (0) target = $region36
  $region35: #{expanded_spatial_graph_embedding_net.2} parent=0 // pred_region
    _
  $region36: #{expanded_spatial_graph_embedding_net.2} parent=0 // pred_fallthru
    _
  // Predicated region
  $region37: #{expanded_spatial_graph_embedding_net.2} parent=0 // pred_check
    _
  $region38: #{expanded_spatial_graph_embedding_net.2} parent=0 // pred_check_branch
    %1565 = sbr.rel (0) target = $region40
  $region39: #{expanded_spatial_graph_embedding_net.2} parent=0 // pred_region
    _
  $region40: #{expanded_spatial_graph_embedding_net.2} parent=0 // pred_fallthru
    _

</llo_original>
